<compile_context>
chip_gen: v7x
topology: tpu7x:2x2x1
jax: 0.10.0
libtpu: 0.0.40
codegen_flags: <defaults>
</compile_context>

<pallas_src>
import jax
import jax.numpy as jnp
from jax import lax
from jax.experimental import pallas as pl
from jax.experimental.pallas import tpu as pltpu


# ----------------------------- in-kernel math --------------------------------
def _erf(x):
    # Abramowitz & Stegun 7.1.26 rational approximation (|err| < 1.5e-7);
    # VPU ops + one EUP exp, all f32.
    a1, a2, a3, a4, a5 = (0.254829592, -0.284496736, 1.421413741,
                          -1.453152027, 1.061405429)
    p = 0.3275911
    sign = jnp.where(x >= 0.0, 1.0, -1.0)
    ax = jnp.abs(x)
    t = 1.0 / (1.0 + p * ax)
    poly = ((((a5 * t + a4) * t + a3) * t + a2) * t + a1) * t
    return sign * (1.0 - poly * jnp.exp(-ax * ax))


def _gelu(x):
    # exact (erf-based) GELU, matching torch.nn.GELU() defaults
    return 0.5 * x * (1.0 + _erf(x * 0.7071067811865476))


def _shift_down(v, k):
    """result[n] = v[n-k] for n >= k, 0 for n < k (zero-filled row shift)."""
    return jnp.concatenate(
        [jnp.zeros((k, v.shape[1]), v.dtype), v[:v.shape[0] - k, :]], axis=0)


def _shift_up(v, k):
    """result[n] = v[n+k] for n < N-k, 0 otherwise (zero-filled row shift)."""
    return jnp.concatenate(
        [v[k:, :], jnp.zeros((k, v.shape[1]), v.dtype)], axis=0)


# --------------------------------- kernel -------------------------------------
def _down_kernel(a_ref, b_ref, c_ref, d_ref,
                 w1a_ref, w1b_ref, w2a_ref, w2b_ref,
                 gn1_ref, gn2_ref, o_ref):
    # a..d  : (1, Ho, Wo, Cin)  pre-sliced 2x2 pooling-window slabs (one sample)
    # w*    : (3, 3*Ci, Co) bf16  conv taps with dx folded into K, VMEM-resident
    # gn1   : (4, Cin)  rows = [gamma1a, beta1a, gamma1b, beta1b]  (f32)
    # gn2   : (4, Cout) rows = [gamma2a, beta2a, gamma2b, beta2b]  (f32)
    # o_ref : (1, Ho, Wo, Cout)
    _, Ho, Wo, Cout = o_ref.shape
    Cin = a_ref.shape[-1]
    N = Ho * Wo

    # ---------------- MaxPool2d(2): 4-way elementwise max (VPU) ---------------
    pooled = jnp.maximum(jnp.maximum(a_ref[0], b_ref[0]),
                         jnp.maximum(c_ref[0], d_ref[0]))
    pooled = pooled.astype(jnp.float32).reshape(N, Cin)

    # x-coordinate masks for the image's left/right zero padding (flat n = y*Wo+x).
    col = lax.broadcasted_iota(jnp.int32, (N, 1), 0) % Wo
    left_edge = col == 0
    right_edge = col == (Wo - 1)

    def conv3x3(act, w_ref):
        """3x3 'SAME' conv, no bias.  act: (N, Ci) f32 ; w_ref: (3, 3*Ci, Co) bf16.
        dx taps are folded into K: the operand row is [x-1 | x | x+1] neighbours
        (zero at the border); the dy taps become 3 slab matmuls whose operands are
        zero-filled row shifts (by +/-Wo) of the same (N, 3*Ci) value."""
        Co = w_ref.shape[-1]
        left = jnp.where(left_edge, 0.0, _shift_down(act, 1))    # act(y, x-1)
        right = jnp.where(right_edge, 0.0, _shift_up(act, 1))    # act(y, x+1)
        s = jnp.concatenate([left, act, right], axis=-1)         # (N, 3*Ci) f32
        rows = (_shift_down(s, Wo), s, _shift_up(s, Wo))         # dy = 0, 1, 2
        acc = jnp.zeros((N, Co), jnp.float32)
        for dy in range(3):
            acc = acc + jnp.dot(rows[dy].astype(jnp.bfloat16), w_ref[dy],
                                preferred_element_type=jnp.float32)
        return acc

    def group_norm(y, g, b):
        """GroupNorm(num_groups=1): one-pass sum / sum-of-squares stats over all
        (H, W, C) elements of the sample (f32), then per-channel affine."""
        inv_n = 1.0 / float(y.size)
        mean = jnp.sum(y) * inv_n
        var = jnp.maximum(jnp.sum(y * y) * inv_n - mean * mean, 0.0)
        return (y - mean) * lax.rsqrt(var + 1e-5) * g + b

    # ---------------- DoubleConv(Cin, Cin, residual=True) ---------------------
    h = conv3x3(pooled, w1a_ref)                                   # (N, Cin)
    h = _gelu(group_norm(h, gn1_ref[0:1], gn1_ref[1:2]))
    h = conv3x3(h, w1b_ref)
    h = group_norm(h, gn1_ref[2:3], gn1_ref[3:4])
    h = _gelu(h + pooled)                                          # gelu(x + dc(x))

    # ---------------- DoubleConv(Cin, Cout) ------------------------------------
    h = conv3x3(h, w2a_ref)                                        # (N, Cout)
    h = _gelu(group_norm(h, gn2_ref[0:1], gn2_ref[1:2]))
    h = conv3x3(h, w2b_ref)
    h = group_norm(h, gn2_ref[2:3], gn2_ref[3:4])

    # Single full-tile store (lane-dense for realistic Cout >= 128).
    o_ref[...] = h.reshape(1, Ho, Wo, Cout).astype(o_ref.dtype)


# ----------------------------- compiler params --------------------------------
def _pick_vmem_limit():
    # ~3/4 of physical VMEM, capped at 100 MiB: ~96-100 MiB on v5e/v6e (128 MiB),
    # ~48 MiB on v7x (64 MiB).  Fall back to Mosaic's default if the query fails.
    try:
        cap = int(pltpu.get_tpu_info().vmem_capacity_bytes)
    except Exception:
        return None
    return int(min(100 * 1024 * 1024, (cap * 3) // 4))


_VMEM_LIMIT = _pick_vmem_limit()
_COMPILER_PARAMS = pltpu.CompilerParams(
    dimension_semantics=("parallel",),
    **({"vmem_limit_bytes": _VMEM_LIMIT} if _VMEM_LIMIT else {}),
)


# --------------------------------- wrapper ------------------------------------
@jax.jit
def down_forward(x_nchw, params):
    """Down forward pass. Input/output NCHW to match the PyTorch module."""
    B, Cin, H, W = x_nchw.shape
    Ho, Wo = H // 2, W // 2
    Cout = params["w2b"].shape[-1]

    # NCHW -> NHWC + the four 2x2 pooling-window slabs. XLA fuses the transpose
    # into these strided-slice copies (one pass over the input); the 4-way max
    # and everything after it run inside the single fused Pallas kernel.
    # TODO(synk): keep the surrounding model NHWC end-to-end to drop both
    #             transposes and feed the kernel a single NHWC sample block.
    x = jnp.transpose(x_nchw, (0, 2, 3, 1))[:, :2 * Ho, :2 * Wo, :]
    slabs = (x[:, 0::2, 0::2, :], x[:, 0::2, 1::2, :],
             x[:, 1::2, 0::2, :], x[:, 1::2, 1::2, :])

    # Conv taps: HWIO (3,3,Ci,Co) -> (3, 3*Ci, Co) with dx folded into K;
    # bf16 MXU operands (f32 accumulation happens inside the kernel).
    def taps(w):
        kh, kw, ci, co = w.shape
        return w.reshape(kh, kw * ci, co).astype(jnp.bfloat16)

    gn1 = jnp.stack([params["g1a"], params["b1a"],
                     params["g1b"], params["b1b"]]).astype(jnp.float32)
    gn2 = jnp.stack([params["g2a"], params["b2a"],
                     params["g2b"], params["b2b"]]).astype(jnp.float32)

    def samp_spec(c):
        return pl.BlockSpec((1, Ho, Wo, c), lambda i: (i, 0, 0, 0))

    def const_spec(shape):
        nd = len(shape)
        # TODO(synk): pipeline_mode=pl.Buffered(1) would halve the resident
        #             weight footprint on v7x if Mosaic does not already dedup
        #             constant-index blocks to a single buffer.
        return pl.BlockSpec(shape, lambda i: (0,) * nd)   # VMEM-resident params

    out_nhwc = pl.pallas_call(
        _down_kernel,
        out_shape=jax.ShapeDtypeStruct((B, Ho, Wo, Cout), x.dtype),
        grid=(B,),
        in_specs=([samp_spec(Cin) for _ in range(4)]
                  + [const_spec((3, 3 * Cin, Cin)), const_spec((3, 3 * Cin, Cin)),
                     const_spec((3, 3 * Cin, Cout)), const_spec((3, 3 * Cout, Cout)),
                     const_spec((4, Cin)), const_spec((4, Cout))]),
        out_specs=samp_spec(Cout),
        compiler_params=_COMPILER_PARAMS,
    )(*slabs, taps(params["w1a"]), taps(params["w1b"]),
      taps(params["w2a"]), taps(params["w2b"]), gn1, gn2)

    return jnp.transpose(out_nhwc, (0, 3, 1, 2))            # NHWC -> NCHW


# --------------------------- deterministic params -----------------------------
def _conv_weight(key, ci, co):
    # deterministic stand-in for PyTorch's kaiming-uniform Conv2d init (HWIO).
    # NOTE: real PyTorch weights are OIHW (Co,Ci,kh,kw); transpose to HWIO on import.
    fan_in = ci * 3 * 3
    bound = 1.0 / (fan_in ** 0.5)
    return jax.random.uniform(key, (3, 3, ci, co), jnp.float32, -bound, bound)


def init_down_params(key, cin, cout):
    k1, k2, k3, k4 = jax.random.split(key, 4)
    return {
        # DoubleConv(cin, cin, residual=True)
        "w1a": _conv_weight(k1, cin, cin),
        "g1a": jnp.ones((cin,), jnp.float32),
        "b1a": jnp.zeros((cin,), jnp.float32),
        "w1b": _conv_weight(k2, cin, cin),
        "g1b": jnp.ones((cin,), jnp.float32),
        "b1b": jnp.zeros((cin,), jnp.float32),
        # DoubleConv(cin, cout)
        "w2a": _conv_weight(k3, cin, cout),
        "g2a": jnp.ones((cout,), jnp.float32),
        "b2a": jnp.zeros((cout,), jnp.float32),
        "w2b": _conv_weight(k4, cout, cout),
        "g2b": jnp.ones((cout,), jnp.float32),
        "b2b": jnp.zeros((cout,), jnp.float32),
    }


# ------------------------------ pure-JAX reference -----------------------------
def _ref_down(x_nchw, params):
    """Pure-JAX f32 reference of the PyTorch Down block (for validation)."""
    x = jnp.transpose(x_nchw, (0, 2, 3, 1)).astype(jnp.float32)      # NHWC
    B, H, W, C = x.shape
    x = jnp.max(x.reshape(B, H // 2, 2, W // 2, 2, C), axis=(2, 4))  # MaxPool2d(2)

    def conv(h, w):
        return lax.conv_general_dilated(h, w, (1, 1), "SAME",
                                        dimension_numbers=("NHWC", "HWIO", "NHWC"))

    def gn(h, g, b):
        mean = jnp.mean(h, axis=(1, 2, 3), keepdims=True)
        var = jnp.mean(jnp.square(h - mean), axis=(1, 2, 3), keepdims=True)
        return (h - mean) * lax.rsqrt(var + 1e-5) * g + b

    gelu = lambda v: jax.nn.gelu(v, approximate=False)

    h0 = x
    h = conv(h0, params["w1a"]); h = gelu(gn(h, params["g1a"], params["b1a"]))
    h = conv(h, params["w1b"]);  h = gn(h, params["g1b"], params["b1b"])
    h = gelu(h + h0)                                                  # residual
    h = conv(h, params["w2a"]);  h = gelu(gn(h, params["g2a"], params["b2a"]))
    h = conv(h, params["w2b"]);  h = gn(h, params["g2b"], params["b2b"])
    return jnp.transpose(h, (0, 3, 1, 2))                             # NCHW


if __name__ == "__main__":
    key = jax.random.PRNGKey(0)
    kx, kp = jax.random.split(key)

    B, Cin, Cout, H, W = 2, 4, 8, 16, 16
    x_nchw = jax.random.normal(kx, (B, Cin, H, W), jnp.float32)
    params = init_down_params(kp, Cin, Cout)

    y = jax.block_until_ready(down_forward(x_nchw, params))
    assert y.shape == (B, Cout, H // 2, W // 2), y.shape
    assert bool(jnp.all(jnp.isfinite(y)))

    # Validate against the pure-JAX f32 reference.  Tolerance is loose because
    # the kernel feeds bf16 operands to the MXU (f32 accumulation).
    y_ref = _ref_down(x_nchw, params)
    err = float(jnp.max(jnp.abs(y - y_ref)))
    assert err < 0.15, f"max abs error vs reference: {err}"
    print("KERNEL_OK")
</pallas_src>

<mosaic_0001>
module attributes {stable_mosaic.version = 11 : i64} {
  func.func @_down_kernel(%arg0: i32, %arg1: memref<1x8x8x4xf32, #tpu.memory_space<vmem>>, %arg2: memref<1x8x8x4xf32, #tpu.memory_space<vmem>>, %arg3: memref<1x8x8x4xf32, #tpu.memory_space<vmem>>, %arg4: memref<1x8x8x4xf32, #tpu.memory_space<vmem>>, %arg5: memref<3x12x4xbf16, #tpu.memory_space<vmem>>, %arg6: memref<3x12x4xbf16, #tpu.memory_space<vmem>>, %arg7: memref<3x12x8xbf16, #tpu.memory_space<vmem>>, %arg8: memref<3x24x8xbf16, #tpu.memory_space<vmem>>, %arg9: memref<4x4xf32, #tpu.memory_space<vmem>>, %arg10: memref<4x8xf32, #tpu.memory_space<vmem>>, %arg11: memref<1x8x8x8xf32, #tpu.memory_space<vmem>>) attributes {dimension_semantics = [#tpu.dimension_semantics<parallel>], iteration_bounds = array<i64: 2>, scalar_prefetch = 0 : i64, scratch_operands = 0 : i64, tpu.core_type = #tpu.core_type<tc>, window_params = [{transform_indices = @transform_0, window_bounds = array<i64: 1, 8, 8, 4>}, {transform_indices = @transform_1, window_bounds = array<i64: 1, 8, 8, 4>}, {transform_indices = @transform_2, window_bounds = array<i64: 1, 8, 8, 4>}, {transform_indices = @transform_3, window_bounds = array<i64: 1, 8, 8, 4>}, {pipeline_mode = #tpu.pipeline_mode<synchronous>, transform_indices = @transform_4, window_bounds = array<i64: 3, 12, 4>}, {pipeline_mode = #tpu.pipeline_mode<synchronous>, transform_indices = @transform_5, window_bounds = array<i64: 3, 12, 4>}, {pipeline_mode = #tpu.pipeline_mode<synchronous>, transform_indices = @transform_6, window_bounds = array<i64: 3, 12, 8>}, {pipeline_mode = #tpu.pipeline_mode<synchronous>, transform_indices = @transform_7, window_bounds = array<i64: 3, 24, 8>}, {pipeline_mode = #tpu.pipeline_mode<synchronous>, transform_indices = @transform_8, window_bounds = array<i64: 4, 4>}, {pipeline_mode = #tpu.pipeline_mode<synchronous>, transform_indices = @transform_9, window_bounds = array<i64: 4, 8>}, {transform_indices = @transform_10, window_bounds = array<i64: 1, 8, 8, 8>}]} {
    %c0 = arith.constant 0 : index
    %c0_0 = arith.constant 0 : index
    %c0_1 = arith.constant 0 : index
    %c0_2 = arith.constant 0 : index
    %0 = vector.load %arg1[%c0, %c0_0, %c0_1, %c0_2] : memref<1x8x8x4xf32, #tpu.memory_space<vmem>>, vector<1x8x8x4xf32>
    %1 = vector.shape_cast %0 : vector<1x8x8x4xf32> to vector<8x8x4xf32>
    %c0_3 = arith.constant 0 : index
    %c0_4 = arith.constant 0 : index
    %c0_5 = arith.constant 0 : index
    %c0_6 = arith.constant 0 : index
    %2 = vector.load %arg2[%c0_3, %c0_4, %c0_5, %c0_6] : memref<1x8x8x4xf32, #tpu.memory_space<vmem>>, vector<1x8x8x4xf32>
    %3 = vector.shape_cast %2 : vector<1x8x8x4xf32> to vector<8x8x4xf32>
    %4 = arith.maximumf %1, %3 : vector<8x8x4xf32>
    %c0_7 = arith.constant 0 : index
    %c0_8 = arith.constant 0 : index
    %c0_9 = arith.constant 0 : index
    %c0_10 = arith.constant 0 : index
    %5 = vector.load %arg3[%c0_7, %c0_8, %c0_9, %c0_10] : memref<1x8x8x4xf32, #tpu.memory_space<vmem>>, vector<1x8x8x4xf32>
    %6 = vector.shape_cast %5 : vector<1x8x8x4xf32> to vector<8x8x4xf32>
    %c0_11 = arith.constant 0 : index
    %c0_12 = arith.constant 0 : index
    %c0_13 = arith.constant 0 : index
    %c0_14 = arith.constant 0 : index
    %7 = vector.load %arg4[%c0_11, %c0_12, %c0_13, %c0_14] : memref<1x8x8x4xf32, #tpu.memory_space<vmem>>, vector<1x8x8x4xf32>
    %8 = vector.shape_cast %7 : vector<1x8x8x4xf32> to vector<8x8x4xf32>
    %9 = arith.maximumf %6, %8 : vector<8x8x4xf32>
    %10 = arith.maximumf %4, %9 : vector<8x8x4xf32>
    %11 = vector.shape_cast %10 : vector<8x8x4xf32> to vector<64x4xf32>
    %12 = tpu.iota {dimensions = array<i32: 0>} : vector<64x1xi32>
    %c8_i32 = arith.constant 8 : i32
    %c0_i32 = arith.constant 0 : i32
    %13 = arith.cmpi eq, %c8_i32, %c0_i32 : i32
    %c1_i32 = arith.constant 1 : i32
    %14 = arith.select %13, %c1_i32, %c8_i32 : i32
    %15 = vector.broadcast %14 : i32 to vector<64x1xi32>
    %16 = arith.remsi %12, %15 : vector<64x1xi32>
    %c0_i32_15 = arith.constant 0 : i32
    %17 = vector.broadcast %c0_i32_15 : i32 to vector<64x1xi32>
    %18 = arith.cmpi ne, %16, %17 : vector<64x1xi32>
    %c0_i32_16 = arith.constant 0 : i32
    %19 = vector.broadcast %c0_i32_16 : i32 to vector<64x1xi32>
    %20 = arith.cmpi slt, %16, %19 : vector<64x1xi32>
    %c0_i32_17 = arith.constant 0 : i32
    %21 = arith.cmpi slt, %14, %c0_i32_17 : i32
    %22 = vector.broadcast %21 : i1 to vector<64x1xi1>
    %23 = vector.broadcast %22 : vector<64x1xi1> to vector<64x1xi1>
    %24 = arith.xori %20, %23 : vector<64x1xi1>
    %25 = arith.andi %24, %18 : vector<64x1xi1>
    %26 = vector.broadcast %14 : i32 to vector<64x1xi32>
    %27 = arith.addi %16, %26 : vector<64x1xi32>
    %28 = arith.select %25, %27, %16 : vector<64x1xi1>, vector<64x1xi32>
    %c0_i32_18 = arith.constant 0 : i32
    %29 = vector.broadcast %c0_i32_18 : i32 to vector<64x1xi32>
    %30 = arith.cmpi eq, %28, %29 : vector<64x1xi32>
    %c7_i32 = arith.constant 7 : i32
    %31 = vector.broadcast %c7_i32 : i32 to vector<64x1xi32>
    %32 = arith.cmpi eq, %28, %31 : vector<64x1xi32>
    %cst = arith.constant 0.000000e+00 : f32
    %33 = vector.broadcast %cst : f32 to vector<1x4xf32>
    %34 = vector.extract_strided_slice %11 {offsets = [0, 0], sizes = [63, 4], strides = [1, 1]} : vector<64x4xf32> to vector<63x4xf32>
    %35 = tpu.concatenate %33, %34 in 0 : vector<1x4xf32>, vector<63x4xf32> -> vector<64x4xf32>
    %cst_19 = arith.constant 0.000000e+00 : f32
    %36 = vector.shape_cast %30 : vector<64x1xi1> to vector<64x1xi1>
    %37 = vector.broadcast %36 : vector<64x1xi1> to vector<64x4xi1>
    %38 = vector.broadcast %cst_19 : f32 to vector<64x4xf32>
    %39 = arith.select %37, %38, %35 : vector<64x4xi1>, vector<64x4xf32>
    %40 = vector.extract_strided_slice %11 {offsets = [1, 0], sizes = [63, 4], strides = [1, 1]} : vector<64x4xf32> to vector<63x4xf32>
    %cst_20 = arith.constant 0.000000e+00 : f32
    %41 = vector.broadcast %cst_20 : f32 to vector<1x4xf32>
    %42 = tpu.concatenate %40, %41 in 0 : vector<63x4xf32>, vector<1x4xf32> -> vector<64x4xf32>
    %cst_21 = arith.constant 0.000000e+00 : f32
    %43 = vector.shape_cast %32 : vector<64x1xi1> to vector<64x1xi1>
    %44 = vector.broadcast %43 : vector<64x1xi1> to vector<64x4xi1>
    %45 = vector.broadcast %cst_21 : f32 to vector<64x4xf32>
    %46 = arith.select %44, %45, %42 : vector<64x4xi1>, vector<64x4xf32>
    %47 = tpu.concatenate %39, %11, %46 in 1 : vector<64x4xf32>, vector<64x4xf32>, vector<64x4xf32> -> vector<64x12xf32>
    %cst_22 = arith.constant 0.000000e+00 : f32
    %48 = vector.broadcast %cst_22 : f32 to vector<8x12xf32>
    %49 = vector.extract_strided_slice %47 {offsets = [0, 0], sizes = [56, 12], strides = [1, 1]} : vector<64x12xf32> to vector<56x12xf32>
    %50 = tpu.concatenate %48, %49 in 0 : vector<8x12xf32>, vector<56x12xf32> -> vector<64x12xf32>
    %51 = vector.extract_strided_slice %47 {offsets = [8, 0], sizes = [56, 12], strides = [1, 1]} : vector<64x12xf32> to vector<56x12xf32>
    %cst_23 = arith.constant 0.000000e+00 : f32
    %52 = vector.broadcast %cst_23 : f32 to vector<8x12xf32>
    %53 = tpu.concatenate %51, %52 in 0 : vector<56x12xf32>, vector<8x12xf32> -> vector<64x12xf32>
    %cst_24 = arith.constant 0.000000e+00 : f32
    %54 = vector.broadcast %cst_24 : f32 to vector<64x4xf32>
    %55 = arith.truncf %50 : vector<64x12xf32> to vector<64x12xbf16>
    %c0_25 = arith.constant 0 : index
    %c0_26 = arith.constant 0 : index
    %c0_27 = arith.constant 0 : index
    %56 = vector.load %arg5[%c0_25, %c0_26, %c0_27] : memref<3x12x4xbf16, #tpu.memory_space<vmem>>, vector<1x12x4xbf16>
    %57 = vector.shape_cast %56 : vector<1x12x4xbf16> to vector<12x4xbf16>
    %cst_28 = arith.constant dense<0.000000e+00> : vector<64x4xf32>
    %58 = tpu.matmul %55, %57, %cst_28 {dimension_numbers = #tpu.dot_dimension_numbers<[1], [0], [0], [1], [0, 0, 1, 1], [], []>} : vector<64x12xbf16>, vector<12x4xbf16>, vector<64x4xf32> -> vector<64x4xf32>
    %59 = arith.addf %54, %58 : vector<64x4xf32>
    %60 = arith.truncf %47 : vector<64x12xf32> to vector<64x12xbf16>
    %c1 = arith.constant 1 : index
    %c0_29 = arith.constant 0 : index
    %c0_30 = arith.constant 0 : index
    %61 = vector.load %arg5[%c1, %c0_29, %c0_30] : memref<3x12x4xbf16, #tpu.memory_space<vmem>>, vector<1x12x4xbf16>
    %62 = vector.shape_cast %61 : vector<1x12x4xbf16> to vector<12x4xbf16>
    %cst_31 = arith.constant dense<0.000000e+00> : vector<64x4xf32>
    %63 = tpu.matmul %60, %62, %cst_31 {dimension_numbers = #tpu.dot_dimension_numbers<[1], [0], [0], [1], [0, 0, 1, 1], [], []>} : vector<64x12xbf16>, vector<12x4xbf16>, vector<64x4xf32> -> vector<64x4xf32>
    %64 = arith.addf %59, %63 : vector<64x4xf32>
    %65 = arith.truncf %53 : vector<64x12xf32> to vector<64x12xbf16>
    %c2 = arith.constant 2 : index
    %c0_32 = arith.constant 0 : index
    %c0_33 = arith.constant 0 : index
    %66 = vector.load %arg5[%c2, %c0_32, %c0_33] : memref<3x12x4xbf16, #tpu.memory_space<vmem>>, vector<1x12x4xbf16>
    %67 = vector.shape_cast %66 : vector<1x12x4xbf16> to vector<12x4xbf16>
    %cst_34 = arith.constant dense<0.000000e+00> : vector<64x4xf32>
    %68 = tpu.matmul %65, %67, %cst_34 {dimension_numbers = #tpu.dot_dimension_numbers<[1], [0], [0], [1], [0, 0, 1, 1], [], []>} : vector<64x12xbf16>, vector<12x4xbf16>, vector<64x4xf32> -> vector<64x4xf32>
    %69 = arith.addf %64, %68 : vector<64x4xf32>
    %c0_35 = arith.constant 0 : index
    %c0_36 = arith.constant 0 : index
    %70 = vector.load %arg9[%c0_35, %c0_36] : memref<4x4xf32, #tpu.memory_space<vmem>>, vector<1x4xf32>
    %c1_37 = arith.constant 1 : index
    %c0_38 = arith.constant 0 : index
    %71 = vector.load %arg9[%c1_37, %c0_38] : memref<4x4xf32, #tpu.memory_space<vmem>>, vector<1x4xf32>
    %72 = vector.shape_cast %69 : vector<64x4xf32> to vector<1x64x4xf32>
    %cst_39 = arith.constant dense<0.000000e+00> : vector<1xf32>
    %73 = vector.multi_reduction <add>, %72, %cst_39 [1, 2] : vector<1x64x4xf32> to vector<1xf32>
    %74 = vector.shape_cast %73 : vector<1xf32> to vector<1x1x1xf32>
    %75 = vector.extract %74[0, 0, 0] : f32 from vector<1x1x1xf32>
    %cst_40 = arith.constant 3.906250e-03 : f32
    %76 = arith.mulf %75, %cst_40 : f32
    %77 = arith.mulf %69, %69 : vector<64x4xf32>
    %78 = vector.shape_cast %77 : vector<64x4xf32> to vector<1x64x4xf32>
    %cst_41 = arith.constant dense<0.000000e+00> : vector<1xf32>
    %79 = vector.multi_reduction <add>, %78, %cst_41 [1, 2] : vector<1x64x4xf32> to vector<1xf32>
    %80 = vector.shape_cast %79 : vector<1xf32> to vector<1x1x1xf32>
    %81 = vector.extract %80[0, 0, 0] : f32 from vector<1x1x1xf32>
    %cst_42 = arith.constant 3.906250e-03 : f32
    %82 = arith.mulf %81, %cst_42 : f32
    %83 = arith.mulf %76, %76 : f32
    %84 = arith.subf %82, %83 : f32
    %cst_43 = arith.constant 0.000000e+00 : f32
    %85 = arith.maximumf %84, %cst_43 : f32
    %86 = vector.broadcast %76 : f32 to vector<64x4xf32>
    %87 = arith.subf %69, %86 : vector<64x4xf32>
    %cst_44 = arith.constant 9.99999974E-6 : f32
    %88 = arith.addf %85, %cst_44 : f32
    %89 = math.rsqrt %88 : f32
    %90 = vector.broadcast %89 : f32 to vector<64x4xf32>
    %91 = arith.mulf %87, %90 : vector<64x4xf32>
    %92 = vector.broadcast %70 : vector<1x4xf32> to vector<64x4xf32>
    %93 = arith.mulf %91, %92 : vector<64x4xf32>
    %94 = vector.broadcast %71 : vector<1x4xf32> to vector<64x4xf32>
    %95 = arith.addf %93, %94 : vector<64x4xf32>
    %cst_45 = arith.constant 5.000000e-01 : f32
    %96 = vector.broadcast %cst_45 : f32 to vector<64x4xf32>
    %97 = arith.mulf %96, %95 : vector<64x4xf32>
    %cst_46 = arith.constant 0.707106769 : f32
    %98 = vector.broadcast %cst_46 : f32 to vector<64x4xf32>
    %99 = arith.mulf %95, %98 : vector<64x4xf32>
    %cst_47 = arith.constant 0.000000e+00 : f32
    %100 = vector.broadcast %cst_47 : f32 to vector<64x4xf32>
    %101 = arith.cmpf oge, %99, %100 : vector<64x4xf32>
    %cst_48 = arith.constant 1.000000e+00 : f32
    %cst_49 = arith.constant -1.000000e+00 : f32
    %102 = vector.broadcast %cst_48 : f32 to vector<64x4xf32>
    %103 = vector.broadcast %cst_49 : f32 to vector<64x4xf32>
    %104 = arith.select %101, %102, %103 : vector<64x4xi1>, vector<64x4xf32>
    %105 = math.absf %99 : vector<64x4xf32>
    %cst_50 = arith.constant 0.327591091 : f32
    %106 = vector.broadcast %cst_50 : f32 to vector<64x4xf32>
    %107 = arith.mulf %106, %105 : vector<64x4xf32>
    %cst_51 = arith.constant 1.000000e+00 : f32
    %108 = vector.broadcast %cst_51 : f32 to vector<64x4xf32>
    %109 = arith.addf %108, %107 : vector<64x4xf32>
    %cst_52 = arith.constant 1.000000e+00 : f32
    %110 = vector.broadcast %cst_52 : f32 to vector<64x4xf32>
    %111 = arith.divf %110, %109 : vector<64x4xf32>
    %cst_53 = arith.constant 1.06140542 : f32
    %112 = vector.broadcast %cst_53 : f32 to vector<64x4xf32>
    %113 = arith.mulf %112, %111 : vector<64x4xf32>
    %cst_54 = arith.constant -1.45315206 : f32
    %114 = vector.broadcast %cst_54 : f32 to vector<64x4xf32>
    %115 = arith.addf %113, %114 : vector<64x4xf32>
    %116 = arith.mulf %115, %111 : vector<64x4xf32>
    %cst_55 = arith.constant 1.42141378 : f32
    %117 = vector.broadcast %cst_55 : f32 to vector<64x4xf32>
    %118 = arith.addf %116, %117 : vector<64x4xf32>
    %119 = arith.mulf %118, %111 : vector<64x4xf32>
    %cst_56 = arith.constant -0.284496725 : f32
    %120 = vector.broadcast %cst_56 : f32 to vector<64x4xf32>
    %121 = arith.addf %119, %120 : vector<64x4xf32>
    %122 = arith.mulf %121, %111 : vector<64x4xf32>
    %cst_57 = arith.constant 0.254829586 : f32
    %123 = vector.broadcast %cst_57 : f32 to vector<64x4xf32>
    %124 = arith.addf %122, %123 : vector<64x4xf32>
    %125 = arith.mulf %124, %111 : vector<64x4xf32>
    %cst_58 = arith.constant 0.000000e+00 : f32
    %126 = vector.broadcast %cst_58 : f32 to vector<64x4xf32>
    %127 = arith.subf %126, %105 : vector<64x4xf32>
    %128 = arith.mulf %127, %105 : vector<64x4xf32>
    %129 = math.exp %128 : vector<64x4xf32>
    %130 = arith.mulf %125, %129 : vector<64x4xf32>
    %cst_59 = arith.constant 1.000000e+00 : f32
    %131 = vector.broadcast %cst_59 : f32 to vector<64x4xf32>
    %132 = arith.subf %131, %130 : vector<64x4xf32>
    %133 = arith.mulf %104, %132 : vector<64x4xf32>
    %cst_60 = arith.constant 1.000000e+00 : f32
    %134 = vector.broadcast %cst_60 : f32 to vector<64x4xf32>
    %135 = arith.addf %134, %133 : vector<64x4xf32>
    %136 = arith.mulf %97, %135 : vector<64x4xf32>
    %cst_61 = arith.constant 0.000000e+00 : f32
    %137 = vector.broadcast %cst_61 : f32 to vector<1x4xf32>
    %138 = vector.extract_strided_slice %136 {offsets = [0, 0], sizes = [63, 4], strides = [1, 1]} : vector<64x4xf32> to vector<63x4xf32>
    %139 = tpu.concatenate %137, %138 in 0 : vector<1x4xf32>, vector<63x4xf32> -> vector<64x4xf32>
    %cst_62 = arith.constant 0.000000e+00 : f32
    %140 = vector.shape_cast %30 : vector<64x1xi1> to vector<64x1xi1>
    %141 = vector.broadcast %140 : vector<64x1xi1> to vector<64x4xi1>
    %142 = vector.broadcast %cst_62 : f32 to vector<64x4xf32>
    %143 = arith.select %141, %142, %139 : vector<64x4xi1>, vector<64x4xf32>
    %144 = vector.extract_strided_slice %136 {offsets = [1, 0], sizes = [63, 4], strides = [1, 1]} : vector<64x4xf32> to vector<63x4xf32>
    %cst_63 = arith.constant 0.000000e+00 : f32
    %145 = vector.broadcast %cst_63 : f32 to vector<1x4xf32>
    %146 = tpu.concatenate %144, %145 in 0 : vector<63x4xf32>, vector<1x4xf32> -> vector<64x4xf32>
    %cst_64 = arith.constant 0.000000e+00 : f32
    %147 = vector.shape_cast %32 : vector<64x1xi1> to vector<64x1xi1>
    %148 = vector.broadcast %147 : vector<64x1xi1> to vector<64x4xi1>
    %149 = vector.broadcast %cst_64 : f32 to vector<64x4xf32>
    %150 = arith.select %148, %149, %146 : vector<64x4xi1>, vector<64x4xf32>
    %151 = tpu.concatenate %143, %136, %150 in 1 : vector<64x4xf32>, vector<64x4xf32>, vector<64x4xf32> -> vector<64x12xf32>
    %cst_65 = arith.constant 0.000000e+00 : f32
    %152 = vector.broadcast %cst_65 : f32 to vector<8x12xf32>
    %153 = vector.extract_strided_slice %151 {offsets = [0, 0], sizes = [56, 12], strides = [1, 1]} : vector<64x12xf32> to vector<56x12xf32>
    %154 = tpu.concatenate %152, %153 in 0 : vector<8x12xf32>, vector<56x12xf32> -> vector<64x12xf32>
    %155 = vector.extract_strided_slice %151 {offsets = [8, 0], sizes = [56, 12], strides = [1, 1]} : vector<64x12xf32> to vector<56x12xf32>
    %cst_66 = arith.constant 0.000000e+00 : f32
    %156 = vector.broadcast %cst_66 : f32 to vector<8x12xf32>
    %157 = tpu.concatenate %155, %156 in 0 : vector<56x12xf32>, vector<8x12xf32> -> vector<64x12xf32>
    %cst_67 = arith.constant 0.000000e+00 : f32
    %158 = vector.broadcast %cst_67 : f32 to vector<64x4xf32>
    %159 = arith.truncf %154 : vector<64x12xf32> to vector<64x12xbf16>
    %c0_68 = arith.constant 0 : index
    %c0_69 = arith.constant 0 : index
    %c0_70 = arith.constant 0 : index
    %160 = vector.load %arg6[%c0_68, %c0_69, %c0_70] : memref<3x12x4xbf16, #tpu.memory_space<vmem>>, vector<1x12x4xbf16>
    %161 = vector.shape_cast %160 : vector<1x12x4xbf16> to vector<12x4xbf16>
    %cst_71 = arith.constant dense<0.000000e+00> : vector<64x4xf32>
    %162 = tpu.matmul %159, %161, %cst_71 {dimension_numbers = #tpu.dot_dimension_numbers<[1], [0], [0], [1], [0, 0, 1, 1], [], []>} : vector<64x12xbf16>, vector<12x4xbf16>, vector<64x4xf32> -> vector<64x4xf32>
    %163 = arith.addf %158, %162 : vector<64x4xf32>
    %164 = arith.truncf %151 : vector<64x12xf32> to vector<64x12xbf16>
    %c1_72 = arith.constant 1 : index
    %c0_73 = arith.constant 0 : index
    %c0_74 = arith.constant 0 : index
    %165 = vector.load %arg6[%c1_72, %c0_73, %c0_74] : memref<3x12x4xbf16, #tpu.memory_space<vmem>>, vector<1x12x4xbf16>
    %166 = vector.shape_cast %165 : vector<1x12x4xbf16> to vector<12x4xbf16>
    %cst_75 = arith.constant dense<0.000000e+00> : vector<64x4xf32>
    %167 = tpu.matmul %164, %166, %cst_75 {dimension_numbers = #tpu.dot_dimension_numbers<[1], [0], [0], [1], [0, 0, 1, 1], [], []>} : vector<64x12xbf16>, vector<12x4xbf16>, vector<64x4xf32> -> vector<64x4xf32>
    %168 = arith.addf %163, %167 : vector<64x4xf32>
    %169 = arith.truncf %157 : vector<64x12xf32> to vector<64x12xbf16>
    %c2_76 = arith.constant 2 : index
    %c0_77 = arith.constant 0 : index
    %c0_78 = arith.constant 0 : index
    %170 = vector.load %arg6[%c2_76, %c0_77, %c0_78] : memref<3x12x4xbf16, #tpu.memory_space<vmem>>, vector<1x12x4xbf16>
    %171 = vector.shape_cast %170 : vector<1x12x4xbf16> to vector<12x4xbf16>
    %cst_79 = arith.constant dense<0.000000e+00> : vector<64x4xf32>
    %172 = tpu.matmul %169, %171, %cst_79 {dimension_numbers = #tpu.dot_dimension_numbers<[1], [0], [0], [1], [0, 0, 1, 1], [], []>} : vector<64x12xbf16>, vector<12x4xbf16>, vector<64x4xf32> -> vector<64x4xf32>
    %173 = arith.addf %168, %172 : vector<64x4xf32>
    %c2_80 = arith.constant 2 : index
    %c0_81 = arith.constant 0 : index
    %174 = vector.load %arg9[%c2_80, %c0_81] : memref<4x4xf32, #tpu.memory_space<vmem>>, vector<1x4xf32>
    %c3 = arith.constant 3 : index
    %c0_82 = arith.constant 0 : index
    %175 = vector.load %arg9[%c3, %c0_82] : memref<4x4xf32, #tpu.memory_space<vmem>>, vector<1x4xf32>
    %176 = vector.shape_cast %173 : vector<64x4xf32> to vector<1x64x4xf32>
    %cst_83 = arith.constant dense<0.000000e+00> : vector<1xf32>
    %177 = vector.multi_reduction <add>, %176, %cst_83 [1, 2] : vector<1x64x4xf32> to vector<1xf32>
    %178 = vector.shape_cast %177 : vector<1xf32> to vector<1x1x1xf32>
    %179 = vector.extract %178[0, 0, 0] : f32 from vector<1x1x1xf32>
    %cst_84 = arith.constant 3.906250e-03 : f32
    %180 = arith.mulf %179, %cst_84 : f32
    %181 = arith.mulf %173, %173 : vector<64x4xf32>
    %182 = vector.shape_cast %181 : vector<64x4xf32> to vector<1x64x4xf32>
    %cst_85 = arith.constant dense<0.000000e+00> : vector<1xf32>
    %183 = vector.multi_reduction <add>, %182, %cst_85 [1, 2] : vector<1x64x4xf32> to vector<1xf32>
    %184 = vector.shape_cast %183 : vector<1xf32> to vector<1x1x1xf32>
    %185 = vector.extract %184[0, 0, 0] : f32 from vector<1x1x1xf32>
    %cst_86 = arith.constant 3.906250e-03 : f32
    %186 = arith.mulf %185, %cst_86 : f32
    %187 = arith.mulf %180, %180 : f32
    %188 = arith.subf %186, %187 : f32
    %cst_87 = arith.constant 0.000000e+00 : f32
    %189 = arith.maximumf %188, %cst_87 : f32
    %190 = vector.broadcast %180 : f32 to vector<64x4xf32>
    %191 = arith.subf %173, %190 : vector<64x4xf32>
    %cst_88 = arith.constant 9.99999974E-6 : f32
    %192 = arith.addf %189, %cst_88 : f32
    %193 = math.rsqrt %192 : f32
    %194 = vector.broadcast %193 : f32 to vector<64x4xf32>
    %195 = arith.mulf %191, %194 : vector<64x4xf32>
    %196 = vector.broadcast %174 : vector<1x4xf32> to vector<64x4xf32>
    %197 = arith.mulf %195, %196 : vector<64x4xf32>
    %198 = vector.broadcast %175 : vector<1x4xf32> to vector<64x4xf32>
    %199 = arith.addf %197, %198 : vector<64x4xf32>
    %200 = arith.addf %199, %11 : vector<64x4xf32>
    %cst_89 = arith.constant 5.000000e-01 : f32
    %201 = vector.broadcast %cst_89 : f32 to vector<64x4xf32>
    %202 = arith.mulf %201, %200 : vector<64x4xf32>
    %cst_90 = arith.constant 0.707106769 : f32
    %203 = vector.broadcast %cst_90 : f32 to vector<64x4xf32>
    %204 = arith.mulf %200, %203 : vector<64x4xf32>
    %cst_91 = arith.constant 0.000000e+00 : f32
    %205 = vector.broadcast %cst_91 : f32 to vector<64x4xf32>
    %206 = arith.cmpf oge, %204, %205 : vector<64x4xf32>
    %cst_92 = arith.constant 1.000000e+00 : f32
    %cst_93 = arith.constant -1.000000e+00 : f32
    %207 = vector.broadcast %cst_92 : f32 to vector<64x4xf32>
    %208 = vector.broadcast %cst_93 : f32 to vector<64x4xf32>
    %209 = arith.select %206, %207, %208 : vector<64x4xi1>, vector<64x4xf32>
    %210 = math.absf %204 : vector<64x4xf32>
    %cst_94 = arith.constant 0.327591091 : f32
    %211 = vector.broadcast %cst_94 : f32 to vector<64x4xf32>
    %212 = arith.mulf %211, %210 : vector<64x4xf32>
    %cst_95 = arith.constant 1.000000e+00 : f32
    %213 = vector.broadcast %cst_95 : f32 to vector<64x4xf32>
    %214 = arith.addf %213, %212 : vector<64x4xf32>
    %cst_96 = arith.constant 1.000000e+00 : f32
    %215 = vector.broadcast %cst_96 : f32 to vector<64x4xf32>
    %216 = arith.divf %215, %214 : vector<64x4xf32>
    %cst_97 = arith.constant 1.06140542 : f32
    %217 = vector.broadcast %cst_97 : f32 to vector<64x4xf32>
    %218 = arith.mulf %217, %216 : vector<64x4xf32>
    %cst_98 = arith.constant -1.45315206 : f32
    %219 = vector.broadcast %cst_98 : f32 to vector<64x4xf32>
    %220 = arith.addf %218, %219 : vector<64x4xf32>
    %221 = arith.mulf %220, %216 : vector<64x4xf32>
    %cst_99 = arith.constant 1.42141378 : f32
    %222 = vector.broadcast %cst_99 : f32 to vector<64x4xf32>
    %223 = arith.addf %221, %222 : vector<64x4xf32>
    %224 = arith.mulf %223, %216 : vector<64x4xf32>
    %cst_100 = arith.constant -0.284496725 : f32
    %225 = vector.broadcast %cst_100 : f32 to vector<64x4xf32>
    %226 = arith.addf %224, %225 : vector<64x4xf32>
    %227 = arith.mulf %226, %216 : vector<64x4xf32>
    %cst_101 = arith.constant 0.254829586 : f32
    %228 = vector.broadcast %cst_101 : f32 to vector<64x4xf32>
    %229 = arith.addf %227, %228 : vector<64x4xf32>
    %230 = arith.mulf %229, %216 : vector<64x4xf32>
    %cst_102 = arith.constant 0.000000e+00 : f32
    %231 = vector.broadcast %cst_102 : f32 to vector<64x4xf32>
    %232 = arith.subf %231, %210 : vector<64x4xf32>
    %233 = arith.mulf %232, %210 : vector<64x4xf32>
    %234 = math.exp %233 : vector<64x4xf32>
    %235 = arith.mulf %230, %234 : vector<64x4xf32>
    %cst_103 = arith.constant 1.000000e+00 : f32
    %236 = vector.broadcast %cst_103 : f32 to vector<64x4xf32>
    %237 = arith.subf %236, %235 : vector<64x4xf32>
    %238 = arith.mulf %209, %237 : vector<64x4xf32>
    %cst_104 = arith.constant 1.000000e+00 : f32
    %239 = vector.broadcast %cst_104 : f32 to vector<64x4xf32>
    %240 = arith.addf %239, %238 : vector<64x4xf32>
    %241 = arith.mulf %202, %240 : vector<64x4xf32>
    %cst_105 = arith.constant 0.000000e+00 : f32
    %242 = vector.broadcast %cst_105 : f32 to vector<1x4xf32>
    %243 = vector.extract_strided_slice %241 {offsets = [0, 0], sizes = [63, 4], strides = [1, 1]} : vector<64x4xf32> to vector<63x4xf32>
    %244 = tpu.concatenate %242, %243 in 0 : vector<1x4xf32>, vector<63x4xf32> -> vector<64x4xf32>
    %cst_106 = arith.constant 0.000000e+00 : f32
    %245 = vector.shape_cast %30 : vector<64x1xi1> to vector<64x1xi1>
    %246 = vector.broadcast %245 : vector<64x1xi1> to vector<64x4xi1>
    %247 = vector.broadcast %cst_106 : f32 to vector<64x4xf32>
    %248 = arith.select %246, %247, %244 : vector<64x4xi1>, vector<64x4xf32>
    %249 = vector.extract_strided_slice %241 {offsets = [1, 0], sizes = [63, 4], strides = [1, 1]} : vector<64x4xf32> to vector<63x4xf32>
    %cst_107 = arith.constant 0.000000e+00 : f32
    %250 = vector.broadcast %cst_107 : f32 to vector<1x4xf32>
    %251 = tpu.concatenate %249, %250 in 0 : vector<63x4xf32>, vector<1x4xf32> -> vector<64x4xf32>
    %cst_108 = arith.constant 0.000000e+00 : f32
    %252 = vector.shape_cast %32 : vector<64x1xi1> to vector<64x1xi1>
    %253 = vector.broadcast %252 : vector<64x1xi1> to vector<64x4xi1>
    %254 = vector.broadcast %cst_108 : f32 to vector<64x4xf32>
    %255 = arith.select %253, %254, %251 : vector<64x4xi1>, vector<64x4xf32>
    %256 = tpu.concatenate %248, %241, %255 in 1 : vector<64x4xf32>, vector<64x4xf32>, vector<64x4xf32> -> vector<64x12xf32>
    %cst_109 = arith.constant 0.000000e+00 : f32
    %257 = vector.broadcast %cst_109 : f32 to vector<8x12xf32>
    %258 = vector.extract_strided_slice %256 {offsets = [0, 0], sizes = [56, 12], strides = [1, 1]} : vector<64x12xf32> to vector<56x12xf32>
    %259 = tpu.concatenate %257, %258 in 0 : vector<8x12xf32>, vector<56x12xf32> -> vector<64x12xf32>
    %260 = vector.extract_strided_slice %256 {offsets = [8, 0], sizes = [56, 12], strides = [1, 1]} : vector<64x12xf32> to vector<56x12xf32>
    %cst_110 = arith.constant 0.000000e+00 : f32
    %261 = vector.broadcast %cst_110 : f32 to vector<8x12xf32>
    %262 = tpu.concatenate %260, %261 in 0 : vector<56x12xf32>, vector<8x12xf32> -> vector<64x12xf32>
    %cst_111 = arith.constant 0.000000e+00 : f32
    %263 = vector.broadcast %cst_111 : f32 to vector<64x8xf32>
    %264 = arith.truncf %259 : vector<64x12xf32> to vector<64x12xbf16>
    %c0_112 = arith.constant 0 : index
    %c0_113 = arith.constant 0 : index
    %c0_114 = arith.constant 0 : index
    %265 = vector.load %arg7[%c0_112, %c0_113, %c0_114] : memref<3x12x8xbf16, #tpu.memory_space<vmem>>, vector<1x12x8xbf16>
    %266 = vector.shape_cast %265 : vector<1x12x8xbf16> to vector<12x8xbf16>
    %cst_115 = arith.constant dense<0.000000e+00> : vector<64x8xf32>
    %267 = tpu.matmul %264, %266, %cst_115 {dimension_numbers = #tpu.dot_dimension_numbers<[1], [0], [0], [1], [0, 0, 1, 1], [], []>} : vector<64x12xbf16>, vector<12x8xbf16>, vector<64x8xf32> -> vector<64x8xf32>
    %268 = arith.addf %263, %267 : vector<64x8xf32>
    %269 = arith.truncf %256 : vector<64x12xf32> to vector<64x12xbf16>
    %c1_116 = arith.constant 1 : index
    %c0_117 = arith.constant 0 : index
    %c0_118 = arith.constant 0 : index
    %270 = vector.load %arg7[%c1_116, %c0_117, %c0_118] : memref<3x12x8xbf16, #tpu.memory_space<vmem>>, vector<1x12x8xbf16>
    %271 = vector.shape_cast %270 : vector<1x12x8xbf16> to vector<12x8xbf16>
    %cst_119 = arith.constant dense<0.000000e+00> : vector<64x8xf32>
    %272 = tpu.matmul %269, %271, %cst_119 {dimension_numbers = #tpu.dot_dimension_numbers<[1], [0], [0], [1], [0, 0, 1, 1], [], []>} : vector<64x12xbf16>, vector<12x8xbf16>, vector<64x8xf32> -> vector<64x8xf32>
    %273 = arith.addf %268, %272 : vector<64x8xf32>
    %274 = arith.truncf %262 : vector<64x12xf32> to vector<64x12xbf16>
    %c2_120 = arith.constant 2 : index
    %c0_121 = arith.constant 0 : index
    %c0_122 = arith.constant 0 : index
    %275 = vector.load %arg7[%c2_120, %c0_121, %c0_122] : memref<3x12x8xbf16, #tpu.memory_space<vmem>>, vector<1x12x8xbf16>
    %276 = vector.shape_cast %275 : vector<1x12x8xbf16> to vector<12x8xbf16>
    %cst_123 = arith.constant dense<0.000000e+00> : vector<64x8xf32>
    %277 = tpu.matmul %274, %276, %cst_123 {dimension_numbers = #tpu.dot_dimension_numbers<[1], [0], [0], [1], [0, 0, 1, 1], [], []>} : vector<64x12xbf16>, vector<12x8xbf16>, vector<64x8xf32> -> vector<64x8xf32>
    %278 = arith.addf %273, %277 : vector<64x8xf32>
    %c0_124 = arith.constant 0 : index
    %c0_125 = arith.constant 0 : index
    %279 = vector.load %arg10[%c0_124, %c0_125] : memref<4x8xf32, #tpu.memory_space<vmem>>, vector<1x8xf32>
    %c1_126 = arith.constant 1 : index
    %c0_127 = arith.constant 0 : index
    %280 = vector.load %arg10[%c1_126, %c0_127] : memref<4x8xf32, #tpu.memory_space<vmem>>, vector<1x8xf32>
    %281 = vector.shape_cast %278 : vector<64x8xf32> to vector<1x64x8xf32>
    %cst_128 = arith.constant dense<0.000000e+00> : vector<1xf32>
    %282 = vector.multi_reduction <add>, %281, %cst_128 [1, 2] : vector<1x64x8xf32> to vector<1xf32>
    %283 = vector.shape_cast %282 : vector<1xf32> to vector<1x1x1xf32>
    %284 = vector.extract %283[0, 0, 0] : f32 from vector<1x1x1xf32>
    %cst_129 = arith.constant 0.001953125 : f32
    %285 = arith.mulf %284, %cst_129 : f32
    %286 = arith.mulf %278, %278 : vector<64x8xf32>
    %287 = vector.shape_cast %286 : vector<64x8xf32> to vector<1x64x8xf32>
    %cst_130 = arith.constant dense<0.000000e+00> : vector<1xf32>
    %288 = vector.multi_reduction <add>, %287, %cst_130 [1, 2] : vector<1x64x8xf32> to vector<1xf32>
    %289 = vector.shape_cast %288 : vector<1xf32> to vector<1x1x1xf32>
    %290 = vector.extract %289[0, 0, 0] : f32 from vector<1x1x1xf32>
    %cst_131 = arith.constant 0.001953125 : f32
    %291 = arith.mulf %290, %cst_131 : f32
    %292 = arith.mulf %285, %285 : f32
    %293 = arith.subf %291, %292 : f32
    %cst_132 = arith.constant 0.000000e+00 : f32
    %294 = arith.maximumf %293, %cst_132 : f32
    %295 = vector.broadcast %285 : f32 to vector<64x8xf32>
    %296 = arith.subf %278, %295 : vector<64x8xf32>
    %cst_133 = arith.constant 9.99999974E-6 : f32
    %297 = arith.addf %294, %cst_133 : f32
    %298 = math.rsqrt %297 : f32
    %299 = vector.broadcast %298 : f32 to vector<64x8xf32>
    %300 = arith.mulf %296, %299 : vector<64x8xf32>
    %301 = vector.broadcast %279 : vector<1x8xf32> to vector<64x8xf32>
    %302 = arith.mulf %300, %301 : vector<64x8xf32>
    %303 = vector.broadcast %280 : vector<1x8xf32> to vector<64x8xf32>
    %304 = arith.addf %302, %303 : vector<64x8xf32>
    %cst_134 = arith.constant 5.000000e-01 : f32
    %305 = vector.broadcast %cst_134 : f32 to vector<64x8xf32>
    %306 = arith.mulf %305, %304 : vector<64x8xf32>
    %cst_135 = arith.constant 0.707106769 : f32
    %307 = vector.broadcast %cst_135 : f32 to vector<64x8xf32>
    %308 = arith.mulf %304, %307 : vector<64x8xf32>
    %cst_136 = arith.constant 0.000000e+00 : f32
    %309 = vector.broadcast %cst_136 : f32 to vector<64x8xf32>
    %310 = arith.cmpf oge, %308, %309 : vector<64x8xf32>
    %cst_137 = arith.constant 1.000000e+00 : f32
    %cst_138 = arith.constant -1.000000e+00 : f32
    %311 = vector.broadcast %cst_137 : f32 to vector<64x8xf32>
    %312 = vector.broadcast %cst_138 : f32 to vector<64x8xf32>
    %313 = arith.select %310, %311, %312 : vector<64x8xi1>, vector<64x8xf32>
    %314 = math.absf %308 : vector<64x8xf32>
    %cst_139 = arith.constant 0.327591091 : f32
    %315 = vector.broadcast %cst_139 : f32 to vector<64x8xf32>
    %316 = arith.mulf %315, %314 : vector<64x8xf32>
    %cst_140 = arith.constant 1.000000e+00 : f32
    %317 = vector.broadcast %cst_140 : f32 to vector<64x8xf32>
    %318 = arith.addf %317, %316 : vector<64x8xf32>
    %cst_141 = arith.constant 1.000000e+00 : f32
    %319 = vector.broadcast %cst_141 : f32 to vector<64x8xf32>
    %320 = arith.divf %319, %318 : vector<64x8xf32>
    %cst_142 = arith.constant 1.06140542 : f32
    %321 = vector.broadcast %cst_142 : f32 to vector<64x8xf32>
    %322 = arith.mulf %321, %320 : vector<64x8xf32>
    %cst_143 = arith.constant -1.45315206 : f32
    %323 = vector.broadcast %cst_143 : f32 to vector<64x8xf32>
    %324 = arith.addf %322, %323 : vector<64x8xf32>
    %325 = arith.mulf %324, %320 : vector<64x8xf32>
    %cst_144 = arith.constant 1.42141378 : f32
    %326 = vector.broadcast %cst_144 : f32 to vector<64x8xf32>
    %327 = arith.addf %325, %326 : vector<64x8xf32>
    %328 = arith.mulf %327, %320 : vector<64x8xf32>
    %cst_145 = arith.constant -0.284496725 : f32
    %329 = vector.broadcast %cst_145 : f32 to vector<64x8xf32>
    %330 = arith.addf %328, %329 : vector<64x8xf32>
    %331 = arith.mulf %330, %320 : vector<64x8xf32>
    %cst_146 = arith.constant 0.254829586 : f32
    %332 = vector.broadcast %cst_146 : f32 to vector<64x8xf32>
    %333 = arith.addf %331, %332 : vector<64x8xf32>
    %334 = arith.mulf %333, %320 : vector<64x8xf32>
    %cst_147 = arith.constant 0.000000e+00 : f32
    %335 = vector.broadcast %cst_147 : f32 to vector<64x8xf32>
    %336 = arith.subf %335, %314 : vector<64x8xf32>
    %337 = arith.mulf %336, %314 : vector<64x8xf32>
    %338 = math.exp %337 : vector<64x8xf32>
    %339 = arith.mulf %334, %338 : vector<64x8xf32>
    %cst_148 = arith.constant 1.000000e+00 : f32
    %340 = vector.broadcast %cst_148 : f32 to vector<64x8xf32>
    %341 = arith.subf %340, %339 : vector<64x8xf32>
    %342 = arith.mulf %313, %341 : vector<64x8xf32>
    %cst_149 = arith.constant 1.000000e+00 : f32
    %343 = vector.broadcast %cst_149 : f32 to vector<64x8xf32>
    %344 = arith.addf %343, %342 : vector<64x8xf32>
    %345 = arith.mulf %306, %344 : vector<64x8xf32>
    %cst_150 = arith.constant 0.000000e+00 : f32
    %346 = vector.broadcast %cst_150 : f32 to vector<1x8xf32>
    %347 = vector.extract_strided_slice %345 {offsets = [0, 0], sizes = [63, 8], strides = [1, 1]} : vector<64x8xf32> to vector<63x8xf32>
    %348 = tpu.concatenate %346, %347 in 0 : vector<1x8xf32>, vector<63x8xf32> -> vector<64x8xf32>
    %cst_151 = arith.constant 0.000000e+00 : f32
    %349 = vector.shape_cast %30 : vector<64x1xi1> to vector<64x1xi1>
    %350 = vector.broadcast %349 : vector<64x1xi1> to vector<64x8xi1>
    %351 = vector.broadcast %cst_151 : f32 to vector<64x8xf32>
    %352 = arith.select %350, %351, %348 : vector<64x8xi1>, vector<64x8xf32>
    %353 = vector.extract_strided_slice %345 {offsets = [1, 0], sizes = [63, 8], strides = [1, 1]} : vector<64x8xf32> to vector<63x8xf32>
    %cst_152 = arith.constant 0.000000e+00 : f32
    %354 = vector.broadcast %cst_152 : f32 to vector<1x8xf32>
    %355 = tpu.concatenate %353, %354 in 0 : vector<63x8xf32>, vector<1x8xf32> -> vector<64x8xf32>
    %cst_153 = arith.constant 0.000000e+00 : f32
    %356 = vector.shape_cast %32 : vector<64x1xi1> to vector<64x1xi1>
    %357 = vector.broadcast %356 : vector<64x1xi1> to vector<64x8xi1>
    %358 = vector.broadcast %cst_153 : f32 to vector<64x8xf32>
    %359 = arith.select %357, %358, %355 : vector<64x8xi1>, vector<64x8xf32>
    %360 = tpu.concatenate %352, %345, %359 in 1 : vector<64x8xf32>, vector<64x8xf32>, vector<64x8xf32> -> vector<64x24xf32>
    %cst_154 = arith.constant 0.000000e+00 : f32
    %361 = vector.broadcast %cst_154 : f32 to vector<8x24xf32>
    %362 = vector.extract_strided_slice %360 {offsets = [0, 0], sizes = [56, 24], strides = [1, 1]} : vector<64x24xf32> to vector<56x24xf32>
    %363 = tpu.concatenate %361, %362 in 0 : vector<8x24xf32>, vector<56x24xf32> -> vector<64x24xf32>
    %364 = vector.extract_strided_slice %360 {offsets = [8, 0], sizes = [56, 24], strides = [1, 1]} : vector<64x24xf32> to vector<56x24xf32>
    %cst_155 = arith.constant 0.000000e+00 : f32
    %365 = vector.broadcast %cst_155 : f32 to vector<8x24xf32>
    %366 = tpu.concatenate %364, %365 in 0 : vector<56x24xf32>, vector<8x24xf32> -> vector<64x24xf32>
    %cst_156 = arith.constant 0.000000e+00 : f32
    %367 = vector.broadcast %cst_156 : f32 to vector<64x8xf32>
    %368 = arith.truncf %363 : vector<64x24xf32> to vector<64x24xbf16>
    %c0_157 = arith.constant 0 : index
    %c0_158 = arith.constant 0 : index
    %c0_159 = arith.constant 0 : index
    %369 = vector.load %arg8[%c0_157, %c0_158, %c0_159] : memref<3x24x8xbf16, #tpu.memory_space<vmem>>, vector<1x24x8xbf16>
    %370 = vector.shape_cast %369 : vector<1x24x8xbf16> to vector<24x8xbf16>
    %cst_160 = arith.constant dense<0.000000e+00> : vector<64x8xf32>
    %371 = tpu.matmul %368, %370, %cst_160 {dimension_numbers = #tpu.dot_dimension_numbers<[1], [0], [0], [1], [0, 0, 1, 1], [], []>} : vector<64x24xbf16>, vector<24x8xbf16>, vector<64x8xf32> -> vector<64x8xf32>
    %372 = arith.addf %367, %371 : vector<64x8xf32>
    %373 = arith.truncf %360 : vector<64x24xf32> to vector<64x24xbf16>
    %c1_161 = arith.constant 1 : index
    %c0_162 = arith.constant 0 : index
    %c0_163 = arith.constant 0 : index
    %374 = vector.load %arg8[%c1_161, %c0_162, %c0_163] : memref<3x24x8xbf16, #tpu.memory_space<vmem>>, vector<1x24x8xbf16>
    %375 = vector.shape_cast %374 : vector<1x24x8xbf16> to vector<24x8xbf16>
    %cst_164 = arith.constant dense<0.000000e+00> : vector<64x8xf32>
    %376 = tpu.matmul %373, %375, %cst_164 {dimension_numbers = #tpu.dot_dimension_numbers<[1], [0], [0], [1], [0, 0, 1, 1], [], []>} : vector<64x24xbf16>, vector<24x8xbf16>, vector<64x8xf32> -> vector<64x8xf32>
    %377 = arith.addf %372, %376 : vector<64x8xf32>
    %378 = arith.truncf %366 : vector<64x24xf32> to vector<64x24xbf16>
    %c2_165 = arith.constant 2 : index
    %c0_166 = arith.constant 0 : index
    %c0_167 = arith.constant 0 : index
    %379 = vector.load %arg8[%c2_165, %c0_166, %c0_167] : memref<3x24x8xbf16, #tpu.memory_space<vmem>>, vector<1x24x8xbf16>
    %380 = vector.shape_cast %379 : vector<1x24x8xbf16> to vector<24x8xbf16>
    %cst_168 = arith.constant dense<0.000000e+00> : vector<64x8xf32>
    %381 = tpu.matmul %378, %380, %cst_168 {dimension_numbers = #tpu.dot_dimension_numbers<[1], [0], [0], [1], [0, 0, 1, 1], [], []>} : vector<64x24xbf16>, vector<24x8xbf16>, vector<64x8xf32> -> vector<64x8xf32>
    %382 = arith.addf %377, %381 : vector<64x8xf32>
    %c2_169 = arith.constant 2 : index
    %c0_170 = arith.constant 0 : index
    %383 = vector.load %arg10[%c2_169, %c0_170] : memref<4x8xf32, #tpu.memory_space<vmem>>, vector<1x8xf32>
    %c3_171 = arith.constant 3 : index
    %c0_172 = arith.constant 0 : index
    %384 = vector.load %arg10[%c3_171, %c0_172] : memref<4x8xf32, #tpu.memory_space<vmem>>, vector<1x8xf32>
    %385 = vector.shape_cast %382 : vector<64x8xf32> to vector<1x64x8xf32>
    %cst_173 = arith.constant dense<0.000000e+00> : vector<1xf32>
    %386 = vector.multi_reduction <add>, %385, %cst_173 [1, 2] : vector<1x64x8xf32> to vector<1xf32>
    %387 = vector.shape_cast %386 : vector<1xf32> to vector<1x1x1xf32>
    %388 = vector.extract %387[0, 0, 0] : f32 from vector<1x1x1xf32>
    %cst_174 = arith.constant 0.001953125 : f32
    %389 = arith.mulf %388, %cst_174 : f32
    %390 = arith.mulf %382, %382 : vector<64x8xf32>
    %391 = vector.shape_cast %390 : vector<64x8xf32> to vector<1x64x8xf32>
    %cst_175 = arith.constant dense<0.000000e+00> : vector<1xf32>
    %392 = vector.multi_reduction <add>, %391, %cst_175 [1, 2] : vector<1x64x8xf32> to vector<1xf32>
    %393 = vector.shape_cast %392 : vector<1xf32> to vector<1x1x1xf32>
    %394 = vector.extract %393[0, 0, 0] : f32 from vector<1x1x1xf32>
    %cst_176 = arith.constant 0.001953125 : f32
    %395 = arith.mulf %394, %cst_176 : f32
    %396 = arith.mulf %389, %389 : f32
    %397 = arith.subf %395, %396 : f32
    %cst_177 = arith.constant 0.000000e+00 : f32
    %398 = arith.maximumf %397, %cst_177 : f32
    %399 = vector.broadcast %389 : f32 to vector<64x8xf32>
    %400 = arith.subf %382, %399 : vector<64x8xf32>
    %cst_178 = arith.constant 9.99999974E-6 : f32
    %401 = arith.addf %398, %cst_178 : f32
    %402 = math.rsqrt %401 : f32
    %403 = vector.broadcast %402 : f32 to vector<64x8xf32>
    %404 = arith.mulf %400, %403 : vector<64x8xf32>
    %405 = vector.broadcast %383 : vector<1x8xf32> to vector<64x8xf32>
    %406 = arith.mulf %404, %405 : vector<64x8xf32>
    %407 = vector.broadcast %384 : vector<1x8xf32> to vector<64x8xf32>
    %408 = arith.addf %406, %407 : vector<64x8xf32>
    %409 = vector.shape_cast %408 : vector<64x8xf32> to vector<1x8x8x8xf32>
    %c0_179 = arith.constant 0 : index
    %c0_180 = arith.constant 0 : index
    %c0_181 = arith.constant 0 : index
    %c0_182 = arith.constant 0 : index
    %410 = vector.load %arg11[%c0_179, %c0_180, %c0_181, %c0_182] : memref<1x8x8x8xf32, #tpu.memory_space<vmem>>, vector<1x8x8x8xf32>
    tpu.vector_store %arg11[%c0_179, %c0_180, %c0_181, %c0_182], %409 {strides = array<i32>} : memref<1x8x8x8xf32, #tpu.memory_space<vmem>>, vector<1x8x8x8xf32>,
    return
  }
  func.func @transform_0(%arg0: i32) -> (i32, i32, i32, i32) {
    %c0_i32 = arith.constant 0 : i32
    %c0_i32_0 = arith.constant 0 : i32
    %c0_i32_1 = arith.constant 0 : i32
    %c0_i32_2 = arith.constant 0 : i32
    return %arg0, %c0_i32, %c0_i32_0, %c0_i32_1 : i32, i32, i32, i32
  }
  func.func @transform_1(%arg0: i32) -> (i32, i32, i32, i32) {
    %c0_i32 = arith.constant 0 : i32
    %c0_i32_0 = arith.constant 0 : i32
    %c0_i32_1 = arith.constant 0 : i32
    %c0_i32_2 = arith.constant 0 : i32
    return %arg0, %c0_i32, %c0_i32_0, %c0_i32_1 : i32, i32, i32, i32
  }
  func.func @transform_2(%arg0: i32) -> (i32, i32, i32, i32) {
    %c0_i32 = arith.constant 0 : i32
    %c0_i32_0 = arith.constant 0 : i32
    %c0_i32_1 = arith.constant 0 : i32
    %c0_i32_2 = arith.constant 0 : i32
    return %arg0, %c0_i32, %c0_i32_0, %c0_i32_1 : i32, i32, i32, i32
  }
  func.func @transform_3(%arg0: i32) -> (i32, i32, i32, i32) {
    %c0_i32 = arith.constant 0 : i32
    %c0_i32_0 = arith.constant 0 : i32
    %c0_i32_1 = arith.constant 0 : i32
    %c0_i32_2 = arith.constant 0 : i32
    return %arg0, %c0_i32, %c0_i32_0, %c0_i32_1 : i32, i32, i32, i32
  }
  func.func @transform_4(%arg0: i32) -> (i32, i32, i32) {
    %c0_i32 = arith.constant 0 : i32
    %c0_i32_0 = arith.constant 0 : i32
    %c0_i32_1 = arith.constant 0 : i32
    %c0_i32_2 = arith.constant 0 : i32
    return %c0_i32, %c0_i32_0, %c0_i32_1 : i32, i32, i32
  }
  func.func @transform_5(%arg0: i32) -> (i32, i32, i32) {
    %c0_i32 = arith.constant 0 : i32
    %c0_i32_0 = arith.constant 0 : i32
    %c0_i32_1 = arith.constant 0 : i32
    %c0_i32_2 = arith.constant 0 : i32
    return %c0_i32, %c0_i32_0, %c0_i32_1 : i32, i32, i32
  }
  func.func @transform_6(%arg0: i32) -> (i32, i32, i32) {
    %c0_i32 = arith.constant 0 : i32
    %c0_i32_0 = arith.constant 0 : i32
    %c0_i32_1 = arith.constant 0 : i32
    %c0_i32_2 = arith.constant 0 : i32
    return %c0_i32, %c0_i32_0, %c0_i32_1 : i32, i32, i32
  }
  func.func @transform_7(%arg0: i32) -> (i32, i32, i32) {
    %c0_i32 = arith.constant 0 : i32
    %c0_i32_0 = arith.constant 0 : i32
    %c0_i32_1 = arith.constant 0 : i32
    %c0_i32_2 = arith.constant 0 : i32
    return %c0_i32, %c0_i32_0, %c0_i32_1 : i32, i32, i32
  }
  func.func @transform_8(%arg0: i32) -> (i32, i32) {
    %c0_i32 = arith.constant 0 : i32
    %c0_i32_0 = arith.constant 0 : i32
    %c0_i32_1 = arith.constant 0 : i32
    return %c0_i32, %c0_i32_0 : i32, i32
  }
  func.func @transform_9(%arg0: i32) -> (i32, i32) {
    %c0_i32 = arith.constant 0 : i32
    %c0_i32_0 = arith.constant 0 : i32
    %c0_i32_1 = arith.constant 0 : i32
    return %c0_i32, %c0_i32_0 : i32, i32
  }
  func.func @transform_10(%arg0: i32) -> (i32, i32, i32, i32) {
    %c0_i32 = arith.constant 0 : i32
    %c0_i32_0 = arith.constant 0 : i32
    %c0_i32_1 = arith.constant 0 : i32
    %c0_i32_2 = arith.constant 0 : i32
    return %arg0, %c0_i32, %c0_i32_0, %c0_i32_1 : i32, i32, i32, i32
  }
}

</mosaic_0001>

<llo_original>
// kernel: down_forward.1
$region0: #{down_forward.1}
  #allocation0 [shape = 'u32[]', space=smem, size = 0x4, offset = 0x4, fixed_abs, tag = 'smem constant byte address 0x4 - core index']
  #allocation1 [shape = 'u32[144,128]{1,0:T(1,128)}', space=vmem, size = 0x12000, scoped, tag = 'internal scratch']
  %s0 = inlined_call_operand.vmem [shape: f32[2,8,8,4], index: 0, kind: input, shape index: {}]
  %s1 = inlined_call_operand.vmem [shape: f32[2,8,8,4], index: 1, kind: input, shape index: {}]
  %s2 = inlined_call_operand.vmem [shape: f32[2,8,8,4], index: 2, kind: input, shape index: {}]
  %s3 = inlined_call_operand.vmem [shape: f32[2,8,8,4], index: 3, kind: input, shape index: {}]
  %s4 = inlined_call_operand.vmem [shape: bf16[3,12,4], index: 4, kind: input, shape index: {}]
  %s5 = inlined_call_operand.vmem [shape: bf16[3,12,4], index: 5, kind: input, shape index: {}]
  %s6 = inlined_call_operand.vmem [shape: bf16[3,12,8], index: 6, kind: input, shape index: {}]
  %s7 = inlined_call_operand.vmem [shape: bf16[3,24,8], index: 7, kind: input, shape index: {}]
  %s8 = inlined_call_operand.vmem [shape: f32[4,4], index: 8, kind: input, shape index: {}]
  %s9 = inlined_call_operand.vmem [shape: f32[4,8], index: 9, kind: input, shape index: {}]
  %s10 = inlined_call_operand.vmem [shape: f32[2,8,8,8], index: 10, kind: output, shape index: {}]
  %s11 = sld [smem:[#allocation0]]
  $region73: #{down_forward.1} parent=0
    _
  %s13 = ssub.s32 1, %s11
  %s14 = scalar_select 0, %s13, %s11
  loop: start=0, step=1, limit=4
  $region2: #{down_forward.1} parent=0 // loop_pre_header
    _
  $region3: #{down_forward.1} parent=0 // loop_header
    %s16 = sphi 0, %s20
    %p17 = scmp.ge.s32.totalorder %s16, 4
    %s26 = sphi 0, %s28
    %s29 = sphi 0, %s26
    %s30 = sphi 0, %s29
    %s46 = sphi 0, %s30
    %s52 = sphi 0, %s54
    %s55 = sphi 0, %s52
    %s56 = sphi 0, %s55
    %s72 = sphi 0, %s56
    %s78 = sphi 0, %s80
    %s81 = sphi 0, %s78
    %s82 = sphi 0, %s81
    %s98 = sphi 0, %s82
    %s104 = sphi 0, %s106
    %s107 = sphi 0, %s104
    %s108 = sphi 0, %s107
    %s124 = sphi 0, %s108
    %s128 = sphi 0, %s128
    %s130 = sphi 0, %s128
    %s131 = sphi 0, %s130
    %s145 = sphi 0, %s131
    %s149 = sphi 0, %s149
    %s151 = sphi 0, %s149
    %s152 = sphi 0, %s151
    %s166 = sphi 0, %s152
    %s170 = sphi 0, %s170
    %s172 = sphi 0, %s170
    %s173 = sphi 0, %s172
    %s187 = sphi 0, %s173
    %s191 = sphi 0, %s191
    %s193 = sphi 0, %s191
    %s194 = sphi 0, %s193
    %s208 = sphi 0, %s194
    %s212 = sphi 0, %s212
    %s214 = sphi 0, %s212
    %s215 = sphi 0, %s214
    %s229 = sphi 0, %s215
    %s233 = sphi 0, %s233
    %s235 = sphi 0, %s233
    %s236 = sphi 0, %s235
    %s250 = sphi 0, %s236
    %s256 = sphi 0, %s258
    %s259 = sphi 0, %s256
    %s260 = sphi 0, %s259
    %s276 = sphi 0, %s260
  $region4: #{down_forward.1} parent=0 // loop_header_branch
    %19 = sbr.rel (%p17) target = $region8
  $region5: #{down_forward.1} parent=0 // loop_body
    %s21 = ssub.s32 %s16, 1
    %s22 = ssub.s32 %s16, 2
    %s23 = sadd.s32 %s16, 1
    %s24 = ssub.s32 %s16, %s23
    %p25 = scmp.eq.s32.totalorder %s24, 0
    %s27 = sadd.s32 %s26, 1
    %s28 = scalar_select %p25, %s26, %s27
    %p31 = pneg %p25
    %p32 = scmp.eq.s32.totalorder %s16, 1
    %p33 = por %p31, %p32
    %p34 = scmp.ne.s32.totalorder %s26, %s29
    %p35 = scmp.eq.s32.totalorder %s16, 0
    %p36 = por %p34, %p35
    %p37 = scmp.ne.s32.totalorder %s26, %s29
    %p38 = scmp.eq.s32.totalorder %s21, 1
    %p39 = por %p37, %p38
    %p40 = scmp.ne.s32.totalorder %s29, %s30
    %p41 = scmp.eq.s32.totalorder %s21, 0
    %p42 = por %p40, %p41
    %p43 = scmp.ne.s32.totalorder %s29, %s30
    %p44 = scmp.eq.s32.totalorder %s22, 1
    %p45 = por %p43, %p44
    %p47 = scmp.ne.s32.totalorder %s30, %s46
    %p48 = scmp.eq.s32.totalorder %s22, 0
    %p49 = por %p47, %p48
    %s50 = ssub.s32 %s16, %s23
    %p51 = scmp.eq.s32.totalorder %s50, 0
    %s53 = sadd.s32 %s52, 1
    %s54 = scalar_select %p51, %s52, %s53
    %p57 = pneg %p51
    %p58 = scmp.eq.s32.totalorder %s16, 1
    %p59 = por %p57, %p58
    %p60 = scmp.ne.s32.totalorder %s52, %s55
    %p61 = scmp.eq.s32.totalorder %s16, 0
    %p62 = por %p60, %p61
    %p63 = scmp.ne.s32.totalorder %s52, %s55
    %p64 = scmp.eq.s32.totalorder %s21, 1
    %p65 = por %p63, %p64
    %p66 = scmp.ne.s32.totalorder %s55, %s56
    %p67 = scmp.eq.s32.totalorder %s21, 0
    %p68 = por %p66, %p67
    %p69 = scmp.ne.s32.totalorder %s55, %s56
    %p70 = scmp.eq.s32.totalorder %s22, 1
    %p71 = por %p69, %p70
    %p73 = scmp.ne.s32.totalorder %s56, %s72
    %p74 = scmp.eq.s32.totalorder %s22, 0
    %p75 = por %p73, %p74
    %s76 = ssub.s32 %s16, %s23
    %p77 = scmp.eq.s32.totalorder %s76, 0
    %s79 = sadd.s32 %s78, 1
    %s80 = scalar_select %p77, %s78, %s79
    %p83 = pneg %p77
    %p84 = scmp.eq.s32.totalorder %s16, 1
    %p85 = por %p83, %p84
    %p86 = scmp.ne.s32.totalorder %s78, %s81
    %p87 = scmp.eq.s32.totalorder %s16, 0
    %p88 = por %p86, %p87
    %p89 = scmp.ne.s32.totalorder %s78, %s81
    %p90 = scmp.eq.s32.totalorder %s21, 1
    %p91 = por %p89, %p90
    %p92 = scmp.ne.s32.totalorder %s81, %s82
    %p93 = scmp.eq.s32.totalorder %s21, 0
    %p94 = por %p92, %p93
    %p95 = scmp.ne.s32.totalorder %s81, %s82
    %p96 = scmp.eq.s32.totalorder %s22, 1
    %p97 = por %p95, %p96
    %p99 = scmp.ne.s32.totalorder %s82, %s98
    %p100 = scmp.eq.s32.totalorder %s22, 0
    %p101 = por %p99, %p100
    %s102 = ssub.s32 %s16, %s23
    %p103 = scmp.eq.s32.totalorder %s102, 0
    %s105 = sadd.s32 %s104, 1
    %s106 = scalar_select %p103, %s104, %s105
    %p109 = pneg %p103
    %p110 = scmp.eq.s32.totalorder %s16, 1
    %p111 = por %p109, %p110
    %p112 = scmp.ne.s32.totalorder %s104, %s107
    %p113 = scmp.eq.s32.totalorder %s16, 0
    %p114 = por %p112, %p113
    %p115 = scmp.ne.s32.totalorder %s104, %s107
    %p116 = scmp.eq.s32.totalorder %s21, 1
    %p117 = por %p115, %p116
    %p118 = scmp.ne.s32.totalorder %s107, %s108
    %p119 = scmp.eq.s32.totalorder %s21, 0
    %p120 = por %p118, %p119
    %p121 = scmp.ne.s32.totalorder %s107, %s108
    %p122 = scmp.eq.s32.totalorder %s22, 1
    %p123 = por %p121, %p122
    %p125 = scmp.ne.s32.totalorder %s108, %s124
    %p126 = scmp.eq.s32.totalorder %s22, 0
    %p127 = por %p125, %p126
    %s129 = sadd.s32 %s128, 1
    %p132 = scmp.eq.s32.totalorder %s16, 1
    %p133 = scmp.ne.s32.totalorder %s128, %s130
    %p134 = scmp.eq.s32.totalorder %s16, 0
    %p135 = por %p133, %p134
    %p136 = scmp.ne.s32.totalorder %s128, %s130
    %p137 = scmp.eq.s32.totalorder %s21, 1
    %p138 = por %p136, %p137
    %p139 = scmp.ne.s32.totalorder %s130, %s131
    %p140 = scmp.eq.s32.totalorder %s21, 0
    %p141 = por %p139, %p140
    %p142 = scmp.ne.s32.totalorder %s130, %s131
    %p143 = scmp.eq.s32.totalorder %s22, 1
    %p144 = por %p142, %p143
    %p146 = scmp.ne.s32.totalorder %s131, %s145
    %p147 = scmp.eq.s32.totalorder %s22, 0
    %p148 = por %p146, %p147
    %s150 = sadd.s32 %s149, 1
    %p153 = scmp.eq.s32.totalorder %s16, 1
    %p154 = scmp.ne.s32.totalorder %s149, %s151
    %p155 = scmp.eq.s32.totalorder %s16, 0
    %p156 = por %p154, %p155
    %p157 = scmp.ne.s32.totalorder %s149, %s151
    %p158 = scmp.eq.s32.totalorder %s21, 1
    %p159 = por %p157, %p158
    %p160 = scmp.ne.s32.totalorder %s151, %s152
    %p161 = scmp.eq.s32.totalorder %s21, 0
    %p162 = por %p160, %p161
    %p163 = scmp.ne.s32.totalorder %s151, %s152
    %p164 = scmp.eq.s32.totalorder %s22, 1
    %p165 = por %p163, %p164
    %p167 = scmp.ne.s32.totalorder %s152, %s166
    %p168 = scmp.eq.s32.totalorder %s22, 0
    %p169 = por %p167, %p168
    %s171 = sadd.s32 %s170, 1
    %p174 = scmp.eq.s32.totalorder %s16, 1
    %p175 = scmp.ne.s32.totalorder %s170, %s172
    %p176 = scmp.eq.s32.totalorder %s16, 0
    %p177 = por %p175, %p176
    %p178 = scmp.ne.s32.totalorder %s170, %s172
    %p179 = scmp.eq.s32.totalorder %s21, 1
    %p180 = por %p178, %p179
    %p181 = scmp.ne.s32.totalorder %s172, %s173
    %p182 = scmp.eq.s32.totalorder %s21, 0
    %p183 = por %p181, %p182
    %p184 = scmp.ne.s32.totalorder %s172, %s173
    %p185 = scmp.eq.s32.totalorder %s22, 1
    %p186 = por %p184, %p185
    %p188 = scmp.ne.s32.totalorder %s173, %s187
    %p189 = scmp.eq.s32.totalorder %s22, 0
    %p190 = por %p188, %p189
    %s192 = sadd.s32 %s191, 1
    %p195 = scmp.eq.s32.totalorder %s16, 1
    %p196 = scmp.ne.s32.totalorder %s191, %s193
    %p197 = scmp.eq.s32.totalorder %s16, 0
    %p198 = por %p196, %p197
    %p199 = scmp.ne.s32.totalorder %s191, %s193
    %p200 = scmp.eq.s32.totalorder %s21, 1
    %p201 = por %p199, %p200
    %p202 = scmp.ne.s32.totalorder %s193, %s194
    %p203 = scmp.eq.s32.totalorder %s21, 0
    %p204 = por %p202, %p203
    %p205 = scmp.ne.s32.totalorder %s193, %s194
    %p206 = scmp.eq.s32.totalorder %s22, 1
    %p207 = por %p205, %p206
    %p209 = scmp.ne.s32.totalorder %s194, %s208
    %p210 = scmp.eq.s32.totalorder %s22, 0
    %p211 = por %p209, %p210
    %s213 = sadd.s32 %s212, 1
    %p216 = scmp.eq.s32.totalorder %s16, 1
    %p217 = scmp.ne.s32.totalorder %s212, %s214
    %p218 = scmp.eq.s32.totalorder %s16, 0
    %p219 = por %p217, %p218
    %p220 = scmp.ne.s32.totalorder %s212, %s214
    %p221 = scmp.eq.s32.totalorder %s21, 1
    %p222 = por %p220, %p221
    %p223 = scmp.ne.s32.totalorder %s214, %s215
    %p224 = scmp.eq.s32.totalorder %s21, 0
    %p225 = por %p223, %p224
    %p226 = scmp.ne.s32.totalorder %s214, %s215
    %p227 = scmp.eq.s32.totalorder %s22, 1
    %p228 = por %p226, %p227
    %p230 = scmp.ne.s32.totalorder %s215, %s229
    %p231 = scmp.eq.s32.totalorder %s22, 0
    %p232 = por %p230, %p231
    %s234 = sadd.s32 %s233, 1
    %p237 = scmp.eq.s32.totalorder %s16, 1
    %p238 = scmp.ne.s32.totalorder %s233, %s235
    %p239 = scmp.eq.s32.totalorder %s16, 0
    %p240 = por %p238, %p239
    %p241 = scmp.ne.s32.totalorder %s233, %s235
    %p242 = scmp.eq.s32.totalorder %s21, 1
    %p243 = por %p241, %p242
    %p244 = scmp.ne.s32.totalorder %s235, %s236
    %p245 = scmp.eq.s32.totalorder %s21, 0
    %p246 = por %p244, %p245
    %p247 = scmp.ne.s32.totalorder %s235, %s236
    %p248 = scmp.eq.s32.totalorder %s22, 1
    %p249 = por %p247, %p248
    %p251 = scmp.ne.s32.totalorder %s236, %s250
    %p252 = scmp.eq.s32.totalorder %s22, 0
    %p253 = por %p251, %p252
    %s254 = ssub.s32 %s16, %s23
    %p255 = scmp.eq.s32.totalorder %s254, 0
    %s257 = sadd.s32 %s256, 1
    %s258 = scalar_select %p255, %s256, %s257
    %p261 = pneg %p255
    %p262 = scmp.eq.s32.totalorder %s16, 1
    %p263 = por %p261, %p262
    %p264 = scmp.ne.s32.totalorder %s256, %s259
    %p265 = scmp.eq.s32.totalorder %s16, 0
    %p266 = por %p264, %p265
    %p267 = scmp.ne.s32.totalorder %s256, %s259
    %p268 = scmp.eq.s32.totalorder %s21, 1
    %p269 = por %p267, %p268
    %p270 = scmp.ne.s32.totalorder %s259, %s260
    %p271 = scmp.eq.s32.totalorder %s21, 0
    %p272 = por %p270, %p271
    %p273 = scmp.ne.s32.totalorder %s259, %s260
    %p274 = scmp.eq.s32.totalorder %s22, 1
    %p275 = por %p273, %p274
    %p277 = scmp.ne.s32.totalorder %s260, %s276
    %p278 = scmp.eq.s32.totalorder %s22, 0
    %p279 = por %p277, %p278
    %p280 = scmp.le.s32.totalorder 1, %s16
    %p281 = scmp.lt.s32.totalorder %s16, 3
    %p282 = pnand %p280, %p281
    %p283 = pneg %p282
    // Predicated region
    $region9: #{down_forward.1} parent=5 // pred_check
      _
    $region10: #{down_forward.1} parent=5 // pred_check_branch
      %285 = sbr.rel (%p282) target = $region12
    $region11: #{down_forward.1} parent=5 // pred_region
      %s286 = ssub.s32 %s16, 1
      // Predicated region
      $region13: #{down_forward.1} parent=11 // pred_check
        %p287 = pneg %p141
      $region14: #{down_forward.1} parent=11 // pred_check_branch
        %289 = sbr.rel (%p287) target = $region16
      $region15: #{down_forward.1} parent=11 // pred_region
        _
      $region16: #{down_forward.1} parent=11 // pred_fallthru
        _
      // Predicated region
      $region17: #{down_forward.1} parent=11 // pred_check
        %p290 = pneg %p162
      $region18: #{down_forward.1} parent=11 // pred_check_branch
        %292 = sbr.rel (%p290) target = $region20
      $region19: #{down_forward.1} parent=11 // pred_region
        _
      $region20: #{down_forward.1} parent=11 // pred_fallthru
        _
      // Predicated region
      $region21: #{down_forward.1} parent=11 // pred_check
        %p293 = pneg %p183
      $region22: #{down_forward.1} parent=11 // pred_check_branch
        %295 = sbr.rel (%p293) target = $region24
      $region23: #{down_forward.1} parent=11 // pred_region
        _
      $region24: #{down_forward.1} parent=11 // pred_fallthru
        _
      // Predicated region
      $region25: #{down_forward.1} parent=11 // pred_check
        %p296 = pneg %p204
      $region26: #{down_forward.1} parent=11 // pred_check_branch
        %298 = sbr.rel (%p296) target = $region28
      $region27: #{down_forward.1} parent=11 // pred_region
        _
      $region28: #{down_forward.1} parent=11 // pred_fallthru
        _
      // Predicated region
      $region29: #{down_forward.1} parent=11 // pred_check
        %p299 = pneg %p225
      $region30: #{down_forward.1} parent=11 // pred_check_branch
        %301 = sbr.rel (%p299) target = $region32
      $region31: #{down_forward.1} parent=11 // pred_region
        _
      $region32: #{down_forward.1} parent=11 // pred_fallthru
        _
      // Predicated region
      $region33: #{down_forward.1} parent=11 // pred_check
        %p302 = pneg %p246
      $region34: #{down_forward.1} parent=11 // pred_check_branch
        %304 = sbr.rel (%p302) target = $region36
      $region35: #{down_forward.1} parent=11 // pred_region
        _
      $region36: #{down_forward.1} parent=11 // pred_fallthru
        _
    $region12: #{down_forward.1} parent=5 // pred_fallthru
      _
    %p305 = scmp.lt.s32.totalorder %s16, 2
    // Predicated region
    $region37: #{down_forward.1} parent=5 // pred_check
      %p306 = pneg %p305
    $region38: #{down_forward.1} parent=5 // pred_check_branch
      %308 = sbr.rel (%p306) target = $region40
    $region39: #{down_forward.1} parent=5 // pred_region
      // Predicated region
      $region41: #{down_forward.1} parent=39 // pred_check
        %p309 = pneg %p36
      $region42: #{down_forward.1} parent=39 // pred_check_branch
        %311 = sbr.rel (%p309) target = $region44
      $region43: #{down_forward.1} parent=39 // pred_region
        %p312 = scmp.lt.s32.totalorder %s16, 1
        %s313 = scalar_select %p312, %s16, 1
        %s314 = smul.addr %s313, 8
        %s315 = smul.addr %s314, 8
        %s316 = scalar_lea.vmem %s0, %s315
      $region44: #{down_forward.1} parent=39 // pred_fallthru
        _
      // Predicated region
      $region45: #{down_forward.1} parent=39 // pred_check
        %p317 = pneg %p62
      $region46: #{down_forward.1} parent=39 // pred_check_branch
        %319 = sbr.rel (%p317) target = $region48
      $region47: #{down_forward.1} parent=39 // pred_region
        %p320 = scmp.lt.s32.totalorder %s16, 1
        %s321 = scalar_select %p320, %s16, 1
        %s322 = smul.addr %s321, 8
        %s323 = smul.addr %s322, 8
        %s324 = scalar_lea.vmem %s1, %s323
      $region48: #{down_forward.1} parent=39 // pred_fallthru
        _
      // Predicated region
      $region49: #{down_forward.1} parent=39 // pred_check
        %p325 = pneg %p88
      $region50: #{down_forward.1} parent=39 // pred_check_branch
        %327 = sbr.rel (%p325) target = $region52
      $region51: #{down_forward.1} parent=39 // pred_region
        %p328 = scmp.lt.s32.totalorder %s16, 1
        %s329 = scalar_select %p328, %s16, 1
        %s330 = smul.addr %s329, 8
        %s331 = smul.addr %s330, 8
        %s332 = scalar_lea.vmem %s2, %s331
      $region52: #{down_forward.1} parent=39 // pred_fallthru
        _
      // Predicated region
      $region53: #{down_forward.1} parent=39 // pred_check
        %p333 = pneg %p114
      $region54: #{down_forward.1} parent=39 // pred_check_branch
        %335 = sbr.rel (%p333) target = $region56
      $region55: #{down_forward.1} parent=39 // pred_region
        %p336 = scmp.lt.s32.totalorder %s16, 1
        %s337 = scalar_select %p336, %s16, 1
        %s338 = smul.addr %s337, 8
        %s339 = smul.addr %s338, 8
        %s340 = scalar_lea.vmem %s3, %s339
      $region56: #{down_forward.1} parent=39 // pred_fallthru
        _
    $region40: #{down_forward.1} parent=5 // pred_fallthru
      _
    %p341 = scmp.le.s32.totalorder 1, %s16
    %p342 = scmp.lt.s32.totalorder %s16, 3
    %p343 = pnand %p341, %p342
    %p344 = pneg %p343
    // Predicated region
    $region57: #{down_forward.1} parent=5 // pred_check
      _
    $region58: #{down_forward.1} parent=5 // pred_check_branch
      %346 = sbr.rel (%p343) target = $region60
    $region59: #{down_forward.1} parent=5 // pred_region
      %s347 = ssub.s32 %s16, 1
      %p348 = scmp.lt.s32.totalorder %s21, 1
      %s349 = scalar_select %p348, %s21, 1
      %s350 = smul.addr %s349, 8
      %s351 = smul.addr %s350, 8
      %s352 = scalar_lea.vmem %s0, %s351
      %p353 = pneg %p42
      %p354 = pneg %p39
      %p355 = scmp.lt.s32.totalorder %s21, 1
      %s356 = scalar_select %p355, %s21, 1
      %s357 = smul.addr %s356, 8
      %s358 = smul.addr %s357, 8
      %s359 = scalar_lea.vmem %s1, %s358
      %p360 = pneg %p68
      %p361 = pneg %p65
      %p362 = scmp.lt.s32.totalorder %s21, 1
      %s363 = scalar_select %p362, %s21, 1
      %s364 = smul.addr %s363, 8
      %s365 = smul.addr %s364, 8
      %s366 = scalar_lea.vmem %s2, %s365
      %p367 = pneg %p94
      %p368 = pneg %p91
      %p369 = scmp.lt.s32.totalorder %s21, 1
      %s370 = scalar_select %p369, %s21, 1
      %s371 = smul.addr %s370, 8
      %s372 = smul.addr %s371, 8
      %s373 = scalar_lea.vmem %s3, %s372
      %p374 = pneg %p120
      %p375 = pneg %p117
      %p376 = pneg %p141
      %p377 = pneg %p138
      %p378 = pneg %p162
      %p379 = pneg %p159
      %p380 = pneg %p183
      %p381 = pneg %p180
      %p382 = pneg %p204
      %p383 = pneg %p201
      %p384 = pneg %p225
      %p385 = pneg %p222
      %p386 = pneg %p246
      %p387 = pneg %p243
      %p388 = pneg %p272
      %p389 = pneg %p269
      %p390 = scmp.lt.s32.totalorder %s21, 1
      %s391 = scalar_select %p390, %s21, 1
      %s392 = smul.addr %s391, 8
      %s393 = smul.addr %s392, 8
      %s394 = scalar_lea.vmem %s10, %s393
      %p395 = scmp.lt.s32.totalorder %s21, 1
      %s396 = scalar_select %p395, %s21, 1
      %s397 = smul.addr %s396, 8
      %s398 = smul.addr %s397, 8
      %s399 = scalar_lea.vmem %s0, %s398
      %p400 = scmp.lt.s32.totalorder %s21, 1
      %s401 = scalar_select %p400, %s21, 1
      %s402 = smul.addr %s401, 8
      %s403 = smul.addr %s402, 8
      %s404 = scalar_lea.vmem %s1, %s403
      %p405 = scmp.lt.s32.totalorder %s21, 1
      %s406 = scalar_select %p405, %s21, 1
      %s407 = smul.addr %s406, 8
      %s408 = smul.addr %s407, 8
      %s409 = scalar_lea.vmem %s2, %s408
      %p410 = scmp.lt.s32.totalorder %s21, 1
      %s411 = scalar_select %p410, %s21, 1
      %s412 = smul.addr %s411, 8
      %s413 = smul.addr %s412, 8
      %s414 = scalar_lea.vmem %s3, %s413
      %p415 = scmp.lt.s32.totalorder %s21, 1
      %s416 = scalar_select %p415, %s21, 1
      %s417 = smul.addr %s416, 8
      %s418 = smul.addr %s417, 8
      %s419 = scalar_lea.vmem %s10, %s418
      %v421 = vld [vmem:[%s399] sm:$0xff]
      %v422 = vld [vmem:[%s399 + $0x8] sm:$0xff]
      %v423 = vld [vmem:[%s399 + $0x10] sm:$0xff]
      %v424 = vld [vmem:[%s399 + $0x18] sm:$0xff]
      %v425 = vld [vmem:[%s399 + $0x20] sm:$0xff]
      %v426 = vld [vmem:[%s399 + $0x28] sm:$0xff]
      %v427 = vld [vmem:[%s399 + $0x30] sm:$0xff]
      %v428 = vld [vmem:[%s399 + $0x38] sm:$0xff]
      %v429 = vld [vmem:[%s404] sm:$0xff]
      %v430 = vld [vmem:[%s404 + $0x8] sm:$0xff]
      %v431 = vld [vmem:[%s404 + $0x10] sm:$0xff]
      %v432 = vld [vmem:[%s404 + $0x18] sm:$0xff]
      %v433 = vld [vmem:[%s404 + $0x20] sm:$0xff]
      %v434 = vld [vmem:[%s404 + $0x28] sm:$0xff]
      %v435 = vld [vmem:[%s404 + $0x30] sm:$0xff]
      %v436 = vld [vmem:[%s404 + $0x38] sm:$0xff]
      %v437 = vmax.f32 %v421, %v429
      %v438 = vmax.f32 %v422, %v430
      %v439 = vmax.f32 %v423, %v431
      %v440 = vmax.f32 %v424, %v432
      %v441 = vmax.f32 %v425, %v433
      %v442 = vmax.f32 %v426, %v434
      %v443 = vmax.f32 %v427, %v435
      %v444 = vmax.f32 %v428, %v436
      %v445 = vld [vmem:[%s409] sm:$0xff]
      %v446 = vld [vmem:[%s409 + $0x8] sm:$0xff]
      %v447 = vld [vmem:[%s409 + $0x10] sm:$0xff]
      %v448 = vld [vmem:[%s409 + $0x18] sm:$0xff]
      %v449 = vld [vmem:[%s409 + $0x20] sm:$0xff]
      %v450 = vld [vmem:[%s409 + $0x28] sm:$0xff]
      %v451 = vld [vmem:[%s409 + $0x30] sm:$0xff]
      %v452 = vld [vmem:[%s409 + $0x38] sm:$0xff]
      %v453 = vld [vmem:[%s414] sm:$0xff]
      %v454 = vld [vmem:[%s414 + $0x8] sm:$0xff]
      %v455 = vld [vmem:[%s414 + $0x10] sm:$0xff]
      %v456 = vld [vmem:[%s414 + $0x18] sm:$0xff]
      %v457 = vld [vmem:[%s414 + $0x20] sm:$0xff]
      %v458 = vld [vmem:[%s414 + $0x28] sm:$0xff]
      %v459 = vld [vmem:[%s414 + $0x30] sm:$0xff]
      %v460 = vld [vmem:[%s414 + $0x38] sm:$0xff]
      %v461 = vmax.f32 %v445, %v453
      %v462 = vmax.f32 %v446, %v454
      %v463 = vmax.f32 %v447, %v455
      %v464 = vmax.f32 %v448, %v456
      %v465 = vmax.f32 %v449, %v457
      %v466 = vmax.f32 %v450, %v458
      %v467 = vmax.f32 %v451, %v459
      %v468 = vmax.f32 %v452, %v460
      %v469 = vmax.f32 %v437, %v461
      %v470 = vmax.f32 %v438, %v462
      %v471 = vmax.f32 %v439, %v463
      %v472 = vmax.f32 %v440, %v464
      %v473 = vmax.f32 %v441, %v465
      %v474 = vmax.f32 %v442, %v466
      %v475 = vmax.f32 %v443, %v467
      %v476 = vmax.f32 %v444, %v468
      %v477 = vlaneseq
      %v478 = vshrl.u32 %v477, 7
      %v479 = vadd.s32 %v478, 8
      %v480 = vadd.s32 %v478, 16
      %v481 = vadd.s32 %v478, 24
      %v482 = vadd.s32 %v478, 32
      %v483 = vadd.s32 %v478, 40
      %v484 = vadd.s32 %v478, 48
      %v485 = vadd.s32 %v478, 56
      %vm486 = vcmp.lt.s32.totalorder %v478, 0
      %v487 = vsub.s32 0, %v478
      %v488 = vsel %vm486, %v487, %v478
      %v489 = vshrl.u32 %v488, 3
      %v490 = vand.u32 %v488, 7
      %v491 = vsub.s32 0, %v490
      %v492 = vsel %vm486, %v491, %v490
      %vm493 = vcmp.lt.s32.totalorder %v479, 0
      %v494 = vsub.s32 0, %v479
      %v495 = vsel %vm493, %v494, %v479
      %v496 = vshrl.u32 %v495, 3
      %v497 = vand.u32 %v495, 7
      %v498 = vsub.s32 0, %v497
      %v499 = vsel %vm493, %v498, %v497
      %vm500 = vcmp.lt.s32.totalorder %v480, 0
      %v501 = vsub.s32 0, %v480
      %v502 = vsel %vm500, %v501, %v480
      %v503 = vshrl.u32 %v502, 3
      %v504 = vand.u32 %v502, 7
      %v505 = vsub.s32 0, %v504
      %v506 = vsel %vm500, %v505, %v504
      %vm507 = vcmp.lt.s32.totalorder %v481, 0
      %v508 = vsub.s32 0, %v481
      %v509 = vsel %vm507, %v508, %v481
      %v510 = vshrl.u32 %v509, 3
      %v511 = vand.u32 %v509, 7
      %v512 = vsub.s32 0, %v511
      %v513 = vsel %vm507, %v512, %v511
      %vm514 = vcmp.lt.s32.totalorder %v482, 0
      %v515 = vsub.s32 0, %v482
      %v516 = vsel %vm514, %v515, %v482
      %v517 = vshrl.u32 %v516, 3
      %v518 = vand.u32 %v516, 7
      %v519 = vsub.s32 0, %v518
      %v520 = vsel %vm514, %v519, %v518
      %vm521 = vcmp.lt.s32.totalorder %v483, 0
      %v522 = vsub.s32 0, %v483
      %v523 = vsel %vm521, %v522, %v483
      %v524 = vshrl.u32 %v523, 3
      %v525 = vand.u32 %v523, 7
      %v526 = vsub.s32 0, %v525
      %v527 = vsel %vm521, %v526, %v525
      %vm528 = vcmp.lt.s32.totalorder %v484, 0
      %v529 = vsub.s32 0, %v484
      %v530 = vsel %vm528, %v529, %v484
      %v531 = vshrl.u32 %v530, 3
      %v532 = vand.u32 %v530, 7
      %v533 = vsub.s32 0, %v532
      %v534 = vsel %vm528, %v533, %v532
      %vm535 = vcmp.lt.s32.totalorder %v485, 0
      %v536 = vsub.s32 0, %v485
      %v537 = vsel %vm535, %v536, %v485
      %v538 = vshrl.u32 %v537, 3
      %v539 = vand.u32 %v537, 7
      %v540 = vsub.s32 0, %v539
      %v541 = vsel %vm535, %v540, %v539
      %vm542 = vcmp.ne.s32.totalorder %v492, 0
      %vm543 = vcmp.ne.s32.totalorder %v499, 0
      %vm544 = vcmp.ne.s32.totalorder %v506, 0
      %vm545 = vcmp.ne.s32.totalorder %v513, 0
      %vm546 = vcmp.ne.s32.totalorder %v520, 0
      %vm547 = vcmp.ne.s32.totalorder %v527, 0
      %vm548 = vcmp.ne.s32.totalorder %v534, 0
      %vm549 = vcmp.ne.s32.totalorder %v541, 0
      %vm550 = vcmp.lt.s32.totalorder %v492, 0
      %vm551 = vcmp.lt.s32.totalorder %v499, 0
      %vm552 = vcmp.lt.s32.totalorder %v506, 0
      %vm553 = vcmp.lt.s32.totalorder %v513, 0
      %vm554 = vcmp.lt.s32.totalorder %v520, 0
      %vm555 = vcmp.lt.s32.totalorder %v527, 0
      %vm556 = vcmp.lt.s32.totalorder %v534, 0
      %vm557 = vcmp.lt.s32.totalorder %v541, 0
      %vm558 = vmand %vm550, %vm542
      %vm559 = vmand %vm551, %vm543
      %vm560 = vmand %vm552, %vm544
      %vm561 = vmand %vm553, %vm545
      %vm562 = vmand %vm554, %vm546
      %vm563 = vmand %vm555, %vm547
      %vm564 = vmand %vm556, %vm548
      %vm565 = vmand %vm557, %vm549
      %v566 = vadd.s32 %v492, 8
      %v567 = vadd.s32 %v499, 8
      %v568 = vadd.s32 %v506, 8
      %v569 = vadd.s32 %v513, 8
      %v570 = vadd.s32 %v520, 8
      %v571 = vadd.s32 %v527, 8
      %v572 = vadd.s32 %v534, 8
      %v573 = vadd.s32 %v541, 8
      %v574 = vsel %vm558, %v566, %v492
      %v575 = vsel %vm559, %v567, %v499
      %v576 = vsel %vm560, %v568, %v506
      %v577 = vsel %vm561, %v569, %v513
      %v578 = vsel %vm562, %v570, %v520
      %v579 = vsel %vm563, %v571, %v527
      %v580 = vsel %vm564, %v572, %v534
      %v581 = vsel %vm565, %v573, %v541
      %vm582 = vcmp.eq.s32.totalorder %v574, 0
      %vm583 = vcmp.eq.s32.totalorder %v575, 0
      %vm584 = vcmp.eq.s32.totalorder %v576, 0
      %vm585 = vcmp.eq.s32.totalorder %v577, 0
      %vm586 = vcmp.eq.s32.totalorder %v578, 0
      %vm587 = vcmp.eq.s32.totalorder %v579, 0
      %vm588 = vcmp.eq.s32.totalorder %v580, 0
      %vm589 = vcmp.eq.s32.totalorder %v581, 0
      %vm590 = vcmp.eq.s32.totalorder %v574, 7
      %vm591 = vcmp.eq.s32.totalorder %v575, 7
      %vm592 = vcmp.eq.s32.totalorder %v576, 7
      %vm593 = vcmp.eq.s32.totalorder %v577, 7
      %vm594 = vcmp.eq.s32.totalorder %v578, 7
      %vm595 = vcmp.eq.s32.totalorder %v579, 7
      %vm596 = vcmp.eq.s32.totalorder %v580, 7
      %vm597 = vcmp.eq.s32.totalorder %v581, 7
      %vm606 = vcmask 1040384
      %v607 = vrot.slane %v469, 7
      %v608 = vrot.slane %v470, 7
      %v609 = vsel %vm606, %v607, %v608
      %v610 = vrot.slane %v471, 7
      %v611 = vsel %vm606, %v608, %v610
      %v612 = vrot.slane %v472, 7
      %v613 = vsel %vm606, %v610, %v612
      %v614 = vrot.slane %v473, 7
      %v615 = vsel %vm606, %v612, %v614
      %v616 = vrot.slane %v474, 7
      %v617 = vsel %vm606, %v614, %v616
      %v618 = vrot.slane %v475, 7
      %v619 = vsel %vm606, %v616, %v618
      %v620 = vrot.slane %v476, 7
      %v621 = vsel %vm606, %v618, %v620
      %v630 = vsel %vm606, 0.0, %v607
      %v631 = vsel %vm582, 1, 0
      %v632 = vsel %vm583, 1, 0
      %v633 = vsel %vm584, 1, 0
      %v634 = vsel %vm585, 1, 0
      %v635 = vsel %vm586, 1, 0
      %v636 = vsel %vm587, 1, 0
      %v637 = vsel %vm588, 1, 0
      %v638 = vsel %vm589, 1, 0
      %vm639 = vcmp.eq.s32.totalorder %v631, 1
      %vm640 = vcmp.eq.s32.totalorder %v632, 1
      %vm641 = vcmp.eq.s32.totalorder %v633, 1
      %vm642 = vcmp.eq.s32.totalorder %v634, 1
      %vm643 = vcmp.eq.s32.totalorder %v635, 1
      %vm644 = vcmp.eq.s32.totalorder %v636, 1
      %vm645 = vcmp.eq.s32.totalorder %v637, 1
      %vm646 = vcmp.eq.s32.totalorder %v638, 1
      %v647 = vsel %vm639, 0.0, %v630
      %v648 = vsel %vm640, 0.0, %v609
      %v649 = vsel %vm641, 0.0, %v611
      %v650 = vsel %vm642, 0.0, %v613
      %v651 = vsel %vm643, 0.0, %v615
      %v652 = vsel %vm644, 0.0, %v617
      %v653 = vsel %vm645, 0.0, %v619
      %v654 = vsel %vm646, 0.0, %v621
      %vm655 = vcmask 1046528
      %v656 = vrot.slane %v469, 1
      %v657 = vrot.slane %v470, 1
      %v658 = vsel %vm655, %v656, %v657
      %v659 = vrot.slane %v471, 1
      %v660 = vsel %vm655, %v657, %v659
      %v661 = vrot.slane %v472, 1
      %v662 = vsel %vm655, %v659, %v661
      %v663 = vrot.slane %v473, 1
      %v664 = vsel %vm655, %v661, %v663
      %v665 = vrot.slane %v474, 1
      %v666 = vsel %vm655, %v663, %v665
      %v667 = vrot.slane %v475, 1
      %v668 = vsel %vm655, %v665, %v667
      %v669 = vrot.slane %v476, 1
      %v670 = vsel %vm655, %v667, %v669
      %v679 = vsel %vm655, %v669, 0.0
      %v680 = vsel %vm590, 1, 0
      %v681 = vsel %vm591, 1, 0
      %v682 = vsel %vm592, 1, 0
      %v683 = vsel %vm593, 1, 0
      %v684 = vsel %vm594, 1, 0
      %v685 = vsel %vm595, 1, 0
      %v686 = vsel %vm596, 1, 0
      %v687 = vsel %vm597, 1, 0
      %vm688 = vcmp.eq.s32.totalorder %v680, 1
      %vm689 = vcmp.eq.s32.totalorder %v681, 1
      %vm690 = vcmp.eq.s32.totalorder %v682, 1
      %vm691 = vcmp.eq.s32.totalorder %v683, 1
      %vm692 = vcmp.eq.s32.totalorder %v684, 1
      %vm693 = vcmp.eq.s32.totalorder %v685, 1
      %vm694 = vcmp.eq.s32.totalorder %v686, 1
      %vm695 = vcmp.eq.s32.totalorder %v687, 1
      %v696 = vsel %vm688, 0.0, %v658
      %v697 = vsel %vm689, 0.0, %v660
      %v698 = vsel %vm690, 0.0, %v662
      %v699 = vsel %vm691, 0.0, %v664
      %v700 = vsel %vm692, 0.0, %v666
      %v701 = vsel %vm693, 0.0, %v668
      %v702 = vsel %vm694, 0.0, %v670
      %v703 = vsel %vm695, 0.0, %v679
      %704 = vrot.lane.b32.xlu0 %v469, 4
      %v705 = vpop.permute.xlu0 %704
      %706 = vrot.lane.b32.xlu0 %v470, 4
      %v707 = vpop.permute.xlu0 %706
      %708 = vrot.lane.b32.xlu0 %v471, 4
      %v709 = vpop.permute.xlu0 %708
      %710 = vrot.lane.b32.xlu0 %v472, 4
      %v711 = vpop.permute.xlu0 %710
      %712 = vrot.lane.b32.xlu0 %v473, 4
      %v713 = vpop.permute.xlu0 %712
      %714 = vrot.lane.b32.xlu0 %v474, 4
      %v715 = vpop.permute.xlu0 %714
      %716 = vrot.lane.b32.xlu0 %v475, 4
      %v717 = vpop.permute.xlu0 %716
      %718 = vrot.lane.b32.xlu0 %v476, 4
      %v719 = vpop.permute.xlu0 %718
      %736 = vrot.lane.b32.xlu0 %v696, 8
      %v737 = vpop.permute.xlu0 %736
      %738 = vrot.lane.b32.xlu0 %v697, 8
      %v739 = vpop.permute.xlu0 %738
      %740 = vrot.lane.b32.xlu0 %v698, 8
      %v741 = vpop.permute.xlu0 %740
      %742 = vrot.lane.b32.xlu0 %v699, 8
      %v743 = vpop.permute.xlu0 %742
      %744 = vrot.lane.b32.xlu0 %v700, 8
      %v745 = vpop.permute.xlu0 %744
      %746 = vrot.lane.b32.xlu0 %v701, 8
      %v747 = vpop.permute.xlu0 %746
      %748 = vrot.lane.b32.xlu0 %v702, 8
      %v749 = vpop.permute.xlu0 %748
      %750 = vrot.lane.b32.xlu0 %v703, 8
      %v751 = vpop.permute.xlu0 %750
      %vm760 = vcmask 31744
      %v761 = vsel %vm760, %v647, %v705
      %v762 = vsel %vm760, %v648, %v707
      %v763 = vsel %vm760, %v649, %v709
      %v764 = vsel %vm760, %v650, %v711
      %v765 = vsel %vm760, %v651, %v713
      %v766 = vsel %vm760, %v652, %v715
      %v767 = vsel %vm760, %v653, %v717
      %v768 = vsel %vm760, %v654, %v719
      %vm769 = vcmask 64512
      %v770 = vsel %vm769, %v761, %v737
      %v771 = vsel %vm769, %v762, %v739
      %v772 = vsel %vm769, %v763, %v741
      %v773 = vsel %vm769, %v764, %v743
      %v774 = vsel %vm769, %v765, %v745
      %v775 = vsel %vm769, %v766, %v747
      %v776 = vsel %vm769, %v767, %v749
      %v777 = vsel %vm769, %v768, %v751
      %v778 = vpack.c.bf16 %v770, 0.0
      %v779 = vpack.c.bf16 %v772, %v771
      %v780 = vpack.c.bf16 %v774, %v773
      %v781 = vpack.c.bf16 %v776, %v775
      %v782 = vld [vmem:[%s4] sm:$0xf]
      %v783 = vld [vmem:[%s4 + $0x4] sm:$0x3]
      %v784 = vpack.c.bf16 %v771, %v770
      %v785 = vpack.c.bf16 %v773, %v772
      %v786 = vpack.c.bf16 %v775, %v774
      %v787 = vpack.c.bf16 %v777, %v776
      %s788 = scalar_lea.vmem %s4, 8
      %v789 = vld [vmem:[%s788] sm:$0xf]
      %v790 = vld [vmem:[%s788 + $0x4] sm:$0x3]
      %v793 = vunpack.c.l.b16 %v789
      %v794 = vunpack.c.l.b16 %v790
      %v795 = vpack.c.b16 %v794, %v793
      %vm796 = vcmask 97280
      %v798 = vsel %vm796, %v784, 0
      %v801 = vsel %vm796, %v785, 0
      %v804 = vsel %vm796, %v786, 0
      %v807 = vsel %vm796, %v787, 0
      %vm809 = vcmask 1045504
      %v811 = vsel %vm809, %v795, 0
      %813 = vmatprep.subr.bf16.mxu0 0
      %814 = vmatpush1.bf16.msra.mxu0 %v811
      %815 = vmatprep.subr.bf16.mxu0 0
      %816 = vmatpush1.bf16.msra.mxu0 0
      %817 = vmatprep.subr.bf16.mxu0 0
      %818 = vmatpush1.bf16.msra.mxu0 0
      %819 = vmatprep.subr.bf16.mxu0 0
      %820 = vmatpush1.bf16.msra.mxu0 0
      %821 = vmatprep.subr.bf16.mxu0 0
      %822 = vmatpush1.bf16.msra.mxu0 0
      %823 = vmatprep.subr.bf16.mxu0 0
      %824 = vmatpush1.bf16.msra.mxu0 0
      %825 = vmatprep.subr.bf16.mxu0 0
      %826 = vmatpush1.bf16.msra.mxu0 0
      %827 = vmatprep.subr.bf16.mxu0 0
      %828 = vmatpush1.bf16.msra.mxu0 0
      %829 = vmatprep.subr.bf16.mxu0 0
      %830 = vmatpush1.bf16.msra.mxu0 0
      %831 = vmatprep.subr.bf16.mxu0 0
      %832 = vmatpush1.bf16.msra.mxu0 0
      %833 = vmatprep.subr.bf16.mxu0 0
      %834 = vmatpush1.bf16.msra.mxu0 0
      %835 = vmatprep.subr.bf16.mxu0 0
      %836 = vmatpush1.bf16.msra.mxu0 0
      %837 = vmatprep.subr.bf16.mxu0 0
      %838 = vmatpush1.bf16.msra.mxu0 0
      %839 = vmatprep.subr.bf16.mxu0 0
      %840 = vmatpush1.bf16.msra.mxu0 0
      %841 = vmatprep.subr.bf16.mxu0 0
      %842 = vmatpush1.bf16.msra.mxu0 0
      %843 = vmatprep.subr.bf16.mxu0 0
      %844 = vmatpush1.bf16.msra.mxu0 0
      %845 = vmatprep.mubr.bf16.mxu0 0
      %846 = vmatmul.mubr.bf16.gmra.mrb[0].mxu0 %v798
      %v847 = vpop.f32.mrb[0].mxu0
      %v848 = vadd.f32 0.0, %v847
      %v849 = vpop.f32.mrb[0].mxu0
      %v850 = vpop.f32.mrb[0].mxu0
      %v851 = vadd.f32 0.0, %v850
      %v852 = vpop.f32.mrb[0].mxu0
      %853 = vmatprep.mubr.bf16.mxu0 0
      %854 = vmatmul.mubr.bf16.gmra.mrb[0].mxu0 %v801
      %v855 = vpop.f32.mrb[0].mxu0
      %v856 = vadd.f32 0.0, %v855
      %v857 = vpop.f32.mrb[0].mxu0
      %v858 = vpop.f32.mrb[0].mxu0
      %v859 = vadd.f32 0.0, %v858
      %v860 = vpop.f32.mrb[0].mxu0
      %861 = vmatprep.mubr.bf16.mxu0 0
      %862 = vmatmul.mubr.bf16.gmra.mrb[0].mxu0 %v804
      %v863 = vpop.f32.mrb[0].mxu0
      %v864 = vadd.f32 0.0, %v863
      %v865 = vpop.f32.mrb[0].mxu0
      %v866 = vpop.f32.mrb[0].mxu0
      %v867 = vadd.f32 0.0, %v866
      %v868 = vpop.f32.mrb[0].mxu0
      %869 = vmatprep.mubr.bf16.mxu0 0
      %870 = vmatmul.mubr.bf16.gmra.mrb[0].mxu0 %v807
      %v871 = vpop.f32.mrb[0].mxu0
      %v872 = vadd.f32 0.0, %v871
      %v873 = vpop.f32.mrb[0].mxu0
      %v874 = vpop.f32.mrb[0].mxu0
      %v875 = vadd.f32 0.0, %v874
      %v876 = vpop.f32.mrb[0].mxu0
      %877 = vdwg.mxu0
      %v880 = vunpack.c.l.b16 %v782
      %v881 = vunpack.c.l.b16 %v783
      %v882 = vpack.c.b16 %v881, %v880
      %v884 = vsel %vm796, %v778, 0
      %v887 = vsel %vm796, %v779, 0
      %v890 = vsel %vm796, %v780, 0
      %v893 = vsel %vm796, %v781, 0
      %v896 = vsel %vm809, %v882, 0
      %898 = vmatprep.subr.bf16.mxu0 0
      %899 = vmatpush1.bf16.msra.mxu0 %v896
      %900 = vmatprep.subr.bf16.mxu0 0
      %901 = vmatpush1.bf16.msra.mxu0 0
      %902 = vmatprep.subr.bf16.mxu0 0
      %903 = vmatpush1.bf16.msra.mxu0 0
      %904 = vmatprep.subr.bf16.mxu0 0
      %905 = vmatpush1.bf16.msra.mxu0 0
      %906 = vmatprep.subr.bf16.mxu0 0
      %907 = vmatpush1.bf16.msra.mxu0 0
      %908 = vmatprep.subr.bf16.mxu0 0
      %909 = vmatpush1.bf16.msra.mxu0 0
      %910 = vmatprep.subr.bf16.mxu0 0
      %911 = vmatpush1.bf16.msra.mxu0 0
      %912 = vmatprep.subr.bf16.mxu0 0
      %913 = vmatpush1.bf16.msra.mxu0 0
      %914 = vmatprep.subr.bf16.mxu0 0
      %915 = vmatpush1.bf16.msra.mxu0 0
      %916 = vmatprep.subr.bf16.mxu0 0
      %917 = vmatpush1.bf16.msra.mxu0 0
      %918 = vmatprep.subr.bf16.mxu0 0
      %919 = vmatpush1.bf16.msra.mxu0 0
      %920 = vmatprep.subr.bf16.mxu0 0
      %921 = vmatpush1.bf16.msra.mxu0 0
      %922 = vmatprep.subr.bf16.mxu0 0
      %923 = vmatpush1.bf16.msra.mxu0 0
      %924 = vmatprep.subr.bf16.mxu0 0
      %925 = vmatpush1.bf16.msra.mxu0 0
      %926 = vmatprep.subr.bf16.mxu0 0
      %927 = vmatpush1.bf16.msra.mxu0 0
      %928 = vmatprep.subr.bf16.mxu0 0
      %929 = vmatpush1.bf16.msra.mxu0 0
      %930 = vmatprep.mubr.bf16.mxu0 0
      %931 = vmatmul.mubr.bf16.gmra.mrb[0].mxu0 %v884
      %v932 = vpop.f32.mrb[0].mxu0
      %v933 = vadd.f32 %v848, %v932
      %v934 = vpop.f32.mrb[0].mxu0
      %v935 = vpop.f32.mrb[0].mxu0
      %v936 = vadd.f32 %v851, %v935
      %v937 = vpop.f32.mrb[0].mxu0
      %938 = vmatprep.mubr.bf16.mxu0 0
      %939 = vmatmul.mubr.bf16.gmra.mrb[0].mxu0 %v887
      %v940 = vpop.f32.mrb[0].mxu0
      %v941 = vadd.f32 %v856, %v940
      %v942 = vpop.f32.mrb[0].mxu0
      %v943 = vpop.f32.mrb[0].mxu0
      %v944 = vadd.f32 %v859, %v943
      %v945 = vpop.f32.mrb[0].mxu0
      %946 = vmatprep.mubr.bf16.mxu0 0
      %947 = vmatmul.mubr.bf16.gmra.mrb[0].mxu0 %v890
      %v948 = vpop.f32.mrb[0].mxu0
      %v949 = vadd.f32 %v864, %v948
      %v950 = vpop.f32.mrb[0].mxu0
      %v951 = vpop.f32.mrb[0].mxu0
      %v952 = vadd.f32 %v867, %v951
      %v953 = vpop.f32.mrb[0].mxu0
      %954 = vmatprep.mubr.bf16.mxu0 0
      %955 = vmatmul.mubr.bf16.gmra.mrb[0].mxu0 %v893
      %v956 = vpop.f32.mrb[0].mxu0
      %v957 = vadd.f32 %v872, %v956
      %v958 = vpop.f32.mrb[0].mxu0
      %v959 = vpop.f32.mrb[0].mxu0
      %v960 = vadd.f32 %v875, %v959
      %v961 = vpop.f32.mrb[0].mxu0
      %962 = vdwg.mxu0
      %v963 = vpack.c.bf16 0.0, %v777
      %s964 = scalar_lea.vmem %s4, 16
      %v965 = vld [vmem:[%s964] sm:$0xf]
      %v966 = vld [vmem:[%s964 + $0x4] sm:$0x3]
      %v969 = vunpack.c.l.b16 %v965
      %v970 = vunpack.c.l.b16 %v966
      %v971 = vpack.c.b16 %v970, %v969
      %v973 = vsel %vm796, %v963, 0
      %v976 = vsel %vm809, %v971, 0
      %978 = vmatprep.subr.bf16.mxu0 0
      %979 = vmatpush1.bf16.msra.mxu0 %v976
      %980 = vmatprep.subr.bf16.mxu0 0
      %981 = vmatpush1.bf16.msra.mxu0 0
      %982 = vmatprep.subr.bf16.mxu0 0
      %983 = vmatpush1.bf16.msra.mxu0 0
      %984 = vmatprep.subr.bf16.mxu0 0
      %985 = vmatpush1.bf16.msra.mxu0 0
      %986 = vmatprep.subr.bf16.mxu0 0
      %987 = vmatpush1.bf16.msra.mxu0 0
      %988 = vmatprep.subr.bf16.mxu0 0
      %989 = vmatpush1.bf16.msra.mxu0 0
      %990 = vmatprep.subr.bf16.mxu0 0
      %991 = vmatpush1.bf16.msra.mxu0 0
      %992 = vmatprep.subr.bf16.mxu0 0
      %993 = vmatpush1.bf16.msra.mxu0 0
      %994 = vmatprep.subr.bf16.mxu0 0
      %995 = vmatpush1.bf16.msra.mxu0 0
      %996 = vmatprep.subr.bf16.mxu0 0
      %997 = vmatpush1.bf16.msra.mxu0 0
      %998 = vmatprep.subr.bf16.mxu0 0
      %999 = vmatpush1.bf16.msra.mxu0 0
      %1000 = vmatprep.subr.bf16.mxu0 0
      %1001 = vmatpush1.bf16.msra.mxu0 0
      %1002 = vmatprep.subr.bf16.mxu0 0
      %1003 = vmatpush1.bf16.msra.mxu0 0
      %1004 = vmatprep.subr.bf16.mxu0 0
      %1005 = vmatpush1.bf16.msra.mxu0 0
      %1006 = vmatprep.subr.bf16.mxu0 0
      %1007 = vmatpush1.bf16.msra.mxu0 0
      %1008 = vmatprep.subr.bf16.mxu0 0
      %1009 = vmatpush1.bf16.msra.mxu0 0
      %1010 = vmatprep.mubr.bf16.mxu0 0
      %1011 = vmatmul.mubr.bf16.gmra.mrb[0].mxu0 %v887
      %v1012 = vpop.f32.mrb[0].mxu0
      %v1013 = vadd.f32 0.0, %v1012
      %v1014 = vpop.f32.mrb[0].mxu0
      %v1015 = vpop.f32.mrb[0].mxu0
      %v1016 = vadd.f32 0.0, %v1015
      %v1017 = vpop.f32.mrb[0].mxu0
      %1018 = vmatprep.mubr.bf16.mxu0 0
      %1019 = vmatmul.mubr.bf16.gmra.mrb[0].mxu0 %v890
      %v1020 = vpop.f32.mrb[0].mxu0
      %v1021 = vadd.f32 0.0, %v1020
      %v1022 = vpop.f32.mrb[0].mxu0
      %v1023 = vpop.f32.mrb[0].mxu0
      %v1024 = vadd.f32 0.0, %v1023
      %v1025 = vpop.f32.mrb[0].mxu0
      %1026 = vmatprep.mubr.bf16.mxu0 0
      %1027 = vmatmul.mubr.bf16.gmra.mrb[0].mxu0 %v893
      %v1028 = vpop.f32.mrb[0].mxu0
      %v1029 = vadd.f32 0.0, %v1028
      %v1030 = vpop.f32.mrb[0].mxu0
      %v1031 = vpop.f32.mrb[0].mxu0
      %v1032 = vadd.f32 0.0, %v1031
      %v1033 = vpop.f32.mrb[0].mxu0
      %1034 = vmatprep.mubr.bf16.mxu0 0
      %1035 = vmatmul.mubr.bf16.gmra.mrb[0].mxu0 %v973
      %v1036 = vpop.f32.mrb[0].mxu0
      %v1037 = vadd.f32 0.0, %v1036
      %v1038 = vpop.f32.mrb[0].mxu0
      %v1039 = vpop.f32.mrb[0].mxu0
      %v1040 = vadd.f32 0.0, %v1039
      %v1041 = vpop.f32.mrb[0].mxu0
      %1042 = vdwg.mxu0
      %v1043 = vadd.f32 %v933, %v1013
      %v1044 = vadd.f32 %v936, %v1016
      %v1045 = vadd.f32 %v941, %v1021
      %v1046 = vadd.f32 %v944, %v1024
      %v1047 = vadd.f32 %v949, %v1029
      %v1048 = vadd.f32 %v952, %v1032
      %v1049 = vadd.f32 %v957, %v1037
      %v1050 = vadd.f32 %v960, %v1040
      %v1051 = vld [vmem:[%s8] sm:$0x1]
      %v1052 = vld [vmem:[%s8 + $0x1] sm:$0x1]
      %v1053 = vsel %vm760, %v1043, 0.0
      %v1054 = vsel %vm760, %v1044, 0.0
      %v1055 = vadd.f32 %v1053, %v1054
      %v1056 = vsel %vm760, %v1045, 0.0
      %v1057 = vadd.f32 %v1055, %v1056
      %v1058 = vsel %vm760, %v1046, 0.0
      %v1059 = vadd.f32 %v1057, %v1058
      %v1060 = vsel %vm760, %v1047, 0.0
      %v1061 = vadd.f32 %v1059, %v1060
      %v1062 = vsel %vm760, %v1048, 0.0
      %v1063 = vadd.f32 %v1061, %v1062
      %v1064 = vsel %vm760, %v1049, 0.0
      %v1065 = vadd.f32 %v1063, %v1064
      %v1066 = vsel %vm760, %v1050, 0.0
      %v1067 = vadd.f32 %v1065, %v1066
      %1068 = vadd.xlane.f32.xlu0 %v1067
      %v1069 = vpop.xlane.xlu0 %1068
      %v1070 = vrot.slane %v1069, 4
      %v1071 = vadd.f32 %v1069, %v1070
      %v1072 = vrot.slane %v1071, 2
      %v1073 = vadd.f32 %v1071, %v1072
      %v1074 = vrot.slane %v1073, 1
      %v1075 = vadd.f32 %v1073, %v1074
      %s1076 = vtos %v1075
      %s1077 = smul.f32 %s1076, 0.00390625
      %v1078 = vmul.f32 %v1043, %v1043
      %v1079 = vmul.f32 %v1044, %v1044
      %v1080 = vmul.f32 %v1045, %v1045
      %v1081 = vmul.f32 %v1046, %v1046
      %v1082 = vmul.f32 %v1047, %v1047
      %v1083 = vmul.f32 %v1048, %v1048
      %v1084 = vmul.f32 %v1049, %v1049
      %v1085 = vmul.f32 %v1050, %v1050
      %v1086 = vsel %vm760, %v1078, 0.0
      %v1087 = vsel %vm760, %v1079, 0.0
      %v1088 = vadd.f32 %v1086, %v1087
      %v1089 = vsel %vm760, %v1080, 0.0
      %v1090 = vadd.f32 %v1088, %v1089
      %v1091 = vsel %vm760, %v1081, 0.0
      %v1092 = vadd.f32 %v1090, %v1091
      %v1093 = vsel %vm760, %v1082, 0.0
      %v1094 = vadd.f32 %v1092, %v1093
      %v1095 = vsel %vm760, %v1083, 0.0
      %v1096 = vadd.f32 %v1094, %v1095
      %v1097 = vsel %vm760, %v1084, 0.0
      %v1098 = vadd.f32 %v1096, %v1097
      %v1099 = vsel %vm760, %v1085, 0.0
      %v1100 = vadd.f32 %v1098, %v1099
      %1101 = vadd.xlane.f32.xlu0 %v1100
      %v1102 = vpop.xlane.xlu0 %1101
      %v1103 = vrot.slane %v1102, 4
      %v1104 = vadd.f32 %v1102, %v1103
      %v1105 = vrot.slane %v1104, 2
      %v1106 = vadd.f32 %v1104, %v1105
      %v1107 = vrot.slane %v1106, 1
      %v1108 = vadd.f32 %v1106, %v1107
      %s1109 = vtos %v1108
      %s1110 = smul.f32 %s1109, 0.00390625
      %s1111 = smul.f32 %s1077, %s1077
      %s1112 = ssub.f32 %s1110, %s1111
      %s1113 = smax.f32 %s1112, 0.0
      %v1114 = vstv %s1077
      %v1115 = vsub.f32 %v1043, %v1114
      %v1116 = vsub.f32 %v1044, %v1114
      %v1117 = vsub.f32 %v1045, %v1114
      %v1118 = vsub.f32 %v1046, %v1114
      %v1119 = vsub.f32 %v1047, %v1114
      %v1120 = vsub.f32 %v1048, %v1114
      %v1121 = vsub.f32 %v1049, %v1114
      %v1122 = vsub.f32 %v1050, %v1114
      %s1123 = sadd.f32 %s1113, 1e-05
      %v1124 = vstv %s1123
      %v1125 = vrsqrt.pop %v1124
      %s1126 = vtos %v1125
      %v1127 = vstv %s1126
      %v1128 = vmul.f32 %v1115, %v1127
      %v1129 = vmul.f32 %v1116, %v1127
      %v1130 = vmul.f32 %v1117, %v1127
      %v1131 = vmul.f32 %v1118, %v1127
      %v1132 = vmul.f32 %v1119, %v1127
      %v1133 = vmul.f32 %v1120, %v1127
      %v1134 = vmul.f32 %v1121, %v1127
      %v1135 = vmul.f32 %v1122, %v1127
      %v1136 = vlaneseq
      %v1137 = vshrl.u32 %v1136, 7
      %v1138 = vsub.s32 0, %v1137
      %v1139 = vrot.slane %v1051, %v1138
      %v1140 = vmul.f32 %v1128, %v1139
      %v1141 = vmul.f32 %v1129, %v1139
      %v1142 = vmul.f32 %v1130, %v1139
      %v1143 = vmul.f32 %v1131, %v1139
      %v1144 = vmul.f32 %v1132, %v1139
      %v1145 = vmul.f32 %v1133, %v1139
      %v1146 = vmul.f32 %v1134, %v1139
      %v1147 = vmul.f32 %v1135, %v1139
      %v1148 = vlaneseq
      %v1149 = vshrl.u32 %v1148, 7
      %v1150 = vsub.s32 0, %v1149
      %v1151 = vrot.slane %v1052, %v1150
      %v1152 = vadd.f32 %v1140, %v1151
      %v1153 = vadd.f32 %v1141, %v1151
      %v1154 = vadd.f32 %v1142, %v1151
      %v1155 = vadd.f32 %v1143, %v1151
      %v1156 = vadd.f32 %v1144, %v1151
      %v1157 = vadd.f32 %v1145, %v1151
      %v1158 = vadd.f32 %v1146, %v1151
      %v1159 = vadd.f32 %v1147, %v1151
      %v1160 = vmul.f32 %v1152, 0.5
      %v1161 = vmul.f32 %v1153, 0.5
      %v1162 = vmul.f32 %v1154, 0.5
      %v1163 = vmul.f32 %v1155, 0.5
      %v1164 = vmul.f32 %v1156, 0.5
      %v1165 = vmul.f32 %v1157, 0.5
      %v1166 = vmul.f32 %v1158, 0.5
      %v1167 = vmul.f32 %v1159, 0.5
      %v1168 = vmul.f32 %v1152, 0.70710677
      %v1169 = vmul.f32 %v1153, 0.70710677
      %v1170 = vmul.f32 %v1154, 0.70710677
      %v1171 = vmul.f32 %v1155, 0.70710677
      %v1172 = vmul.f32 %v1156, 0.70710677
      %v1173 = vmul.f32 %v1157, 0.70710677
      %v1174 = vmul.f32 %v1158, 0.70710677
      %v1175 = vmul.f32 %v1159, 0.70710677
      %vm1176 = vcmp.ge.f32.partialorder %v1168, 0.0
      %vm1177 = vcmp.ge.f32.partialorder %v1169, 0.0
      %vm1178 = vcmp.ge.f32.partialorder %v1170, 0.0
      %vm1179 = vcmp.ge.f32.partialorder %v1171, 0.0
      %vm1180 = vcmp.ge.f32.partialorder %v1172, 0.0
      %vm1181 = vcmp.ge.f32.partialorder %v1173, 0.0
      %vm1182 = vcmp.ge.f32.partialorder %v1174, 0.0
      %vm1183 = vcmp.ge.f32.partialorder %v1175, 0.0
      %v1184 = vsel %vm1176, 1.0, -1.0
      %v1185 = vsel %vm1177, 1.0, -1.0
      %v1186 = vsel %vm1178, 1.0, -1.0
      %v1187 = vsel %vm1179, 1.0, -1.0
      %v1188 = vsel %vm1180, 1.0, -1.0
      %v1189 = vsel %vm1181, 1.0, -1.0
      %v1190 = vsel %vm1182, 1.0, -1.0
      %v1191 = vsel %vm1183, 1.0, -1.0
      %v1192 = vand.u32 2147483647, %v1168
      %v1193 = vand.u32 2147483647, %v1169
      %v1194 = vand.u32 2147483647, %v1170
      %v1195 = vand.u32 2147483647, %v1171
      %v1196 = vand.u32 2147483647, %v1172
      %v1197 = vand.u32 2147483647, %v1173
      %v1198 = vand.u32 2147483647, %v1174
      %v1199 = vand.u32 2147483647, %v1175
      %v1200 = vmul.f32 %v1192, 0.3275911
      %v1201 = vmul.f32 %v1193, 0.3275911
      %v1202 = vmul.f32 %v1194, 0.3275911
      %v1203 = vmul.f32 %v1195, 0.3275911
      %v1204 = vmul.f32 %v1196, 0.3275911
      %v1205 = vmul.f32 %v1197, 0.3275911
      %v1206 = vmul.f32 %v1198, 0.3275911
      %v1207 = vmul.f32 %v1199, 0.3275911
      %v1208 = vadd.f32 %v1200, 1.0
      %v1209 = vadd.f32 %v1201, 1.0
      %v1210 = vadd.f32 %v1202, 1.0
      %v1211 = vadd.f32 %v1203, 1.0
      %v1212 = vadd.f32 %v1204, 1.0
      %v1213 = vadd.f32 %v1205, 1.0
      %v1214 = vadd.f32 %v1206, 1.0
      %v1215 = vadd.f32 %v1207, 1.0
      %v1216 = vrcp.pop %v1208
      %v1217 = vmul.f32 1.0, %v1216
      %v1218 = vrcp.pop %v1209
      %v1219 = vmul.f32 1.0, %v1218
      %v1220 = vrcp.pop %v1210
      %v1221 = vmul.f32 1.0, %v1220
      %v1222 = vrcp.pop %v1211
      %v1223 = vmul.f32 1.0, %v1222
      %v1224 = vrcp.pop %v1212
      %v1225 = vmul.f32 1.0, %v1224
      %v1226 = vrcp.pop %v1213
      %v1227 = vmul.f32 1.0, %v1226
      %v1228 = vrcp.pop %v1214
      %v1229 = vmul.f32 1.0, %v1228
      %v1230 = vrcp.pop %v1215
      %v1231 = vmul.f32 1.0, %v1230
      %v1232 = vmul.f32 %v1217, 1.0614054
      %v1233 = vmul.f32 %v1219, 1.0614054
      %v1234 = vmul.f32 %v1221, 1.0614054
      %v1235 = vmul.f32 %v1223, 1.0614054
      %v1236 = vmul.f32 %v1225, 1.0614054
      %v1237 = vmul.f32 %v1227, 1.0614054
      %v1238 = vmul.f32 %v1229, 1.0614054
      %v1239 = vmul.f32 %v1231, 1.0614054
      %v1240 = vadd.f32 %v1232, -1.4531521
      %v1241 = vadd.f32 %v1233, -1.4531521
      %v1242 = vadd.f32 %v1234, -1.4531521
      %v1243 = vadd.f32 %v1235, -1.4531521
      %v1244 = vadd.f32 %v1236, -1.4531521
      %v1245 = vadd.f32 %v1237, -1.4531521
      %v1246 = vadd.f32 %v1238, -1.4531521
      %v1247 = vadd.f32 %v1239, -1.4531521
      %v1248 = vmul.f32 %v1240, %v1217
      %v1249 = vmul.f32 %v1241, %v1219
      %v1250 = vmul.f32 %v1242, %v1221
      %v1251 = vmul.f32 %v1243, %v1223
      %v1252 = vmul.f32 %v1244, %v1225
      %v1253 = vmul.f32 %v1245, %v1227
      %v1254 = vmul.f32 %v1246, %v1229
      %v1255 = vmul.f32 %v1247, %v1231
      %v1256 = vadd.f32 %v1248, 1.4214138
      %v1257 = vadd.f32 %v1249, 1.4214138
      %v1258 = vadd.f32 %v1250, 1.4214138
      %v1259 = vadd.f32 %v1251, 1.4214138
      %v1260 = vadd.f32 %v1252, 1.4214138
      %v1261 = vadd.f32 %v1253, 1.4214138
      %v1262 = vadd.f32 %v1254, 1.4214138
      %v1263 = vadd.f32 %v1255, 1.4214138
      %v1264 = vmul.f32 %v1256, %v1217
      %v1265 = vmul.f32 %v1257, %v1219
      %v1266 = vmul.f32 %v1258, %v1221
      %v1267 = vmul.f32 %v1259, %v1223
      %v1268 = vmul.f32 %v1260, %v1225
      %v1269 = vmul.f32 %v1261, %v1227
      %v1270 = vmul.f32 %v1262, %v1229
      %v1271 = vmul.f32 %v1263, %v1231
      %v1272 = vadd.f32 %v1264, -0.28449672
      %v1273 = vadd.f32 %v1265, -0.28449672
      %v1274 = vadd.f32 %v1266, -0.28449672
      %v1275 = vadd.f32 %v1267, -0.28449672
      %v1276 = vadd.f32 %v1268, -0.28449672
      %v1277 = vadd.f32 %v1269, -0.28449672
      %v1278 = vadd.f32 %v1270, -0.28449672
      %v1279 = vadd.f32 %v1271, -0.28449672
      %v1280 = vmul.f32 %v1272, %v1217
      %v1281 = vmul.f32 %v1273, %v1219
      %v1282 = vmul.f32 %v1274, %v1221
      %v1283 = vmul.f32 %v1275, %v1223
      %v1284 = vmul.f32 %v1276, %v1225
      %v1285 = vmul.f32 %v1277, %v1227
      %v1286 = vmul.f32 %v1278, %v1229
      %v1287 = vmul.f32 %v1279, %v1231
      %v1288 = vadd.f32 %v1280, 0.2548296
      %v1289 = vadd.f32 %v1281, 0.2548296
      %v1290 = vadd.f32 %v1282, 0.2548296
      %v1291 = vadd.f32 %v1283, 0.2548296
      %v1292 = vadd.f32 %v1284, 0.2548296
      %v1293 = vadd.f32 %v1285, 0.2548296
      %v1294 = vadd.f32 %v1286, 0.2548296
      %v1295 = vadd.f32 %v1287, 0.2548296
      %v1296 = vmul.f32 %v1288, %v1217
      %v1297 = vmul.f32 %v1289, %v1219
      %v1298 = vmul.f32 %v1290, %v1221
      %v1299 = vmul.f32 %v1291, %v1223
      %v1300 = vmul.f32 %v1292, %v1225
      %v1301 = vmul.f32 %v1293, %v1227
      %v1302 = vmul.f32 %v1294, %v1229
      %v1303 = vmul.f32 %v1295, %v1231
      %v1304 = vsub.f32 0.0, %v1192
      %v1305 = vsub.f32 0.0, %v1193
      %v1306 = vsub.f32 0.0, %v1194
      %v1307 = vsub.f32 0.0, %v1195
      %v1308 = vsub.f32 0.0, %v1196
      %v1309 = vsub.f32 0.0, %v1197
      %v1310 = vsub.f32 0.0, %v1198
      %v1311 = vsub.f32 0.0, %v1199
      %v1312 = vmul.f32 %v1304, %v1192
      %v1313 = vmul.f32 %v1305, %v1193
      %v1314 = vmul.f32 %v1306, %v1194
      %v1315 = vmul.f32 %v1307, %v1195
      %v1316 = vmul.f32 %v1308, %v1196
      %v1317 = vmul.f32 %v1309, %v1197
      %v1318 = vmul.f32 %v1310, %v1198
      %v1319 = vmul.f32 %v1311, %v1199
      %v1320 = vmul.f32 %v1312, 1.442695
      %v1321 = vpow.pop %v1320
      %v1322 = vmul.f32 %v1313, 1.442695
      %v1323 = vpow.pop %v1322
      %v1324 = vmul.f32 %v1314, 1.442695
      %v1325 = vpow.pop %v1324
      %v1326 = vmul.f32 %v1315, 1.442695
      %v1327 = vpow.pop %v1326
      %v1328 = vmul.f32 %v1316, 1.442695
      %v1329 = vpow.pop %v1328
      %v1330 = vmul.f32 %v1317, 1.442695
      %v1331 = vpow.pop %v1330
      %v1332 = vmul.f32 %v1318, 1.442695
      %v1333 = vpow.pop %v1332
      %v1334 = vmul.f32 %v1319, 1.442695
      %v1335 = vpow.pop %v1334
      %v1336 = vmul.f32 %v1296, %v1321
      %v1337 = vmul.f32 %v1297, %v1323
      %v1338 = vmul.f32 %v1298, %v1325
      %v1339 = vmul.f32 %v1299, %v1327
      %v1340 = vmul.f32 %v1300, %v1329
      %v1341 = vmul.f32 %v1301, %v1331
      %v1342 = vmul.f32 %v1302, %v1333
      %v1343 = vmul.f32 %v1303, %v1335
      %v1344 = vsub.f32 1.0, %v1336
      %v1345 = vsub.f32 1.0, %v1337
      %v1346 = vsub.f32 1.0, %v1338
      %v1347 = vsub.f32 1.0, %v1339
      %v1348 = vsub.f32 1.0, %v1340
      %v1349 = vsub.f32 1.0, %v1341
      %v1350 = vsub.f32 1.0, %v1342
      %v1351 = vsub.f32 1.0, %v1343
      %v1352 = vmul.f32 %v1184, %v1344
      %v1353 = vmul.f32 %v1185, %v1345
      %v1354 = vmul.f32 %v1186, %v1346
      %v1355 = vmul.f32 %v1187, %v1347
      %v1356 = vmul.f32 %v1188, %v1348
      %v1357 = vmul.f32 %v1189, %v1349
      %v1358 = vmul.f32 %v1190, %v1350
      %v1359 = vmul.f32 %v1191, %v1351
      %v1360 = vadd.f32 %v1352, 1.0
      %v1361 = vadd.f32 %v1353, 1.0
      %v1362 = vadd.f32 %v1354, 1.0
      %v1363 = vadd.f32 %v1355, 1.0
      %v1364 = vadd.f32 %v1356, 1.0
      %v1365 = vadd.f32 %v1357, 1.0
      %v1366 = vadd.f32 %v1358, 1.0
      %v1367 = vadd.f32 %v1359, 1.0
      %v1368 = vmul.f32 %v1160, %v1360
      %v1369 = vmul.f32 %v1161, %v1361
      %v1370 = vmul.f32 %v1162, %v1362
      %v1371 = vmul.f32 %v1163, %v1363
      %v1372 = vmul.f32 %v1164, %v1364
      %v1373 = vmul.f32 %v1165, %v1365
      %v1374 = vmul.f32 %v1166, %v1366
      %v1375 = vmul.f32 %v1167, %v1367
      %v1384 = vrot.slane %v1368, 7
      %v1385 = vrot.slane %v1369, 7
      %v1386 = vsel %vm606, %v1384, %v1385
      %v1387 = vrot.slane %v1370, 7
      %v1388 = vsel %vm606, %v1385, %v1387
      %v1389 = vrot.slane %v1371, 7
      %v1390 = vsel %vm606, %v1387, %v1389
      %v1391 = vrot.slane %v1372, 7
      %v1392 = vsel %vm606, %v1389, %v1391
      %v1393 = vrot.slane %v1373, 7
      %v1394 = vsel %vm606, %v1391, %v1393
      %v1395 = vrot.slane %v1374, 7
      %v1396 = vsel %vm606, %v1393, %v1395
      %v1397 = vrot.slane %v1375, 7
      %v1398 = vsel %vm606, %v1395, %v1397
      %v1407 = vsel %vm606, 0.0, %v1384
      %v1408 = vsel %vm639, 0.0, %v1407
      %v1409 = vsel %vm640, 0.0, %v1386
      %v1410 = vsel %vm641, 0.0, %v1388
      %v1411 = vsel %vm642, 0.0, %v1390
      %v1412 = vsel %vm643, 0.0, %v1392
      %v1413 = vsel %vm644, 0.0, %v1394
      %v1414 = vsel %vm645, 0.0, %v1396
      %v1415 = vsel %vm646, 0.0, %v1398
      %v1416 = vrot.slane %v1368, 1
      %v1417 = vrot.slane %v1369, 1
      %v1418 = vsel %vm655, %v1416, %v1417
      %v1419 = vrot.slane %v1370, 1
      %v1420 = vsel %vm655, %v1417, %v1419
      %v1421 = vrot.slane %v1371, 1
      %v1422 = vsel %vm655, %v1419, %v1421
      %v1423 = vrot.slane %v1372, 1
      %v1424 = vsel %vm655, %v1421, %v1423
      %v1425 = vrot.slane %v1373, 1
      %v1426 = vsel %vm655, %v1423, %v1425
      %v1427 = vrot.slane %v1374, 1
      %v1428 = vsel %vm655, %v1425, %v1427
      %v1429 = vrot.slane %v1375, 1
      %v1430 = vsel %vm655, %v1427, %v1429
      %v1439 = vsel %vm655, %v1429, 0.0
      %v1440 = vsel %vm688, 0.0, %v1418
      %v1441 = vsel %vm689, 0.0, %v1420
      %v1442 = vsel %vm690, 0.0, %v1422
      %v1443 = vsel %vm691, 0.0, %v1424
      %v1444 = vsel %vm692, 0.0, %v1426
      %v1445 = vsel %vm693, 0.0, %v1428
      %v1446 = vsel %vm694, 0.0, %v1430
      %v1447 = vsel %vm695, 0.0, %v1439
      %1448 = vrot.lane.b32.xlu0 %v1368, 4
      %v1449 = vpop.permute.xlu0 %1448
      %1450 = vrot.lane.b32.xlu0 %v1369, 4
      %v1451 = vpop.permute.xlu0 %1450
      %1452 = vrot.lane.b32.xlu0 %v1370, 4
      %v1453 = vpop.permute.xlu0 %1452
      %1454 = vrot.lane.b32.xlu0 %v1371, 4
      %v1455 = vpop.permute.xlu0 %1454
      %1456 = vrot.lane.b32.xlu0 %v1372, 4
      %v1457 = vpop.permute.xlu0 %1456
      %1458 = vrot.lane.b32.xlu0 %v1373, 4
      %v1459 = vpop.permute.xlu0 %1458
      %1460 = vrot.lane.b32.xlu0 %v1374, 4
      %v1461 = vpop.permute.xlu0 %1460
      %1462 = vrot.lane.b32.xlu0 %v1375, 4
      %v1463 = vpop.permute.xlu0 %1462
      %1480 = vrot.lane.b32.xlu0 %v1440, 8
      %v1481 = vpop.permute.xlu0 %1480
      %1482 = vrot.lane.b32.xlu0 %v1441, 8
      %v1483 = vpop.permute.xlu0 %1482
      %1484 = vrot.lane.b32.xlu0 %v1442, 8
      %v1485 = vpop.permute.xlu0 %1484
      %1486 = vrot.lane.b32.xlu0 %v1443, 8
      %v1487 = vpop.permute.xlu0 %1486
      %1488 = vrot.lane.b32.xlu0 %v1444, 8
      %v1489 = vpop.permute.xlu0 %1488
      %1490 = vrot.lane.b32.xlu0 %v1445, 8
      %v1491 = vpop.permute.xlu0 %1490
      %1492 = vrot.lane.b32.xlu0 %v1446, 8
      %v1493 = vpop.permute.xlu0 %1492
      %1494 = vrot.lane.b32.xlu0 %v1447, 8
      %v1495 = vpop.permute.xlu0 %1494
      %v1504 = vsel %vm760, %v1408, %v1449
      %v1505 = vsel %vm760, %v1409, %v1451
      %v1506 = vsel %vm760, %v1410, %v1453
      %v1507 = vsel %vm760, %v1411, %v1455
      %v1508 = vsel %vm760, %v1412, %v1457
      %v1509 = vsel %vm760, %v1413, %v1459
      %v1510 = vsel %vm760, %v1414, %v1461
      %v1511 = vsel %vm760, %v1415, %v1463
      %v1512 = vsel %vm769, %v1504, %v1481
      %v1513 = vsel %vm769, %v1505, %v1483
      %v1514 = vsel %vm769, %v1506, %v1485
      %v1515 = vsel %vm769, %v1507, %v1487
      %v1516 = vsel %vm769, %v1508, %v1489
      %v1517 = vsel %vm769, %v1509, %v1491
      %v1518 = vsel %vm769, %v1510, %v1493
      %v1519 = vsel %vm769, %v1511, %v1495
      %v1520 = vpack.c.bf16 %v1512, 0.0
      %v1521 = vpack.c.bf16 %v1514, %v1513
      %v1522 = vpack.c.bf16 %v1516, %v1515
      %v1523 = vpack.c.bf16 %v1518, %v1517
      %v1524 = vld [vmem:[%s5] sm:$0xf]
      %v1525 = vld [vmem:[%s5 + $0x4] sm:$0x3]
      %v1526 = vpack.c.bf16 %v1513, %v1512
      %v1527 = vpack.c.bf16 %v1515, %v1514
      %v1528 = vpack.c.bf16 %v1517, %v1516
      %v1529 = vpack.c.bf16 %v1519, %v1518
      %s1530 = scalar_lea.vmem %s5, 8
      %v1531 = vld [vmem:[%s1530] sm:$0xf]
      %v1532 = vld [vmem:[%s1530 + $0x4] sm:$0x3]
      %v1535 = vunpack.c.l.b16 %v1531
      %v1536 = vunpack.c.l.b16 %v1532
      %v1537 = vpack.c.b16 %v1536, %v1535
      %v1539 = vsel %vm796, %v1526, 0
      %v1542 = vsel %vm796, %v1527, 0
      %v1545 = vsel %vm796, %v1528, 0
      %v1548 = vsel %vm796, %v1529, 0
      %v1551 = vsel %vm809, %v1537, 0
      %1553 = vmatprep.subr.bf16.mxu0 0
      %1554 = vmatpush1.bf16.msra.mxu0 %v1551
      %1555 = vmatprep.subr.bf16.mxu0 0
      %1556 = vmatpush1.bf16.msra.mxu0 0
      %1557 = vmatprep.subr.bf16.mxu0 0
      %1558 = vmatpush1.bf16.msra.mxu0 0
      %1559 = vmatprep.subr.bf16.mxu0 0
      %1560 = vmatpush1.bf16.msra.mxu0 0
      %1561 = vmatprep.subr.bf16.mxu0 0
      %1562 = vmatpush1.bf16.msra.mxu0 0
      %1563 = vmatprep.subr.bf16.mxu0 0
      %1564 = vmatpush1.bf16.msra.mxu0 0
      %1565 = vmatprep.subr.bf16.mxu0 0
      %1566 = vmatpush1.bf16.msra.mxu0 0
      %1567 = vmatprep.subr.bf16.mxu0 0
      %1568 = vmatpush1.bf16.msra.mxu0 0
      %1569 = vmatprep.subr.bf16.mxu0 0
      %1570 = vmatpush1.bf16.msra.mxu0 0
      %1571 = vmatprep.subr.bf16.mxu0 0
      %1572 = vmatpush1.bf16.msra.mxu0 0
      %1573 = vmatprep.subr.bf16.mxu0 0
      %1574 = vmatpush1.bf16.msra.mxu0 0
      %1575 = vmatprep.subr.bf16.mxu0 0
      %1576 = vmatpush1.bf16.msra.mxu0 0
      %1577 = vmatprep.subr.bf16.mxu0 0
      %1578 = vmatpush1.bf16.msra.mxu0 0
      %1579 = vmatprep.subr.bf16.mxu0 0
      %1580 = vmatpush1.bf16.msra.mxu0 0
      %1581 = vmatprep.subr.bf16.mxu0 0
      %1582 = vmatpush1.bf16.msra.mxu0 0
      %1583 = vmatprep.subr.bf16.mxu0 0
      %1584 = vmatpush1.bf16.msra.mxu0 0
      %1585 = vmatprep.mubr.bf16.mxu0 0
      %1586 = vmatmul.mubr.bf16.gmra.mrb[0].mxu0 %v1539
      %v1587 = vpop.f32.mrb[0].mxu0
      %v1588 = vadd.f32 0.0, %v1587
      %v1589 = vpop.f32.mrb[0].mxu0
      %v1590 = vpop.f32.mrb[0].mxu0
      %v1591 = vadd.f32 0.0, %v1590
      %v1592 = vpop.f32.mrb[0].mxu0
      %1593 = vmatprep.mubr.bf16.mxu0 0
      %1594 = vmatmul.mubr.bf16.gmra.mrb[0].mxu0 %v1542
      %v1595 = vpop.f32.mrb[0].mxu0
      %v1596 = vadd.f32 0.0, %v1595
      %v1597 = vpop.f32.mrb[0].mxu0
      %v1598 = vpop.f32.mrb[0].mxu0
      %v1599 = vadd.f32 0.0, %v1598
      %v1600 = vpop.f32.mrb[0].mxu0
      %1601 = vmatprep.mubr.bf16.mxu0 0
      %1602 = vmatmul.mubr.bf16.gmra.mrb[0].mxu0 %v1545
      %v1603 = vpop.f32.mrb[0].mxu0
      %v1604 = vadd.f32 0.0, %v1603
      %v1605 = vpop.f32.mrb[0].mxu0
      %v1606 = vpop.f32.mrb[0].mxu0
      %v1607 = vadd.f32 0.0, %v1606
      %v1608 = vpop.f32.mrb[0].mxu0
      %1609 = vmatprep.mubr.bf16.mxu0 0
      %1610 = vmatmul.mubr.bf16.gmra.mrb[0].mxu0 %v1548
      %v1611 = vpop.f32.mrb[0].mxu0
      %v1612 = vadd.f32 0.0, %v1611
      %v1613 = vpop.f32.mrb[0].mxu0
      %v1614 = vpop.f32.mrb[0].mxu0
      %v1615 = vadd.f32 0.0, %v1614
      %v1616 = vpop.f32.mrb[0].mxu0
      %1617 = vdwg.mxu0
      %v1620 = vunpack.c.l.b16 %v1524
      %v1621 = vunpack.c.l.b16 %v1525
      %v1622 = vpack.c.b16 %v1621, %v1620
      %v1624 = vsel %vm796, %v1520, 0
      %v1627 = vsel %vm796, %v1521, 0
      %v1630 = vsel %vm796, %v1522, 0
      %v1633 = vsel %vm796, %v1523, 0
      %v1636 = vsel %vm809, %v1622, 0
      %1638 = vmatprep.subr.bf16.mxu0 0
      %1639 = vmatpush1.bf16.msra.mxu0 %v1636
      %1640 = vmatprep.subr.bf16.mxu0 0
      %1641 = vmatpush1.bf16.msra.mxu0 0
      %1642 = vmatprep.subr.bf16.mxu0 0
      %1643 = vmatpush1.bf16.msra.mxu0 0
      %1644 = vmatprep.subr.bf16.mxu0 0
      %1645 = vmatpush1.bf16.msra.mxu0 0
      %1646 = vmatprep.subr.bf16.mxu0 0
      %1647 = vmatpush1.bf16.msra.mxu0 0
      %1648 = vmatprep.subr.bf16.mxu0 0
      %1649 = vmatpush1.bf16.msra.mxu0 0
      %1650 = vmatprep.subr.bf16.mxu0 0
      %1651 = vmatpush1.bf16.msra.mxu0 0
      %1652 = vmatprep.subr.bf16.mxu0 0
      %1653 = vmatpush1.bf16.msra.mxu0 0
      %1654 = vmatprep.subr.bf16.mxu0 0
      %1655 = vmatpush1.bf16.msra.mxu0 0
      %1656 = vmatprep.subr.bf16.mxu0 0
      %1657 = vmatpush1.bf16.msra.mxu0 0
      %1658 = vmatprep.subr.bf16.mxu0 0
      %1659 = vmatpush1.bf16.msra.mxu0 0
      %1660 = vmatprep.subr.bf16.mxu0 0
      %1661 = vmatpush1.bf16.msra.mxu0 0
      %1662 = vmatprep.subr.bf16.mxu0 0
      %1663 = vmatpush1.bf16.msra.mxu0 0
      %1664 = vmatprep.subr.bf16.mxu0 0
      %1665 = vmatpush1.bf16.msra.mxu0 0
      %1666 = vmatprep.subr.bf16.mxu0 0
      %1667 = vmatpush1.bf16.msra.mxu0 0
      %1668 = vmatprep.subr.bf16.mxu0 0
      %1669 = vmatpush1.bf16.msra.mxu0 0
      %1670 = vmatprep.mubr.bf16.mxu0 0
      %1671 = vmatmul.mubr.bf16.gmra.mrb[0].mxu0 %v1624
      %v1672 = vpop.f32.mrb[0].mxu0
      %v1673 = vadd.f32 %v1588, %v1672
      %v1674 = vpop.f32.mrb[0].mxu0
      %v1675 = vpop.f32.mrb[0].mxu0
      %v1676 = vadd.f32 %v1591, %v1675
      %v1677 = vpop.f32.mrb[0].mxu0
      %1678 = vmatprep.mubr.bf16.mxu0 0
      %1679 = vmatmul.mubr.bf16.gmra.mrb[0].mxu0 %v1627
      %v1680 = vpop.f32.mrb[0].mxu0
      %v1681 = vadd.f32 %v1596, %v1680
      %v1682 = vpop.f32.mrb[0].mxu0
      %v1683 = vpop.f32.mrb[0].mxu0
      %v1684 = vadd.f32 %v1599, %v1683
      %v1685 = vpop.f32.mrb[0].mxu0
      %1686 = vmatprep.mubr.bf16.mxu0 0
      %1687 = vmatmul.mubr.bf16.gmra.mrb[0].mxu0 %v1630
      %v1688 = vpop.f32.mrb[0].mxu0
      %v1689 = vadd.f32 %v1604, %v1688
      %v1690 = vpop.f32.mrb[0].mxu0
      %v1691 = vpop.f32.mrb[0].mxu0
      %v1692 = vadd.f32 %v1607, %v1691
      %v1693 = vpop.f32.mrb[0].mxu0
      %1694 = vmatprep.mubr.bf16.mxu0 0
      %1695 = vmatmul.mubr.bf16.gmra.mrb[0].mxu0 %v1633
      %v1696 = vpop.f32.mrb[0].mxu0
      %v1697 = vadd.f32 %v1612, %v1696
      %v1698 = vpop.f32.mrb[0].mxu0
      %v1699 = vpop.f32.mrb[0].mxu0
      %v1700 = vadd.f32 %v1615, %v1699
      %v1701 = vpop.f32.mrb[0].mxu0
      %1702 = vdwg.mxu0
      %v1703 = vpack.c.bf16 0.0, %v1519
      %s1704 = scalar_lea.vmem %s5, 16
      %v1705 = vld [vmem:[%s1704] sm:$0xf]
      %v1706 = vld [vmem:[%s1704 + $0x4] sm:$0x3]
      %v1709 = vunpack.c.l.b16 %v1705
      %v1710 = vunpack.c.l.b16 %v1706
      %v1711 = vpack.c.b16 %v1710, %v1709
      %v1713 = vsel %vm796, %v1703, 0
      %v1716 = vsel %vm809, %v1711, 0
      %1718 = vmatprep.subr.bf16.mxu0 0
      %1719 = vmatpush1.bf16.msra.mxu0 %v1716
      %1720 = vmatprep.subr.bf16.mxu0 0
      %1721 = vmatpush1.bf16.msra.mxu0 0
      %1722 = vmatprep.subr.bf16.mxu0 0
      %1723 = vmatpush1.bf16.msra.mxu0 0
      %1724 = vmatprep.subr.bf16.mxu0 0
      %1725 = vmatpush1.bf16.msra.mxu0 0
      %1726 = vmatprep.subr.bf16.mxu0 0
      %1727 = vmatpush1.bf16.msra.mxu0 0
      %1728 = vmatprep.subr.bf16.mxu0 0
      %1729 = vmatpush1.bf16.msra.mxu0 0
      %1730 = vmatprep.subr.bf16.mxu0 0
      %1731 = vmatpush1.bf16.msra.mxu0 0
      %1732 = vmatprep.subr.bf16.mxu0 0
      %1733 = vmatpush1.bf16.msra.mxu0 0
      %1734 = vmatprep.subr.bf16.mxu0 0
      %1735 = vmatpush1.bf16.msra.mxu0 0
      %1736 = vmatprep.subr.bf16.mxu0 0
      %1737 = vmatpush1.bf16.msra.mxu0 0
      %1738 = vmatprep.subr.bf16.mxu0 0
      %1739 = vmatpush1.bf16.msra.mxu0 0
      %1740 = vmatprep.subr.bf16.mxu0 0
      %1741 = vmatpush1.bf16.msra.mxu0 0
      %1742 = vmatprep.subr.bf16.mxu0 0
      %1743 = vmatpush1.bf16.msra.mxu0 0
      %1744 = vmatprep.subr.bf16.mxu0 0
      %1745 = vmatpush1.bf16.msra.mxu0 0
      %1746 = vmatprep.subr.bf16.mxu0 0
      %1747 = vmatpush1.bf16.msra.mxu0 0
      %1748 = vmatprep.subr.bf16.mxu0 0
      %1749 = vmatpush1.bf16.msra.mxu0 0
      %1750 = vmatprep.mubr.bf16.mxu0 0
      %1751 = vmatmul.mubr.bf16.gmra.mrb[0].mxu0 %v1627
      %v1752 = vpop.f32.mrb[0].mxu0
      %v1753 = vadd.f32 0.0, %v1752
      %v1754 = vpop.f32.mrb[0].mxu0
      %v1755 = vpop.f32.mrb[0].mxu0
      %v1756 = vadd.f32 0.0, %v1755
      %v1757 = vpop.f32.mrb[0].mxu0
      %1758 = vmatprep.mubr.bf16.mxu0 0
      %1759 = vmatmul.mubr.bf16.gmra.mrb[0].mxu0 %v1630
      %v1760 = vpop.f32.mrb[0].mxu0
      %v1761 = vadd.f32 0.0, %v1760
      %v1762 = vpop.f32.mrb[0].mxu0
      %v1763 = vpop.f32.mrb[0].mxu0
      %v1764 = vadd.f32 0.0, %v1763
      %v1765 = vpop.f32.mrb[0].mxu0
      %1766 = vmatprep.mubr.bf16.mxu0 0
      %1767 = vmatmul.mubr.bf16.gmra.mrb[0].mxu0 %v1633
      %v1768 = vpop.f32.mrb[0].mxu0
      %v1769 = vadd.f32 0.0, %v1768
      %v1770 = vpop.f32.mrb[0].mxu0
      %v1771 = vpop.f32.mrb[0].mxu0
      %v1772 = vadd.f32 0.0, %v1771
      %v1773 = vpop.f32.mrb[0].mxu0
      %1774 = vmatprep.mubr.bf16.mxu0 0
      %1775 = vmatmul.mubr.bf16.gmra.mrb[0].mxu0 %v1713
      %v1776 = vpop.f32.mrb[0].mxu0
      %v1777 = vadd.f32 0.0, %v1776
      %v1778 = vpop.f32.mrb[0].mxu0
      %v1779 = vpop.f32.mrb[0].mxu0
      %v1780 = vadd.f32 0.0, %v1779
      %v1781 = vpop.f32.mrb[0].mxu0
      %1782 = vdwg.mxu0
      %v1783 = vadd.f32 %v1673, %v1753
      %v1784 = vadd.f32 %v1676, %v1756
      %v1785 = vadd.f32 %v1681, %v1761
      %v1786 = vadd.f32 %v1684, %v1764
      %v1787 = vadd.f32 %v1689, %v1769
      %v1788 = vadd.f32 %v1692, %v1772
      %v1789 = vadd.f32 %v1697, %v1777
      %v1790 = vadd.f32 %v1700, %v1780
      %v1791 = vld [vmem:[%s8 + $0x2] sm:$0x1]
      %v1792 = vld [vmem:[%s8 + $0x3] sm:$0x1]
      %v1793 = vsel %vm760, %v1783, 0.0
      %v1794 = vsel %vm760, %v1784, 0.0
      %v1795 = vadd.f32 %v1793, %v1794
      %v1796 = vsel %vm760, %v1785, 0.0
      %v1797 = vadd.f32 %v1795, %v1796
      %v1798 = vsel %vm760, %v1786, 0.0
      %v1799 = vadd.f32 %v1797, %v1798
      %v1800 = vsel %vm760, %v1787, 0.0
      %v1801 = vadd.f32 %v1799, %v1800
      %v1802 = vsel %vm760, %v1788, 0.0
      %v1803 = vadd.f32 %v1801, %v1802
      %v1804 = vsel %vm760, %v1789, 0.0
      %v1805 = vadd.f32 %v1803, %v1804
      %v1806 = vsel %vm760, %v1790, 0.0
      %v1807 = vadd.f32 %v1805, %v1806
      %1808 = vadd.xlane.f32.xlu0 %v1807
      %v1809 = vpop.xlane.xlu0 %1808
      %v1810 = vrot.slane %v1809, 4
      %v1811 = vadd.f32 %v1809, %v1810
      %v1812 = vrot.slane %v1811, 2
      %v1813 = vadd.f32 %v1811, %v1812
      %v1814 = vrot.slane %v1813, 1
      %v1815 = vadd.f32 %v1813, %v1814
      %s1816 = vtos %v1815
      %s1817 = smul.f32 %s1816, 0.00390625
      %v1818 = vmul.f32 %v1783, %v1783
      %v1819 = vmul.f32 %v1784, %v1784
      %v1820 = vmul.f32 %v1785, %v1785
      %v1821 = vmul.f32 %v1786, %v1786
      %v1822 = vmul.f32 %v1787, %v1787
      %v1823 = vmul.f32 %v1788, %v1788
      %v1824 = vmul.f32 %v1789, %v1789
      %v1825 = vmul.f32 %v1790, %v1790
      %v1826 = vsel %vm760, %v1818, 0.0
      %v1827 = vsel %vm760, %v1819, 0.0
      %v1828 = vadd.f32 %v1826, %v1827
      %v1829 = vsel %vm760, %v1820, 0.0
      %v1830 = vadd.f32 %v1828, %v1829
      %v1831 = vsel %vm760, %v1821, 0.0
      %v1832 = vadd.f32 %v1830, %v1831
      %v1833 = vsel %vm760, %v1822, 0.0
      %v1834 = vadd.f32 %v1832, %v1833
      %v1835 = vsel %vm760, %v1823, 0.0
      %v1836 = vadd.f32 %v1834, %v1835
      %v1837 = vsel %vm760, %v1824, 0.0
      %v1838 = vadd.f32 %v1836, %v1837
      %v1839 = vsel %vm760, %v1825, 0.0
      %v1840 = vadd.f32 %v1838, %v1839
      %1841 = vadd.xlane.f32.xlu0 %v1840
      %v1842 = vpop.xlane.xlu0 %1841
      %v1843 = vrot.slane %v1842, 4
      %v1844 = vadd.f32 %v1842, %v1843
      %v1845 = vrot.slane %v1844, 2
      %v1846 = vadd.f32 %v1844, %v1845
      %v1847 = vrot.slane %v1846, 1
      %v1848 = vadd.f32 %v1846, %v1847
      %s1849 = vtos %v1848
      %s1850 = smul.f32 %s1849, 0.00390625
      %s1851 = smul.f32 %s1817, %s1817
      %s1852 = ssub.f32 %s1850, %s1851
      %s1853 = smax.f32 %s1852, 0.0
      %v1854 = vstv %s1817
      %v1855 = vsub.f32 %v1783, %v1854
      %v1856 = vsub.f32 %v1784, %v1854
      %v1857 = vsub.f32 %v1785, %v1854
      %v1858 = vsub.f32 %v1786, %v1854
      %v1859 = vsub.f32 %v1787, %v1854
      %v1860 = vsub.f32 %v1788, %v1854
      %v1861 = vsub.f32 %v1789, %v1854
      %v1862 = vsub.f32 %v1790, %v1854
      %s1863 = sadd.f32 %s1853, 1e-05
      %v1864 = vstv %s1863
      %v1865 = vrsqrt.pop %v1864
      %s1866 = vtos %v1865
      %v1867 = vstv %s1866
      %v1868 = vmul.f32 %v1855, %v1867
      %v1869 = vmul.f32 %v1856, %v1867
      %v1870 = vmul.f32 %v1857, %v1867
      %v1871 = vmul.f32 %v1858, %v1867
      %v1872 = vmul.f32 %v1859, %v1867
      %v1873 = vmul.f32 %v1860, %v1867
      %v1874 = vmul.f32 %v1861, %v1867
      %v1875 = vmul.f32 %v1862, %v1867
      %v1876 = vlaneseq
      %v1877 = vshrl.u32 %v1876, 7
      %v1878 = vsub.s32 0, %v1877
      %v1879 = vrot.slane %v1791, %v1878
      %v1880 = vmul.f32 %v1868, %v1879
      %v1881 = vmul.f32 %v1869, %v1879
      %v1882 = vmul.f32 %v1870, %v1879
      %v1883 = vmul.f32 %v1871, %v1879
      %v1884 = vmul.f32 %v1872, %v1879
      %v1885 = vmul.f32 %v1873, %v1879
      %v1886 = vmul.f32 %v1874, %v1879
      %v1887 = vmul.f32 %v1875, %v1879
      %v1888 = vlaneseq
      %v1889 = vshrl.u32 %v1888, 7
      %v1890 = vsub.s32 0, %v1889
      %v1891 = vrot.slane %v1792, %v1890
      %v1892 = vadd.f32 %v1880, %v1891
      %v1893 = vadd.f32 %v1881, %v1891
      %v1894 = vadd.f32 %v1882, %v1891
      %v1895 = vadd.f32 %v1883, %v1891
      %v1896 = vadd.f32 %v1884, %v1891
      %v1897 = vadd.f32 %v1885, %v1891
      %v1898 = vadd.f32 %v1886, %v1891
      %v1899 = vadd.f32 %v1887, %v1891
      %v1900 = vadd.f32 %v1892, %v469
      %v1901 = vadd.f32 %v1893, %v470
      %v1902 = vadd.f32 %v1894, %v471
      %v1903 = vadd.f32 %v1895, %v472
      %v1904 = vadd.f32 %v1896, %v473
      %v1905 = vadd.f32 %v1897, %v474
      %v1906 = vadd.f32 %v1898, %v475
      %v1907 = vadd.f32 %v1899, %v476
      %v1908 = vmul.f32 %v1900, 0.5
      %v1909 = vmul.f32 %v1901, 0.5
      %v1910 = vmul.f32 %v1902, 0.5
      %v1911 = vmul.f32 %v1903, 0.5
      %v1912 = vmul.f32 %v1904, 0.5
      %v1913 = vmul.f32 %v1905, 0.5
      %v1914 = vmul.f32 %v1906, 0.5
      %v1915 = vmul.f32 %v1907, 0.5
      %v1916 = vmul.f32 %v1900, 0.70710677
      %v1917 = vmul.f32 %v1901, 0.70710677
      %v1918 = vmul.f32 %v1902, 0.70710677
      %v1919 = vmul.f32 %v1903, 0.70710677
      %v1920 = vmul.f32 %v1904, 0.70710677
      %v1921 = vmul.f32 %v1905, 0.70710677
      %v1922 = vmul.f32 %v1906, 0.70710677
      %v1923 = vmul.f32 %v1907, 0.70710677
      %vm1924 = vcmp.ge.f32.partialorder %v1916, 0.0
      %vm1925 = vcmp.ge.f32.partialorder %v1917, 0.0
      %vm1926 = vcmp.ge.f32.partialorder %v1918, 0.0
      %vm1927 = vcmp.ge.f32.partialorder %v1919, 0.0
      %vm1928 = vcmp.ge.f32.partialorder %v1920, 0.0
      %vm1929 = vcmp.ge.f32.partialorder %v1921, 0.0
      %vm1930 = vcmp.ge.f32.partialorder %v1922, 0.0
      %vm1931 = vcmp.ge.f32.partialorder %v1923, 0.0
      %v1932 = vsel %vm1924, 1.0, -1.0
      %v1933 = vsel %vm1925, 1.0, -1.0
      %v1934 = vsel %vm1926, 1.0, -1.0
      %v1935 = vsel %vm1927, 1.0, -1.0
      %v1936 = vsel %vm1928, 1.0, -1.0
      %v1937 = vsel %vm1929, 1.0, -1.0
      %v1938 = vsel %vm1930, 1.0, -1.0
      %v1939 = vsel %vm1931, 1.0, -1.0
      %v1940 = vand.u32 2147483647, %v1916
      %v1941 = vand.u32 2147483647, %v1917
      %v1942 = vand.u32 2147483647, %v1918
      %v1943 = vand.u32 2147483647, %v1919
      %v1944 = vand.u32 2147483647, %v1920
      %v1945 = vand.u32 2147483647, %v1921
      %v1946 = vand.u32 2147483647, %v1922
      %v1947 = vand.u32 2147483647, %v1923
      %v1948 = vmul.f32 %v1940, 0.3275911
      %v1949 = vmul.f32 %v1941, 0.3275911
      %v1950 = vmul.f32 %v1942, 0.3275911
      %v1951 = vmul.f32 %v1943, 0.3275911
      %v1952 = vmul.f32 %v1944, 0.3275911
      %v1953 = vmul.f32 %v1945, 0.3275911
      %v1954 = vmul.f32 %v1946, 0.3275911
      %v1955 = vmul.f32 %v1947, 0.3275911
      %v1956 = vadd.f32 %v1948, 1.0
      %v1957 = vadd.f32 %v1949, 1.0
      %v1958 = vadd.f32 %v1950, 1.0
      %v1959 = vadd.f32 %v1951, 1.0
      %v1960 = vadd.f32 %v1952, 1.0
      %v1961 = vadd.f32 %v1953, 1.0
      %v1962 = vadd.f32 %v1954, 1.0
      %v1963 = vadd.f32 %v1955, 1.0
      %v1964 = vrcp.pop %v1956
      %v1965 = vmul.f32 1.0, %v1964
      %v1966 = vrcp.pop %v1957
      %v1967 = vmul.f32 1.0, %v1966
      %v1968 = vrcp.pop %v1958
      %v1969 = vmul.f32 1.0, %v1968
      %v1970 = vrcp.pop %v1959
      %v1971 = vmul.f32 1.0, %v1970
      %v1972 = vrcp.pop %v1960
      %v1973 = vmul.f32 1.0, %v1972
      %v1974 = vrcp.pop %v1961
      %v1975 = vmul.f32 1.0, %v1974
      %v1976 = vrcp.pop %v1962
      %v1977 = vmul.f32 1.0, %v1976
      %v1978 = vrcp.pop %v1963
      %v1979 = vmul.f32 1.0, %v1978
      %v1980 = vmul.f32 %v1965, 1.0614054
      %v1981 = vmul.f32 %v1967, 1.0614054
      %v1982 = vmul.f32 %v1969, 1.0614054
      %v1983 = vmul.f32 %v1971, 1.0614054
      %v1984 = vmul.f32 %v1973, 1.0614054
      %v1985 = vmul.f32 %v1975, 1.0614054
      %v1986 = vmul.f32 %v1977, 1.0614054
      %v1987 = vmul.f32 %v1979, 1.0614054
      %v1988 = vadd.f32 %v1980, -1.4531521
      %v1989 = vadd.f32 %v1981, -1.4531521
      %v1990 = vadd.f32 %v1982, -1.4531521
      %v1991 = vadd.f32 %v1983, -1.4531521
      %v1992 = vadd.f32 %v1984, -1.4531521
      %v1993 = vadd.f32 %v1985, -1.4531521
      %v1994 = vadd.f32 %v1986, -1.4531521
      %v1995 = vadd.f32 %v1987, -1.4531521
      %v1996 = vmul.f32 %v1988, %v1965
      %v1997 = vmul.f32 %v1989, %v1967
      %v1998 = vmul.f32 %v1990, %v1969
      %v1999 = vmul.f32 %v1991, %v1971
      %v2000 = vmul.f32 %v1992, %v1973
      %v2001 = vmul.f32 %v1993, %v1975
      %v2002 = vmul.f32 %v1994, %v1977
      %v2003 = vmul.f32 %v1995, %v1979
      %v2004 = vadd.f32 %v1996, 1.4214138
      %v2005 = vadd.f32 %v1997, 1.4214138
      %v2006 = vadd.f32 %v1998, 1.4214138
      %v2007 = vadd.f32 %v1999, 1.4214138
      %v2008 = vadd.f32 %v2000, 1.4214138
      %v2009 = vadd.f32 %v2001, 1.4214138
      %v2010 = vadd.f32 %v2002, 1.4214138
      %v2011 = vadd.f32 %v2003, 1.4214138
      %v2012 = vmul.f32 %v2004, %v1965
      %v2013 = vmul.f32 %v2005, %v1967
      %v2014 = vmul.f32 %v2006, %v1969
      %v2015 = vmul.f32 %v2007, %v1971
      %v2016 = vmul.f32 %v2008, %v1973
      %v2017 = vmul.f32 %v2009, %v1975
      %v2018 = vmul.f32 %v2010, %v1977
      %v2019 = vmul.f32 %v2011, %v1979
      %v2020 = vadd.f32 %v2012, -0.28449672
      %v2021 = vadd.f32 %v2013, -0.28449672
      %v2022 = vadd.f32 %v2014, -0.28449672
      %v2023 = vadd.f32 %v2015, -0.28449672
      %v2024 = vadd.f32 %v2016, -0.28449672
      %v2025 = vadd.f32 %v2017, -0.28449672
      %v2026 = vadd.f32 %v2018, -0.28449672
      %v2027 = vadd.f32 %v2019, -0.28449672
      %v2028 = vmul.f32 %v2020, %v1965
      %v2029 = vmul.f32 %v2021, %v1967
      %v2030 = vmul.f32 %v2022, %v1969
      %v2031 = vmul.f32 %v2023, %v1971
      %v2032 = vmul.f32 %v2024, %v1973
      %v2033 = vmul.f32 %v2025, %v1975
      %v2034 = vmul.f32 %v2026, %v1977
      %v2035 = vmul.f32 %v2027, %v1979
      %v2036 = vadd.f32 %v2028, 0.2548296
      %v2037 = vadd.f32 %v2029, 0.2548296
      %v2038 = vadd.f32 %v2030, 0.2548296
      %v2039 = vadd.f32 %v2031, 0.2548296
      %v2040 = vadd.f32 %v2032, 0.2548296
      %v2041 = vadd.f32 %v2033, 0.2548296
      %v2042 = vadd.f32 %v2034, 0.2548296
      %v2043 = vadd.f32 %v2035, 0.2548296
      %v2044 = vmul.f32 %v2036, %v1965
      %v2045 = vmul.f32 %v2037, %v1967
      %v2046 = vmul.f32 %v2038, %v1969
      %v2047 = vmul.f32 %v2039, %v1971
      %v2048 = vmul.f32 %v2040, %v1973
      %v2049 = vmul.f32 %v2041, %v1975
      %v2050 = vmul.f32 %v2042, %v1977
      %v2051 = vmul.f32 %v2043, %v1979
      %v2052 = vsub.f32 0.0, %v1940
      %v2053 = vsub.f32 0.0, %v1941
      %v2054 = vsub.f32 0.0, %v1942
      %v2055 = vsub.f32 0.0, %v1943
      %v2056 = vsub.f32 0.0, %v1944
      %v2057 = vsub.f32 0.0, %v1945
      %v2058 = vsub.f32 0.0, %v1946
      %v2059 = vsub.f32 0.0, %v1947
      %v2060 = vmul.f32 %v2052, %v1940
      %v2061 = vmul.f32 %v2053, %v1941
      %v2062 = vmul.f32 %v2054, %v1942
      %v2063 = vmul.f32 %v2055, %v1943
      %v2064 = vmul.f32 %v2056, %v1944
      %v2065 = vmul.f32 %v2057, %v1945
      %v2066 = vmul.f32 %v2058, %v1946
      %v2067 = vmul.f32 %v2059, %v1947
      %v2068 = vmul.f32 %v2060, 1.442695
      %v2069 = vpow.pop %v2068
      %v2070 = vmul.f32 %v2061, 1.442695
      %v2071 = vpow.pop %v2070
      %v2072 = vmul.f32 %v2062, 1.442695
      %v2073 = vpow.pop %v2072
      %v2074 = vmul.f32 %v2063, 1.442695
      %v2075 = vpow.pop %v2074
      %v2076 = vmul.f32 %v2064, 1.442695
      %v2077 = vpow.pop %v2076
      %v2078 = vmul.f32 %v2065, 1.442695
      %v2079 = vpow.pop %v2078
      %v2080 = vmul.f32 %v2066, 1.442695
      %v2081 = vpow.pop %v2080
      %v2082 = vmul.f32 %v2067, 1.442695
      %v2083 = vpow.pop %v2082
      %v2084 = vmul.f32 %v2044, %v2069
      %v2085 = vmul.f32 %v2045, %v2071
      %v2086 = vmul.f32 %v2046, %v2073
      %v2087 = vmul.f32 %v2047, %v2075
      %v2088 = vmul.f32 %v2048, %v2077
      %v2089 = vmul.f32 %v2049, %v2079
      %v2090 = vmul.f32 %v2050, %v2081
      %v2091 = vmul.f32 %v2051, %v2083
      %v2092 = vsub.f32 1.0, %v2084
      %v2093 = vsub.f32 1.0, %v2085
      %v2094 = vsub.f32 1.0, %v2086
      %v2095 = vsub.f32 1.0, %v2087
      %v2096 = vsub.f32 1.0, %v2088
      %v2097 = vsub.f32 1.0, %v2089
      %v2098 = vsub.f32 1.0, %v2090
      %v2099 = vsub.f32 1.0, %v2091
      %v2100 = vmul.f32 %v1932, %v2092
      %v2101 = vmul.f32 %v1933, %v2093
      %v2102 = vmul.f32 %v1934, %v2094
      %v2103 = vmul.f32 %v1935, %v2095
      %v2104 = vmul.f32 %v1936, %v2096
      %v2105 = vmul.f32 %v1937, %v2097
      %v2106 = vmul.f32 %v1938, %v2098
      %v2107 = vmul.f32 %v1939, %v2099
      %v2108 = vadd.f32 %v2100, 1.0
      %v2109 = vadd.f32 %v2101, 1.0
      %v2110 = vadd.f32 %v2102, 1.0
      %v2111 = vadd.f32 %v2103, 1.0
      %v2112 = vadd.f32 %v2104, 1.0
      %v2113 = vadd.f32 %v2105, 1.0
      %v2114 = vadd.f32 %v2106, 1.0
      %v2115 = vadd.f32 %v2107, 1.0
      %v2116 = vmul.f32 %v1908, %v2108
      %v2117 = vmul.f32 %v1909, %v2109
      %v2118 = vmul.f32 %v1910, %v2110
      %v2119 = vmul.f32 %v1911, %v2111
      %v2120 = vmul.f32 %v1912, %v2112
      %v2121 = vmul.f32 %v1913, %v2113
      %v2122 = vmul.f32 %v1914, %v2114
      %v2123 = vmul.f32 %v1915, %v2115
      %v2132 = vrot.slane %v2116, 7
      %v2133 = vrot.slane %v2117, 7
      %v2134 = vsel %vm606, %v2132, %v2133
      %v2135 = vrot.slane %v2118, 7
      %v2136 = vsel %vm606, %v2133, %v2135
      %v2137 = vrot.slane %v2119, 7
      %v2138 = vsel %vm606, %v2135, %v2137
      %v2139 = vrot.slane %v2120, 7
      %v2140 = vsel %vm606, %v2137, %v2139
      %v2141 = vrot.slane %v2121, 7
      %v2142 = vsel %vm606, %v2139, %v2141
      %v2143 = vrot.slane %v2122, 7
      %v2144 = vsel %vm606, %v2141, %v2143
      %v2145 = vrot.slane %v2123, 7
      %v2146 = vsel %vm606, %v2143, %v2145
      %v2155 = vsel %vm606, 0.0, %v2132
      %v2156 = vsel %vm639, 0.0, %v2155
      %v2157 = vsel %vm640, 0.0, %v2134
      %v2158 = vsel %vm641, 0.0, %v2136
      %v2159 = vsel %vm642, 0.0, %v2138
      %v2160 = vsel %vm643, 0.0, %v2140
      %v2161 = vsel %vm644, 0.0, %v2142
      %v2162 = vsel %vm645, 0.0, %v2144
      %v2163 = vsel %vm646, 0.0, %v2146
      %v2164 = vrot.slane %v2116, 1
      %v2165 = vrot.slane %v2117, 1
      %v2166 = vsel %vm655, %v2164, %v2165
      %v2167 = vrot.slane %v2118, 1
      %v2168 = vsel %vm655, %v2165, %v2167
      %v2169 = vrot.slane %v2119, 1
      %v2170 = vsel %vm655, %v2167, %v2169
      %v2171 = vrot.slane %v2120, 1
      %v2172 = vsel %vm655, %v2169, %v2171
      %v2173 = vrot.slane %v2121, 1
      %v2174 = vsel %vm655, %v2171, %v2173
      %v2175 = vrot.slane %v2122, 1
      %v2176 = vsel %vm655, %v2173, %v2175
      %v2177 = vrot.slane %v2123, 1
      %v2178 = vsel %vm655, %v2175, %v2177
      %v2187 = vsel %vm655, %v2177, 0.0
      %v2188 = vsel %vm688, 0.0, %v2166
      %v2189 = vsel %vm689, 0.0, %v2168
      %v2190 = vsel %vm690, 0.0, %v2170
      %v2191 = vsel %vm691, 0.0, %v2172
      %v2192 = vsel %vm692, 0.0, %v2174
      %v2193 = vsel %vm693, 0.0, %v2176
      %v2194 = vsel %vm694, 0.0, %v2178
      %v2195 = vsel %vm695, 0.0, %v2187
      %2196 = vrot.lane.b32.xlu0 %v2116, 4
      %v2197 = vpop.permute.xlu0 %2196
      %2198 = vrot.lane.b32.xlu0 %v2117, 4
      %v2199 = vpop.permute.xlu0 %2198
      %2200 = vrot.lane.b32.xlu0 %v2118, 4
      %v2201 = vpop.permute.xlu0 %2200
      %2202 = vrot.lane.b32.xlu0 %v2119, 4
      %v2203 = vpop.permute.xlu0 %2202
      %2204 = vrot.lane.b32.xlu0 %v2120, 4
      %v2205 = vpop.permute.xlu0 %2204
      %2206 = vrot.lane.b32.xlu0 %v2121, 4
      %v2207 = vpop.permute.xlu0 %2206
      %2208 = vrot.lane.b32.xlu0 %v2122, 4
      %v2209 = vpop.permute.xlu0 %2208
      %2210 = vrot.lane.b32.xlu0 %v2123, 4
      %v2211 = vpop.permute.xlu0 %2210
      %2228 = vrot.lane.b32.xlu0 %v2188, 8
      %v2229 = vpop.permute.xlu0 %2228
      %2230 = vrot.lane.b32.xlu0 %v2189, 8
      %v2231 = vpop.permute.xlu0 %2230
      %2232 = vrot.lane.b32.xlu0 %v2190, 8
      %v2233 = vpop.permute.xlu0 %2232
      %2234 = vrot.lane.b32.xlu0 %v2191, 8
      %v2235 = vpop.permute.xlu0 %2234
      %2236 = vrot.lane.b32.xlu0 %v2192, 8
      %v2237 = vpop.permute.xlu0 %2236
      %2238 = vrot.lane.b32.xlu0 %v2193, 8
      %v2239 = vpop.permute.xlu0 %2238
      %2240 = vrot.lane.b32.xlu0 %v2194, 8
      %v2241 = vpop.permute.xlu0 %2240
      %2242 = vrot.lane.b32.xlu0 %v2195, 8
      %v2243 = vpop.permute.xlu0 %2242
      %v2252 = vsel %vm760, %v2156, %v2197
      %v2253 = vsel %vm760, %v2157, %v2199
      %v2254 = vsel %vm760, %v2158, %v2201
      %v2255 = vsel %vm760, %v2159, %v2203
      %v2256 = vsel %vm760, %v2160, %v2205
      %v2257 = vsel %vm760, %v2161, %v2207
      %v2258 = vsel %vm760, %v2162, %v2209
      %v2259 = vsel %vm760, %v2163, %v2211
      %v2260 = vsel %vm769, %v2252, %v2229
      %v2261 = vsel %vm769, %v2253, %v2231
      %v2262 = vsel %vm769, %v2254, %v2233
      %v2263 = vsel %vm769, %v2255, %v2235
      %v2264 = vsel %vm769, %v2256, %v2237
      %v2265 = vsel %vm769, %v2257, %v2239
      %v2266 = vsel %vm769, %v2258, %v2241
      %v2267 = vsel %vm769, %v2259, %v2243
      %v2268 = vpack.c.bf16 %v2260, 0.0
      %v2269 = vpack.c.bf16 %v2262, %v2261
      %v2270 = vpack.c.bf16 %v2264, %v2263
      %v2271 = vpack.c.bf16 %v2266, %v2265
      %v2272 = vld [vmem:[%s6] sm:$0xf]
      %v2273 = vld [vmem:[%s6 + $0x4] sm:$0x3]
      %v2274 = vpack.c.bf16 %v2261, %v2260
      %v2275 = vpack.c.bf16 %v2263, %v2262
      %v2276 = vpack.c.bf16 %v2265, %v2264
      %v2277 = vpack.c.bf16 %v2267, %v2266
      %s2278 = scalar_lea.vmem %s6, 8
      %v2279 = vld [vmem:[%s2278] sm:$0xf]
      %v2280 = vld [vmem:[%s2278 + $0x4] sm:$0x3]
      %v2283 = vunpack.c.l.b16 %v2279
      %v2284 = vunpack.c.l.b16 %v2280
      %v2285 = vpack.c.b16 %v2284, %v2283
      %v2287 = vsel %vm796, %v2274, 0
      %v2290 = vsel %vm796, %v2275, 0
      %v2293 = vsel %vm796, %v2276, 0
      %v2296 = vsel %vm796, %v2277, 0
      %v2299 = vsel %vm809, %v2285, 0
      %2301 = vmatprep.subr.bf16.mxu0 0
      %2302 = vmatpush1.bf16.msra.mxu0 %v2299
      %2303 = vmatprep.subr.bf16.mxu0 0
      %2304 = vmatpush1.bf16.msra.mxu0 0
      %2305 = vmatprep.subr.bf16.mxu0 0
      %2306 = vmatpush1.bf16.msra.mxu0 0
      %2307 = vmatprep.subr.bf16.mxu0 0
      %2308 = vmatpush1.bf16.msra.mxu0 0
      %2309 = vmatprep.subr.bf16.mxu0 0
      %2310 = vmatpush1.bf16.msra.mxu0 0
      %2311 = vmatprep.subr.bf16.mxu0 0
      %2312 = vmatpush1.bf16.msra.mxu0 0
      %2313 = vmatprep.subr.bf16.mxu0 0
      %2314 = vmatpush1.bf16.msra.mxu0 0
      %2315 = vmatprep.subr.bf16.mxu0 0
      %2316 = vmatpush1.bf16.msra.mxu0 0
      %2317 = vmatprep.subr.bf16.mxu0 0
      %2318 = vmatpush1.bf16.msra.mxu0 0
      %2319 = vmatprep.subr.bf16.mxu0 0
      %2320 = vmatpush1.bf16.msra.mxu0 0
      %2321 = vmatprep.subr.bf16.mxu0 0
      %2322 = vmatpush1.bf16.msra.mxu0 0
      %2323 = vmatprep.subr.bf16.mxu0 0
      %2324 = vmatpush1.bf16.msra.mxu0 0
      %2325 = vmatprep.subr.bf16.mxu0 0
      %2326 = vmatpush1.bf16.msra.mxu0 0
      %2327 = vmatprep.subr.bf16.mxu0 0
      %2328 = vmatpush1.bf16.msra.mxu0 0
      %2329 = vmatprep.subr.bf16.mxu0 0
      %2330 = vmatpush1.bf16.msra.mxu0 0
      %2331 = vmatprep.subr.bf16.mxu0 0
      %2332 = vmatpush1.bf16.msra.mxu0 0
      %2333 = vmatprep.mubr.bf16.mxu0 0
      %2334 = vmatmul.mubr.bf16.gmra.mrb[0].mxu0 %v2287
      %v2335 = vpop.f32.mrb[0].mxu0
      %v2336 = vadd.f32 0.0, %v2335
      %v2337 = vpop.f32.mrb[0].mxu0
      %v2338 = vpop.f32.mrb[0].mxu0
      %v2339 = vadd.f32 0.0, %v2338
      %v2340 = vpop.f32.mrb[0].mxu0
      %2341 = vmatprep.mubr.bf16.mxu0 0
      %2342 = vmatmul.mubr.bf16.gmra.mrb[0].mxu0 %v2290
      %v2343 = vpop.f32.mrb[0].mxu0
      %v2344 = vadd.f32 0.0, %v2343
      %v2345 = vpop.f32.mrb[0].mxu0
      %v2346 = vpop.f32.mrb[0].mxu0
      %v2347 = vadd.f32 0.0, %v2346
      %v2348 = vpop.f32.mrb[0].mxu0
      %2349 = vmatprep.mubr.bf16.mxu0 0
      %2350 = vmatmul.mubr.bf16.gmra.mrb[0].mxu0 %v2293
      %v2351 = vpop.f32.mrb[0].mxu0
      %v2352 = vadd.f32 0.0, %v2351
      %v2353 = vpop.f32.mrb[0].mxu0
      %v2354 = vpop.f32.mrb[0].mxu0
      %v2355 = vadd.f32 0.0, %v2354
      %v2356 = vpop.f32.mrb[0].mxu0
      %2357 = vmatprep.mubr.bf16.mxu0 0
      %2358 = vmatmul.mubr.bf16.gmra.mrb[0].mxu0 %v2296
      %v2359 = vpop.f32.mrb[0].mxu0
      %v2360 = vadd.f32 0.0, %v2359
      %v2361 = vpop.f32.mrb[0].mxu0
      %v2362 = vpop.f32.mrb[0].mxu0
      %v2363 = vadd.f32 0.0, %v2362
      %v2364 = vpop.f32.mrb[0].mxu0
      %2365 = vdwg.mxu0
      %v2368 = vunpack.c.l.b16 %v2272
      %v2369 = vunpack.c.l.b16 %v2273
      %v2370 = vpack.c.b16 %v2369, %v2368
      %v2372 = vsel %vm796, %v2268, 0
      %v2375 = vsel %vm796, %v2269, 0
      %v2378 = vsel %vm796, %v2270, 0
      %v2381 = vsel %vm796, %v2271, 0
      %v2384 = vsel %vm809, %v2370, 0
      %2386 = vmatprep.subr.bf16.mxu0 0
      %2387 = vmatpush1.bf16.msra.mxu0 %v2384
      %2388 = vmatprep.subr.bf16.mxu0 0
      %2389 = vmatpush1.bf16.msra.mxu0 0
      %2390 = vmatprep.subr.bf16.mxu0 0
      %2391 = vmatpush1.bf16.msra.mxu0 0
      %2392 = vmatprep.subr.bf16.mxu0 0
      %2393 = vmatpush1.bf16.msra.mxu0 0
      %2394 = vmatprep.subr.bf16.mxu0 0
      %2395 = vmatpush1.bf16.msra.mxu0 0
      %2396 = vmatprep.subr.bf16.mxu0 0
      %2397 = vmatpush1.bf16.msra.mxu0 0
      %2398 = vmatprep.subr.bf16.mxu0 0
      %2399 = vmatpush1.bf16.msra.mxu0 0
      %2400 = vmatprep.subr.bf16.mxu0 0
      %2401 = vmatpush1.bf16.msra.mxu0 0
      %2402 = vmatprep.subr.bf16.mxu0 0
      %2403 = vmatpush1.bf16.msra.mxu0 0
      %2404 = vmatprep.subr.bf16.mxu0 0
      %2405 = vmatpush1.bf16.msra.mxu0 0
      %2406 = vmatprep.subr.bf16.mxu0 0
      %2407 = vmatpush1.bf16.msra.mxu0 0
      %2408 = vmatprep.subr.bf16.mxu0 0
      %2409 = vmatpush1.bf16.msra.mxu0 0
      %2410 = vmatprep.subr.bf16.mxu0 0
      %2411 = vmatpush1.bf16.msra.mxu0 0
      %2412 = vmatprep.subr.bf16.mxu0 0
      %2413 = vmatpush1.bf16.msra.mxu0 0
      %2414 = vmatprep.subr.bf16.mxu0 0
      %2415 = vmatpush1.bf16.msra.mxu0 0
      %2416 = vmatprep.subr.bf16.mxu0 0
      %2417 = vmatpush1.bf16.msra.mxu0 0
      %2418 = vmatprep.mubr.bf16.mxu0 0
      %2419 = vmatmul.mubr.bf16.gmra.mrb[0].mxu0 %v2372
      %v2420 = vpop.f32.mrb[0].mxu0
      %v2421 = vadd.f32 %v2336, %v2420
      %v2422 = vpop.f32.mrb[0].mxu0
      %v2423 = vpop.f32.mrb[0].mxu0
      %v2424 = vadd.f32 %v2339, %v2423
      %v2425 = vpop.f32.mrb[0].mxu0
      %2426 = vmatprep.mubr.bf16.mxu0 0
      %2427 = vmatmul.mubr.bf16.gmra.mrb[0].mxu0 %v2375
      %v2428 = vpop.f32.mrb[0].mxu0
      %v2429 = vadd.f32 %v2344, %v2428
      %v2430 = vpop.f32.mrb[0].mxu0
      %v2431 = vpop.f32.mrb[0].mxu0
      %v2432 = vadd.f32 %v2347, %v2431
      %v2433 = vpop.f32.mrb[0].mxu0
      %2434 = vmatprep.mubr.bf16.mxu0 0
      %2435 = vmatmul.mubr.bf16.gmra.mrb[0].mxu0 %v2378
      %v2436 = vpop.f32.mrb[0].mxu0
      %v2437 = vadd.f32 %v2352, %v2436
      %v2438 = vpop.f32.mrb[0].mxu0
      %v2439 = vpop.f32.mrb[0].mxu0
      %v2440 = vadd.f32 %v2355, %v2439
      %v2441 = vpop.f32.mrb[0].mxu0
      %2442 = vmatprep.mubr.bf16.mxu0 0
      %2443 = vmatmul.mubr.bf16.gmra.mrb[0].mxu0 %v2381
      %v2444 = vpop.f32.mrb[0].mxu0
      %v2445 = vadd.f32 %v2360, %v2444
      %v2446 = vpop.f32.mrb[0].mxu0
      %v2447 = vpop.f32.mrb[0].mxu0
      %v2448 = vadd.f32 %v2363, %v2447
      %v2449 = vpop.f32.mrb[0].mxu0
      %2450 = vdwg.mxu0
      %v2451 = vpack.c.bf16 0.0, %v2267
      %s2452 = scalar_lea.vmem %s6, 16
      %v2453 = vld [vmem:[%s2452] sm:$0xf]
      %v2454 = vld [vmem:[%s2452 + $0x4] sm:$0x3]
      %v2457 = vunpack.c.l.b16 %v2453
      %v2458 = vunpack.c.l.b16 %v2454
      %v2459 = vpack.c.b16 %v2458, %v2457
      %v2461 = vsel %vm796, %v2451, 0
      %v2464 = vsel %vm809, %v2459, 0
      %2466 = vmatprep.subr.bf16.mxu0 0
      %2467 = vmatpush1.bf16.msra.mxu0 %v2464
      %2468 = vmatprep.subr.bf16.mxu0 0
      %2469 = vmatpush1.bf16.msra.mxu0 0
      %2470 = vmatprep.subr.bf16.mxu0 0
      %2471 = vmatpush1.bf16.msra.mxu0 0
      %2472 = vmatprep.subr.bf16.mxu0 0
      %2473 = vmatpush1.bf16.msra.mxu0 0
      %2474 = vmatprep.subr.bf16.mxu0 0
      %2475 = vmatpush1.bf16.msra.mxu0 0
      %2476 = vmatprep.subr.bf16.mxu0 0
      %2477 = vmatpush1.bf16.msra.mxu0 0
      %2478 = vmatprep.subr.bf16.mxu0 0
      %2479 = vmatpush1.bf16.msra.mxu0 0
      %2480 = vmatprep.subr.bf16.mxu0 0
      %2481 = vmatpush1.bf16.msra.mxu0 0
      %2482 = vmatprep.subr.bf16.mxu0 0
      %2483 = vmatpush1.bf16.msra.mxu0 0
      %2484 = vmatprep.subr.bf16.mxu0 0
      %2485 = vmatpush1.bf16.msra.mxu0 0
      %2486 = vmatprep.subr.bf16.mxu0 0
      %2487 = vmatpush1.bf16.msra.mxu0 0
      %2488 = vmatprep.subr.bf16.mxu0 0
      %2489 = vmatpush1.bf16.msra.mxu0 0
      %2490 = vmatprep.subr.bf16.mxu0 0
      %2491 = vmatpush1.bf16.msra.mxu0 0
      %2492 = vmatprep.subr.bf16.mxu0 0
      %2493 = vmatpush1.bf16.msra.mxu0 0
      %2494 = vmatprep.subr.bf16.mxu0 0
      %2495 = vmatpush1.bf16.msra.mxu0 0
      %2496 = vmatprep.subr.bf16.mxu0 0
      %2497 = vmatpush1.bf16.msra.mxu0 0
      %2498 = vmatprep.mubr.bf16.mxu0 0
      %2499 = vmatmul.mubr.bf16.gmra.mrb[0].mxu0 %v2375
      %v2500 = vpop.f32.mrb[0].mxu0
      %v2501 = vadd.f32 0.0, %v2500
      %v2502 = vpop.f32.mrb[0].mxu0
      %v2503 = vpop.f32.mrb[0].mxu0
      %v2504 = vadd.f32 0.0, %v2503
      %v2505 = vpop.f32.mrb[0].mxu0
      %2506 = vmatprep.mubr.bf16.mxu0 0
      %2507 = vmatmul.mubr.bf16.gmra.mrb[0].mxu0 %v2378
      %v2508 = vpop.f32.mrb[0].mxu0
      %v2509 = vadd.f32 0.0, %v2508
      %v2510 = vpop.f32.mrb[0].mxu0
      %v2511 = vpop.f32.mrb[0].mxu0
      %v2512 = vadd.f32 0.0, %v2511
      %v2513 = vpop.f32.mrb[0].mxu0
      %2514 = vmatprep.mubr.bf16.mxu0 0
      %2515 = vmatmul.mubr.bf16.gmra.mrb[0].mxu0 %v2381
      %v2516 = vpop.f32.mrb[0].mxu0
      %v2517 = vadd.f32 0.0, %v2516
      %v2518 = vpop.f32.mrb[0].mxu0
      %v2519 = vpop.f32.mrb[0].mxu0
      %v2520 = vadd.f32 0.0, %v2519
      %v2521 = vpop.f32.mrb[0].mxu0
      %2522 = vmatprep.mubr.bf16.mxu0 0
      %2523 = vmatmul.mubr.bf16.gmra.mrb[0].mxu0 %v2461
      %v2524 = vpop.f32.mrb[0].mxu0
      %v2525 = vadd.f32 0.0, %v2524
      %v2526 = vpop.f32.mrb[0].mxu0
      %v2527 = vpop.f32.mrb[0].mxu0
      %v2528 = vadd.f32 0.0, %v2527
      %v2529 = vpop.f32.mrb[0].mxu0
      %2530 = vdwg.mxu0
      %v2531 = vadd.f32 %v2421, %v2501
      %v2532 = vadd.f32 %v2424, %v2504
      %v2533 = vadd.f32 %v2429, %v2509
      %v2534 = vadd.f32 %v2432, %v2512
      %v2535 = vadd.f32 %v2437, %v2517
      %v2536 = vadd.f32 %v2440, %v2520
      %v2537 = vadd.f32 %v2445, %v2525
      %v2538 = vadd.f32 %v2448, %v2528
      %v2539 = vld [vmem:[%s9] sm:$0x1]
      %v2540 = vld [vmem:[%s9 + $0x1] sm:$0x1]
      %v2541 = vsel %vm769, %v2531, 0.0
      %v2542 = vsel %vm769, %v2532, 0.0
      %v2543 = vadd.f32 %v2541, %v2542
      %v2544 = vsel %vm769, %v2533, 0.0
      %v2545 = vadd.f32 %v2543, %v2544
      %v2546 = vsel %vm769, %v2534, 0.0
      %v2547 = vadd.f32 %v2545, %v2546
      %v2548 = vsel %vm769, %v2535, 0.0
      %v2549 = vadd.f32 %v2547, %v2548
      %v2550 = vsel %vm769, %v2536, 0.0
      %v2551 = vadd.f32 %v2549, %v2550
      %v2552 = vsel %vm769, %v2537, 0.0
      %v2553 = vadd.f32 %v2551, %v2552
      %v2554 = vsel %vm769, %v2538, 0.0
      %v2555 = vadd.f32 %v2553, %v2554
      %2556 = vadd.xlane.f32.xlu0 %v2555
      %v2557 = vpop.xlane.xlu0 %2556
      %v2558 = vrot.slane %v2557, 4
      %v2559 = vadd.f32 %v2557, %v2558
      %v2560 = vrot.slane %v2559, 2
      %v2561 = vadd.f32 %v2559, %v2560
      %v2562 = vrot.slane %v2561, 1
      %v2563 = vadd.f32 %v2561, %v2562
      %s2564 = vtos %v2563
      %s2565 = smul.f32 %s2564, 0.001953125
      %v2566 = vmul.f32 %v2531, %v2531
      %v2567 = vmul.f32 %v2532, %v2532
      %v2568 = vmul.f32 %v2533, %v2533
      %v2569 = vmul.f32 %v2534, %v2534
      %v2570 = vmul.f32 %v2535, %v2535
      %v2571 = vmul.f32 %v2536, %v2536
      %v2572 = vmul.f32 %v2537, %v2537
      %v2573 = vmul.f32 %v2538, %v2538
      %v2574 = vsel %vm769, %v2566, 0.0
      %v2575 = vsel %vm769, %v2567, 0.0
      %v2576 = vadd.f32 %v2574, %v2575
      %v2577 = vsel %vm769, %v2568, 0.0
      %v2578 = vadd.f32 %v2576, %v2577
      %v2579 = vsel %vm769, %v2569, 0.0
      %v2580 = vadd.f32 %v2578, %v2579
      %v2581 = vsel %vm769, %v2570, 0.0
      %v2582 = vadd.f32 %v2580, %v2581
      %v2583 = vsel %vm769, %v2571, 0.0
      %v2584 = vadd.f32 %v2582, %v2583
      %v2585 = vsel %vm769, %v2572, 0.0
      %v2586 = vadd.f32 %v2584, %v2585
      %v2587 = vsel %vm769, %v2573, 0.0
      %v2588 = vadd.f32 %v2586, %v2587
      %2589 = vadd.xlane.f32.xlu0 %v2588
      %v2590 = vpop.xlane.xlu0 %2589
      %v2591 = vrot.slane %v2590, 4
      %v2592 = vadd.f32 %v2590, %v2591
      %v2593 = vrot.slane %v2592, 2
      %v2594 = vadd.f32 %v2592, %v2593
      %v2595 = vrot.slane %v2594, 1
      %v2596 = vadd.f32 %v2594, %v2595
      %s2597 = vtos %v2596
      %s2598 = smul.f32 %s2597, 0.001953125
      %s2599 = smul.f32 %s2565, %s2565
      %s2600 = ssub.f32 %s2598, %s2599
      %s2601 = smax.f32 %s2600, 0.0
      %v2602 = vstv %s2565
      %v2603 = vsub.f32 %v2531, %v2602
      %v2604 = vsub.f32 %v2532, %v2602
      %v2605 = vsub.f32 %v2533, %v2602
      %v2606 = vsub.f32 %v2534, %v2602
      %v2607 = vsub.f32 %v2535, %v2602
      %v2608 = vsub.f32 %v2536, %v2602
      %v2609 = vsub.f32 %v2537, %v2602
      %v2610 = vsub.f32 %v2538, %v2602
      %s2611 = sadd.f32 %s2601, 1e-05
      %v2612 = vstv %s2611
      %v2613 = vrsqrt.pop %v2612
      %s2614 = vtos %v2613
      %v2615 = vstv %s2614
      %v2616 = vmul.f32 %v2603, %v2615
      %v2617 = vmul.f32 %v2604, %v2615
      %v2618 = vmul.f32 %v2605, %v2615
      %v2619 = vmul.f32 %v2606, %v2615
      %v2620 = vmul.f32 %v2607, %v2615
      %v2621 = vmul.f32 %v2608, %v2615
      %v2622 = vmul.f32 %v2609, %v2615
      %v2623 = vmul.f32 %v2610, %v2615
      %v2624 = vlaneseq
      %v2625 = vshrl.u32 %v2624, 7
      %v2626 = vsub.s32 0, %v2625
      %v2627 = vrot.slane %v2539, %v2626
      %v2628 = vmul.f32 %v2616, %v2627
      %v2629 = vmul.f32 %v2617, %v2627
      %v2630 = vmul.f32 %v2618, %v2627
      %v2631 = vmul.f32 %v2619, %v2627
      %v2632 = vmul.f32 %v2620, %v2627
      %v2633 = vmul.f32 %v2621, %v2627
      %v2634 = vmul.f32 %v2622, %v2627
      %v2635 = vmul.f32 %v2623, %v2627
      %v2636 = vlaneseq
      %v2637 = vshrl.u32 %v2636, 7
      %v2638 = vsub.s32 0, %v2637
      %v2639 = vrot.slane %v2540, %v2638
      %v2640 = vadd.f32 %v2628, %v2639
      %v2641 = vadd.f32 %v2629, %v2639
      %v2642 = vadd.f32 %v2630, %v2639
      %v2643 = vadd.f32 %v2631, %v2639
      %v2644 = vadd.f32 %v2632, %v2639
      %v2645 = vadd.f32 %v2633, %v2639
      %v2646 = vadd.f32 %v2634, %v2639
      %v2647 = vadd.f32 %v2635, %v2639
      %v2648 = vmul.f32 %v2640, 0.5
      %v2649 = vmul.f32 %v2641, 0.5
      %v2650 = vmul.f32 %v2642, 0.5
      %v2651 = vmul.f32 %v2643, 0.5
      %v2652 = vmul.f32 %v2644, 0.5
      %v2653 = vmul.f32 %v2645, 0.5
      %v2654 = vmul.f32 %v2646, 0.5
      %v2655 = vmul.f32 %v2647, 0.5
      %v2656 = vmul.f32 %v2640, 0.70710677
      %v2657 = vmul.f32 %v2641, 0.70710677
      %v2658 = vmul.f32 %v2642, 0.70710677
      %v2659 = vmul.f32 %v2643, 0.70710677
      %v2660 = vmul.f32 %v2644, 0.70710677
      %v2661 = vmul.f32 %v2645, 0.70710677
      %v2662 = vmul.f32 %v2646, 0.70710677
      %v2663 = vmul.f32 %v2647, 0.70710677
      %vm2664 = vcmp.ge.f32.partialorder %v2656, 0.0
      %vm2665 = vcmp.ge.f32.partialorder %v2657, 0.0
      %vm2666 = vcmp.ge.f32.partialorder %v2658, 0.0
      %vm2667 = vcmp.ge.f32.partialorder %v2659, 0.0
      %vm2668 = vcmp.ge.f32.partialorder %v2660, 0.0
      %vm2669 = vcmp.ge.f32.partialorder %v2661, 0.0
      %vm2670 = vcmp.ge.f32.partialorder %v2662, 0.0
      %vm2671 = vcmp.ge.f32.partialorder %v2663, 0.0
      %v2672 = vsel %vm2664, 1.0, -1.0
      %v2673 = vsel %vm2665, 1.0, -1.0
      %v2674 = vsel %vm2666, 1.0, -1.0
      %v2675 = vsel %vm2667, 1.0, -1.0
      %v2676 = vsel %vm2668, 1.0, -1.0
      %v2677 = vsel %vm2669, 1.0, -1.0
      %v2678 = vsel %vm2670, 1.0, -1.0
      %v2679 = vsel %vm2671, 1.0, -1.0
      %v2680 = vand.u32 2147483647, %v2656
      %v2681 = vand.u32 2147483647, %v2657
      %v2682 = vand.u32 2147483647, %v2658
      %v2683 = vand.u32 2147483647, %v2659
      %v2684 = vand.u32 2147483647, %v2660
      %v2685 = vand.u32 2147483647, %v2661
      %v2686 = vand.u32 2147483647, %v2662
      %v2687 = vand.u32 2147483647, %v2663
      %v2688 = vmul.f32 %v2680, 0.3275911
      %v2689 = vmul.f32 %v2681, 0.3275911
      %v2690 = vmul.f32 %v2682, 0.3275911
      %v2691 = vmul.f32 %v2683, 0.3275911
      %v2692 = vmul.f32 %v2684, 0.3275911
      %v2693 = vmul.f32 %v2685, 0.3275911
      %v2694 = vmul.f32 %v2686, 0.3275911
      %v2695 = vmul.f32 %v2687, 0.3275911
      %v2696 = vadd.f32 %v2688, 1.0
      %v2697 = vadd.f32 %v2689, 1.0
      %v2698 = vadd.f32 %v2690, 1.0
      %v2699 = vadd.f32 %v2691, 1.0
      %v2700 = vadd.f32 %v2692, 1.0
      %v2701 = vadd.f32 %v2693, 1.0
      %v2702 = vadd.f32 %v2694, 1.0
      %v2703 = vadd.f32 %v2695, 1.0
      %v2704 = vrcp.pop %v2696
      %v2705 = vmul.f32 1.0, %v2704
      %v2706 = vrcp.pop %v2697
      %v2707 = vmul.f32 1.0, %v2706
      %v2708 = vrcp.pop %v2698
      %v2709 = vmul.f32 1.0, %v2708
      %v2710 = vrcp.pop %v2699
      %v2711 = vmul.f32 1.0, %v2710
      %v2712 = vrcp.pop %v2700
      %v2713 = vmul.f32 1.0, %v2712
      %v2714 = vrcp.pop %v2701
      %v2715 = vmul.f32 1.0, %v2714
      %v2716 = vrcp.pop %v2702
      %v2717 = vmul.f32 1.0, %v2716
      %v2718 = vrcp.pop %v2703
      %v2719 = vmul.f32 1.0, %v2718
      %v2720 = vmul.f32 %v2705, 1.0614054
      %v2721 = vmul.f32 %v2707, 1.0614054
      %v2722 = vmul.f32 %v2709, 1.0614054
      %v2723 = vmul.f32 %v2711, 1.0614054
      %v2724 = vmul.f32 %v2713, 1.0614054
      %v2725 = vmul.f32 %v2715, 1.0614054
      %v2726 = vmul.f32 %v2717, 1.0614054
      %v2727 = vmul.f32 %v2719, 1.0614054
      %v2728 = vadd.f32 %v2720, -1.4531521
      %v2729 = vadd.f32 %v2721, -1.4531521
      %v2730 = vadd.f32 %v2722, -1.4531521
      %v2731 = vadd.f32 %v2723, -1.4531521
      %v2732 = vadd.f32 %v2724, -1.4531521
      %v2733 = vadd.f32 %v2725, -1.4531521
      %v2734 = vadd.f32 %v2726, -1.4531521
      %v2735 = vadd.f32 %v2727, -1.4531521
      %v2736 = vmul.f32 %v2728, %v2705
      %v2737 = vmul.f32 %v2729, %v2707
      %v2738 = vmul.f32 %v2730, %v2709
      %v2739 = vmul.f32 %v2731, %v2711
      %v2740 = vmul.f32 %v2732, %v2713
      %v2741 = vmul.f32 %v2733, %v2715
      %v2742 = vmul.f32 %v2734, %v2717
      %v2743 = vmul.f32 %v2735, %v2719
      %v2744 = vadd.f32 %v2736, 1.4214138
      %v2745 = vadd.f32 %v2737, 1.4214138
      %v2746 = vadd.f32 %v2738, 1.4214138
      %v2747 = vadd.f32 %v2739, 1.4214138
      %v2748 = vadd.f32 %v2740, 1.4214138
      %v2749 = vadd.f32 %v2741, 1.4214138
      %v2750 = vadd.f32 %v2742, 1.4214138
      %v2751 = vadd.f32 %v2743, 1.4214138
      %v2752 = vmul.f32 %v2744, %v2705
      %v2753 = vmul.f32 %v2745, %v2707
      %v2754 = vmul.f32 %v2746, %v2709
      %v2755 = vmul.f32 %v2747, %v2711
      %v2756 = vmul.f32 %v2748, %v2713
      %v2757 = vmul.f32 %v2749, %v2715
      %v2758 = vmul.f32 %v2750, %v2717
      %v2759 = vmul.f32 %v2751, %v2719
      %v2760 = vadd.f32 %v2752, -0.28449672
      %v2761 = vadd.f32 %v2753, -0.28449672
      %v2762 = vadd.f32 %v2754, -0.28449672
      %v2763 = vadd.f32 %v2755, -0.28449672
      %v2764 = vadd.f32 %v2756, -0.28449672
      %v2765 = vadd.f32 %v2757, -0.28449672
      %v2766 = vadd.f32 %v2758, -0.28449672
      %v2767 = vadd.f32 %v2759, -0.28449672
      %v2768 = vmul.f32 %v2760, %v2705
      %v2769 = vmul.f32 %v2761, %v2707
      %v2770 = vmul.f32 %v2762, %v2709
      %v2771 = vmul.f32 %v2763, %v2711
      %v2772 = vmul.f32 %v2764, %v2713
      %v2773 = vmul.f32 %v2765, %v2715
      %v2774 = vmul.f32 %v2766, %v2717
      %v2775 = vmul.f32 %v2767, %v2719
      %v2776 = vadd.f32 %v2768, 0.2548296
      %v2777 = vadd.f32 %v2769, 0.2548296
      %v2778 = vadd.f32 %v2770, 0.2548296
      %v2779 = vadd.f32 %v2771, 0.2548296
      %v2780 = vadd.f32 %v2772, 0.2548296
      %v2781 = vadd.f32 %v2773, 0.2548296
      %v2782 = vadd.f32 %v2774, 0.2548296
      %v2783 = vadd.f32 %v2775, 0.2548296
      %v2784 = vmul.f32 %v2776, %v2705
      %v2785 = vmul.f32 %v2777, %v2707
      %v2786 = vmul.f32 %v2778, %v2709
      %v2787 = vmul.f32 %v2779, %v2711
      %v2788 = vmul.f32 %v2780, %v2713
      %v2789 = vmul.f32 %v2781, %v2715
      %v2790 = vmul.f32 %v2782, %v2717
      %v2791 = vmul.f32 %v2783, %v2719
      %v2792 = vsub.f32 0.0, %v2680
      %v2793 = vsub.f32 0.0, %v2681
      %v2794 = vsub.f32 0.0, %v2682
      %v2795 = vsub.f32 0.0, %v2683
      %v2796 = vsub.f32 0.0, %v2684
      %v2797 = vsub.f32 0.0, %v2685
      %v2798 = vsub.f32 0.0, %v2686
      %v2799 = vsub.f32 0.0, %v2687
      %v2800 = vmul.f32 %v2792, %v2680
      %v2801 = vmul.f32 %v2793, %v2681
      %v2802 = vmul.f32 %v2794, %v2682
      %v2803 = vmul.f32 %v2795, %v2683
      %v2804 = vmul.f32 %v2796, %v2684
      %v2805 = vmul.f32 %v2797, %v2685
      %v2806 = vmul.f32 %v2798, %v2686
      %v2807 = vmul.f32 %v2799, %v2687
      %v2808 = vmul.f32 %v2800, 1.442695
      %v2809 = vpow.pop %v2808
      %v2810 = vmul.f32 %v2801, 1.442695
      %v2811 = vpow.pop %v2810
      %v2812 = vmul.f32 %v2802, 1.442695
      %v2813 = vpow.pop %v2812
      %v2814 = vmul.f32 %v2803, 1.442695
      %v2815 = vpow.pop %v2814
      %v2816 = vmul.f32 %v2804, 1.442695
      %v2817 = vpow.pop %v2816
      %v2818 = vmul.f32 %v2805, 1.442695
      %v2819 = vpow.pop %v2818
      %v2820 = vmul.f32 %v2806, 1.442695
      %v2821 = vpow.pop %v2820
      %v2822 = vmul.f32 %v2807, 1.442695
      %v2823 = vpow.pop %v2822
      %v2824 = vmul.f32 %v2784, %v2809
      %v2825 = vmul.f32 %v2785, %v2811
      %v2826 = vmul.f32 %v2786, %v2813
      %v2827 = vmul.f32 %v2787, %v2815
      %v2828 = vmul.f32 %v2788, %v2817
      %v2829 = vmul.f32 %v2789, %v2819
      %v2830 = vmul.f32 %v2790, %v2821
      %v2831 = vmul.f32 %v2791, %v2823
      %v2832 = vsub.f32 1.0, %v2824
      %v2833 = vsub.f32 1.0, %v2825
      %v2834 = vsub.f32 1.0, %v2826
      %v2835 = vsub.f32 1.0, %v2827
      %v2836 = vsub.f32 1.0, %v2828
      %v2837 = vsub.f32 1.0, %v2829
      %v2838 = vsub.f32 1.0, %v2830
      %v2839 = vsub.f32 1.0, %v2831
      %v2840 = vmul.f32 %v2672, %v2832
      %v2841 = vmul.f32 %v2673, %v2833
      %v2842 = vmul.f32 %v2674, %v2834
      %v2843 = vmul.f32 %v2675, %v2835
      %v2844 = vmul.f32 %v2676, %v2836
      %v2845 = vmul.f32 %v2677, %v2837
      %v2846 = vmul.f32 %v2678, %v2838
      %v2847 = vmul.f32 %v2679, %v2839
      %v2848 = vadd.f32 %v2840, 1.0
      %v2849 = vadd.f32 %v2841, 1.0
      %v2850 = vadd.f32 %v2842, 1.0
      %v2851 = vadd.f32 %v2843, 1.0
      %v2852 = vadd.f32 %v2844, 1.0
      %v2853 = vadd.f32 %v2845, 1.0
      %v2854 = vadd.f32 %v2846, 1.0
      %v2855 = vadd.f32 %v2847, 1.0
      %v2856 = vmul.f32 %v2648, %v2848
      %v2857 = vmul.f32 %v2649, %v2849
      %v2858 = vmul.f32 %v2650, %v2850
      %v2859 = vmul.f32 %v2651, %v2851
      %v2860 = vmul.f32 %v2652, %v2852
      %v2861 = vmul.f32 %v2653, %v2853
      %v2862 = vmul.f32 %v2654, %v2854
      %v2863 = vmul.f32 %v2655, %v2855
      %v2872 = vrot.slane %v2856, 7
      %v2873 = vrot.slane %v2857, 7
      %v2874 = vsel %vm606, %v2872, %v2873
      %v2875 = vrot.slane %v2858, 7
      %v2876 = vsel %vm606, %v2873, %v2875
      %v2877 = vrot.slane %v2859, 7
      %v2878 = vsel %vm606, %v2875, %v2877
      %v2879 = vrot.slane %v2860, 7
      %v2880 = vsel %vm606, %v2877, %v2879
      %v2881 = vrot.slane %v2861, 7
      %v2882 = vsel %vm606, %v2879, %v2881
      %v2883 = vrot.slane %v2862, 7
      %v2884 = vsel %vm606, %v2881, %v2883
      %v2885 = vrot.slane %v2863, 7
      %v2886 = vsel %vm606, %v2883, %v2885
      %v2895 = vsel %vm606, 0.0, %v2872
      %v2896 = vsel %vm639, 0.0, %v2895
      %v2897 = vsel %vm640, 0.0, %v2874
      %v2898 = vsel %vm641, 0.0, %v2876
      %v2899 = vsel %vm642, 0.0, %v2878
      %v2900 = vsel %vm643, 0.0, %v2880
      %v2901 = vsel %vm644, 0.0, %v2882
      %v2902 = vsel %vm645, 0.0, %v2884
      %v2903 = vsel %vm646, 0.0, %v2886
      %v2904 = vrot.slane %v2856, 1
      %v2905 = vrot.slane %v2857, 1
      %v2906 = vsel %vm655, %v2904, %v2905
      %v2907 = vrot.slane %v2858, 1
      %v2908 = vsel %vm655, %v2905, %v2907
      %v2909 = vrot.slane %v2859, 1
      %v2910 = vsel %vm655, %v2907, %v2909
      %v2911 = vrot.slane %v2860, 1
      %v2912 = vsel %vm655, %v2909, %v2911
      %v2913 = vrot.slane %v2861, 1
      %v2914 = vsel %vm655, %v2911, %v2913
      %v2915 = vrot.slane %v2862, 1
      %v2916 = vsel %vm655, %v2913, %v2915
      %v2917 = vrot.slane %v2863, 1
      %v2918 = vsel %vm655, %v2915, %v2917
      %v2927 = vsel %vm655, %v2917, 0.0
      %v2928 = vsel %vm688, 0.0, %v2906
      %v2929 = vsel %vm689, 0.0, %v2908
      %v2930 = vsel %vm690, 0.0, %v2910
      %v2931 = vsel %vm691, 0.0, %v2912
      %v2932 = vsel %vm692, 0.0, %v2914
      %v2933 = vsel %vm693, 0.0, %v2916
      %v2934 = vsel %vm694, 0.0, %v2918
      %v2935 = vsel %vm695, 0.0, %v2927
      %2936 = vrot.lane.b32.xlu0 %v2856, 8
      %v2937 = vpop.permute.xlu0 %2936
      %2938 = vrot.lane.b32.xlu0 %v2857, 8
      %v2939 = vpop.permute.xlu0 %2938
      %2940 = vrot.lane.b32.xlu0 %v2858, 8
      %v2941 = vpop.permute.xlu0 %2940
      %2942 = vrot.lane.b32.xlu0 %v2859, 8
      %v2943 = vpop.permute.xlu0 %2942
      %2944 = vrot.lane.b32.xlu0 %v2860, 8
      %v2945 = vpop.permute.xlu0 %2944
      %2946 = vrot.lane.b32.xlu0 %v2861, 8
      %v2947 = vpop.permute.xlu0 %2946
      %2948 = vrot.lane.b32.xlu0 %v2862, 8
      %v2949 = vpop.permute.xlu0 %2948
      %2950 = vrot.lane.b32.xlu0 %v2863, 8
      %v2951 = vpop.permute.xlu0 %2950
      %2968 = vrot.lane.b32.xlu0 %v2928, 16
      %v2969 = vpop.permute.xlu0 %2968
      %2970 = vrot.lane.b32.xlu0 %v2929, 16
      %v2971 = vpop.permute.xlu0 %2970
      %2972 = vrot.lane.b32.xlu0 %v2930, 16
      %v2973 = vpop.permute.xlu0 %2972
      %2974 = vrot.lane.b32.xlu0 %v2931, 16
      %v2975 = vpop.permute.xlu0 %2974
      %2976 = vrot.lane.b32.xlu0 %v2932, 16
      %v2977 = vpop.permute.xlu0 %2976
      %2978 = vrot.lane.b32.xlu0 %v2933, 16
      %v2979 = vpop.permute.xlu0 %2978
      %2980 = vrot.lane.b32.xlu0 %v2934, 16
      %v2981 = vpop.permute.xlu0 %2980
      %2982 = vrot.lane.b32.xlu0 %v2935, 16
      %v2983 = vpop.permute.xlu0 %2982
      %v2992 = vsel %vm769, %v2896, %v2937
      %v2993 = vsel %vm769, %v2897, %v2939
      %v2994 = vsel %vm769, %v2898, %v2941
      %v2995 = vsel %vm769, %v2899, %v2943
      %v2996 = vsel %vm769, %v2900, %v2945
      %v2997 = vsel %vm769, %v2901, %v2947
      %v2998 = vsel %vm769, %v2902, %v2949
      %v2999 = vsel %vm769, %v2903, %v2951
      %vm3000 = vcmask 130048
      %v3001 = vsel %vm3000, %v2992, %v2969
      %v3002 = vsel %vm3000, %v2993, %v2971
      %v3003 = vsel %vm3000, %v2994, %v2973
      %v3004 = vsel %vm3000, %v2995, %v2975
      %v3005 = vsel %vm3000, %v2996, %v2977
      %v3006 = vsel %vm3000, %v2997, %v2979
      %v3007 = vsel %vm3000, %v2998, %v2981
      %v3008 = vsel %vm3000, %v2999, %v2983
      %v3009 = vpack.c.bf16 %v3001, 0.0
      %v3010 = vpack.c.bf16 %v3003, %v3002
      %v3011 = vpack.c.bf16 %v3005, %v3004
      %v3012 = vpack.c.bf16 %v3007, %v3006
      %v3013 = vld [vmem:[%s7] sm:$0xf]
      %v3014 = vld [vmem:[%s7 + $0x4] sm:$0xf]
      %v3015 = vld [vmem:[%s7 + $0x8] sm:$0xf]
      %v3016 = vpack.c.bf16 %v3002, %v3001
      %v3017 = vpack.c.bf16 %v3004, %v3003
      %v3018 = vpack.c.bf16 %v3006, %v3005
      %v3019 = vpack.c.bf16 %v3008, %v3007
      %s3020 = scalar_lea.vmem %s7, 12
      %v3021 = vld [vmem:[%s3020] sm:$0xf]
      %v3022 = vld [vmem:[%s3020 + $0x4] sm:$0xf]
      %v3023 = vld [vmem:[%s3020 + $0x8] sm:$0xf]
      %v3027 = vunpack.c.l.b16 %v3021
      %v3028 = vunpack.c.l.b16 %v3022
      %v3029 = vunpack.c.l.b16 %v3023
      %v3030 = vpack.c.b16 %v3028, %v3027
      %v3031 = vpack.c.b16 %v3029, %v3029
      %vm3033 = vcmask 195584
      %v3035 = vsel %vm3033, %v3016, 0
      %v3038 = vsel %vm3033, %v3017, 0
      %v3041 = vsel %vm3033, %v3018, 0
      %v3044 = vsel %vm3033, %v3019, 0
      %vm3046 = vcmask 1043456
      %v3048 = vsel %vm3046, %v3031, 0
      %3050 = vmatprep.subr.bf16.mxu0 0
      %3051 = vmatpush1.bf16.msra.mxu0 %v3030
      %3052 = vmatprep.subr.bf16.mxu0 0
      %3053 = vmatpush1.bf16.msra.mxu0 %v3048
      %3054 = vmatprep.subr.bf16.mxu0 0
      %3055 = vmatpush1.bf16.msra.mxu0 0
      %3056 = vmatprep.subr.bf16.mxu0 0
      %3057 = vmatpush1.bf16.msra.mxu0 0
      %3058 = vmatprep.subr.bf16.mxu0 0
      %3059 = vmatpush1.bf16.msra.mxu0 0
      %3060 = vmatprep.subr.bf16.mxu0 0
      %3061 = vmatpush1.bf16.msra.mxu0 0
      %3062 = vmatprep.subr.bf16.mxu0 0
      %3063 = vmatpush1.bf16.msra.mxu0 0
      %3064 = vmatprep.subr.bf16.mxu0 0
      %3065 = vmatpush1.bf16.msra.mxu0 0
      %3066 = vmatprep.subr.bf16.mxu0 0
      %3067 = vmatpush1.bf16.msra.mxu0 0
      %3068 = vmatprep.subr.bf16.mxu0 0
      %3069 = vmatpush1.bf16.msra.mxu0 0
      %3070 = vmatprep.subr.bf16.mxu0 0
      %3071 = vmatpush1.bf16.msra.mxu0 0
      %3072 = vmatprep.subr.bf16.mxu0 0
      %3073 = vmatpush1.bf16.msra.mxu0 0
      %3074 = vmatprep.subr.bf16.mxu0 0
      %3075 = vmatpush1.bf16.msra.mxu0 0
      %3076 = vmatprep.subr.bf16.mxu0 0
      %3077 = vmatpush1.bf16.msra.mxu0 0
      %3078 = vmatprep.subr.bf16.mxu0 0
      %3079 = vmatpush1.bf16.msra.mxu0 0
      %3080 = vmatprep.subr.bf16.mxu0 0
      %3081 = vmatpush1.bf16.msra.mxu0 0
      %3082 = vmatprep.mubr.bf16.mxu0 0
      %3083 = vmatmul.mubr.bf16.gmra.mrb[0].mxu0 %v3035
      %v3084 = vpop.f32.mrb[0].mxu0
      %v3085 = vadd.f32 0.0, %v3084
      %v3086 = vpop.f32.mrb[0].mxu0
      %v3087 = vpop.f32.mrb[0].mxu0
      %v3088 = vadd.f32 0.0, %v3087
      %v3089 = vpop.f32.mrb[0].mxu0
      %3090 = vmatprep.mubr.bf16.mxu0 0
      %3091 = vmatmul.mubr.bf16.gmra.mrb[0].mxu0 %v3038
      %v3092 = vpop.f32.mrb[0].mxu0
      %v3093 = vadd.f32 0.0, %v3092
      %v3094 = vpop.f32.mrb[0].mxu0
      %v3095 = vpop.f32.mrb[0].mxu0
      %v3096 = vadd.f32 0.0, %v3095
      %v3097 = vpop.f32.mrb[0].mxu0
      %3098 = vmatprep.mubr.bf16.mxu0 0
      %3099 = vmatmul.mubr.bf16.gmra.mrb[0].mxu0 %v3041
      %v3100 = vpop.f32.mrb[0].mxu0
      %v3101 = vadd.f32 0.0, %v3100
      %v3102 = vpop.f32.mrb[0].mxu0
      %v3103 = vpop.f32.mrb[0].mxu0
      %v3104 = vadd.f32 0.0, %v3103
      %v3105 = vpop.f32.mrb[0].mxu0
      %3106 = vmatprep.mubr.bf16.mxu0 0
      %3107 = vmatmul.mubr.bf16.gmra.mrb[0].mxu0 %v3044
      %v3108 = vpop.f32.mrb[0].mxu0
      %v3109 = vadd.f32 0.0, %v3108
      %v3110 = vpop.f32.mrb[0].mxu0
      %v3111 = vpop.f32.mrb[0].mxu0
      %v3112 = vadd.f32 0.0, %v3111
      %v3113 = vpop.f32.mrb[0].mxu0
      %3114 = vdwg.mxu0
      %v3118 = vunpack.c.l.b16 %v3013
      %v3119 = vunpack.c.l.b16 %v3014
      %v3120 = vunpack.c.l.b16 %v3015
      %v3121 = vpack.c.b16 %v3119, %v3118
      %v3122 = vpack.c.b16 %v3120, %v3120
      %v3125 = vsel %vm3033, %v3009, 0
      %v3128 = vsel %vm3033, %v3010, 0
      %v3131 = vsel %vm3033, %v3011, 0
      %v3134 = vsel %vm3033, %v3012, 0
      %v3137 = vsel %vm3046, %v3122, 0
      %3139 = vmatprep.subr.bf16.mxu0 0
      %3140 = vmatpush1.bf16.msra.mxu0 %v3121
      %3141 = vmatprep.subr.bf16.mxu0 0
      %3142 = vmatpush1.bf16.msra.mxu0 %v3137
      %3143 = vmatprep.subr.bf16.mxu0 0
      %3144 = vmatpush1.bf16.msra.mxu0 0
      %3145 = vmatprep.subr.bf16.mxu0 0
      %3146 = vmatpush1.bf16.msra.mxu0 0
      %3147 = vmatprep.subr.bf16.mxu0 0
      %3148 = vmatpush1.bf16.msra.mxu0 0
      %3149 = vmatprep.subr.bf16.mxu0 0
      %3150 = vmatpush1.bf16.msra.mxu0 0
      %3151 = vmatprep.subr.bf16.mxu0 0
      %3152 = vmatpush1.bf16.msra.mxu0 0
      %3153 = vmatprep.subr.bf16.mxu0 0
      %3154 = vmatpush1.bf16.msra.mxu0 0
      %3155 = vmatprep.subr.bf16.mxu0 0
      %3156 = vmatpush1.bf16.msra.mxu0 0
      %3157 = vmatprep.subr.bf16.mxu0 0
      %3158 = vmatpush1.bf16.msra.mxu0 0
      %3159 = vmatprep.subr.bf16.mxu0 0
      %3160 = vmatpush1.bf16.msra.mxu0 0
      %3161 = vmatprep.subr.bf16.mxu0 0
      %3162 = vmatpush1.bf16.msra.mxu0 0
      %3163 = vmatprep.subr.bf16.mxu0 0
      %3164 = vmatpush1.bf16.msra.mxu0 0
      %3165 = vmatprep.subr.bf16.mxu0 0
      %3166 = vmatpush1.bf16.msra.mxu0 0
      %3167 = vmatprep.subr.bf16.mxu0 0
      %3168 = vmatpush1.bf16.msra.mxu0 0
      %3169 = vmatprep.subr.bf16.mxu0 0
      %3170 = vmatpush1.bf16.msra.mxu0 0
      %3171 = vmatprep.mubr.bf16.mxu0 0
      %3172 = vmatmul.mubr.bf16.gmra.mrb[0].mxu0 %v3125
      %v3173 = vpop.f32.mrb[0].mxu0
      %v3174 = vadd.f32 %v3085, %v3173
      %v3175 = vpop.f32.mrb[0].mxu0
      %v3176 = vpop.f32.mrb[0].mxu0
      %v3177 = vadd.f32 %v3088, %v3176
      %v3178 = vpop.f32.mrb[0].mxu0
      %3179 = vmatprep.mubr.bf16.mxu0 0
      %3180 = vmatmul.mubr.bf16.gmra.mrb[0].mxu0 %v3128
      %v3181 = vpop.f32.mrb[0].mxu0
      %v3182 = vadd.f32 %v3093, %v3181
      %v3183 = vpop.f32.mrb[0].mxu0
      %v3184 = vpop.f32.mrb[0].mxu0
      %v3185 = vadd.f32 %v3096, %v3184
      %v3186 = vpop.f32.mrb[0].mxu0
      %3187 = vmatprep.mubr.bf16.mxu0 0
      %3188 = vmatmul.mubr.bf16.gmra.mrb[0].mxu0 %v3131
      %v3189 = vpop.f32.mrb[0].mxu0
      %v3190 = vadd.f32 %v3101, %v3189
      %v3191 = vpop.f32.mrb[0].mxu0
      %v3192 = vpop.f32.mrb[0].mxu0
      %v3193 = vadd.f32 %v3104, %v3192
      %v3194 = vpop.f32.mrb[0].mxu0
      %3195 = vmatprep.mubr.bf16.mxu0 0
      %3196 = vmatmul.mubr.bf16.gmra.mrb[0].mxu0 %v3134
      %v3197 = vpop.f32.mrb[0].mxu0
      %v3198 = vadd.f32 %v3109, %v3197
      %v3199 = vpop.f32.mrb[0].mxu0
      %v3200 = vpop.f32.mrb[0].mxu0
      %v3201 = vadd.f32 %v3112, %v3200
      %v3202 = vpop.f32.mrb[0].mxu0
      %3203 = vdwg.mxu0
      %v3204 = vpack.c.bf16 0.0, %v3008
      %s3205 = scalar_lea.vmem %s7, 24
      %v3206 = vld [vmem:[%s3205] sm:$0xf]
      %v3207 = vld [vmem:[%s3205 + $0x4] sm:$0xf]
      %v3208 = vld [vmem:[%s3205 + $0x8] sm:$0xf]
      %v3212 = vunpack.c.l.b16 %v3206
      %v3213 = vunpack.c.l.b16 %v3207
      %v3214 = vunpack.c.l.b16 %v3208
      %v3215 = vpack.c.b16 %v3213, %v3212
      %v3216 = vpack.c.b16 %v3214, %v3214
      %v3219 = vsel %vm3033, %v3204, 0
      %v3222 = vsel %vm3046, %v3216, 0
      %3224 = vmatprep.subr.bf16.mxu0 0
      %3225 = vmatpush1.bf16.msra.mxu0 %v3215
      %3226 = vmatprep.subr.bf16.mxu0 0
      %3227 = vmatpush1.bf16.msra.mxu0 %v3222
      %3228 = vmatprep.subr.bf16.mxu0 0
      %3229 = vmatpush1.bf16.msra.mxu0 0
      %3230 = vmatprep.subr.bf16.mxu0 0
      %3231 = vmatpush1.bf16.msra.mxu0 0
      %3232 = vmatprep.subr.bf16.mxu0 0
      %3233 = vmatpush1.bf16.msra.mxu0 0
      %3234 = vmatprep.subr.bf16.mxu0 0
      %3235 = vmatpush1.bf16.msra.mxu0 0
      %3236 = vmatprep.subr.bf16.mxu0 0
      %3237 = vmatpush1.bf16.msra.mxu0 0
      %3238 = vmatprep.subr.bf16.mxu0 0
      %3239 = vmatpush1.bf16.msra.mxu0 0
      %3240 = vmatprep.subr.bf16.mxu0 0
      %3241 = vmatpush1.bf16.msra.mxu0 0
      %3242 = vmatprep.subr.bf16.mxu0 0
      %3243 = vmatpush1.bf16.msra.mxu0 0
      %3244 = vmatprep.subr.bf16.mxu0 0
      %3245 = vmatpush1.bf16.msra.mxu0 0
      %3246 = vmatprep.subr.bf16.mxu0 0
      %3247 = vmatpush1.bf16.msra.mxu0 0
      %3248 = vmatprep.subr.bf16.mxu0 0
      %3249 = vmatpush1.bf16.msra.mxu0 0
      %3250 = vmatprep.subr.bf16.mxu0 0
      %3251 = vmatpush1.bf16.msra.mxu0 0
      %3252 = vmatprep.subr.bf16.mxu0 0
      %3253 = vmatpush1.bf16.msra.mxu0 0
      %3254 = vmatprep.subr.bf16.mxu0 0
      %3255 = vmatpush1.bf16.msra.mxu0 0
      %3256 = vmatprep.mubr.bf16.mxu0 0
      %3257 = vmatmul.mubr.bf16.gmra.mrb[0].mxu0 %v3128
      %v3258 = vpop.f32.mrb[0].mxu0
      %v3259 = vadd.f32 0.0, %v3258
      %v3260 = vpop.f32.mrb[0].mxu0
      %v3261 = vpop.f32.mrb[0].mxu0
      %v3262 = vadd.f32 0.0, %v3261
      %v3263 = vpop.f32.mrb[0].mxu0
      %3264 = vmatprep.mubr.bf16.mxu0 0
      %3265 = vmatmul.mubr.bf16.gmra.mrb[0].mxu0 %v3131
      %v3266 = vpop.f32.mrb[0].mxu0
      %v3267 = vadd.f32 0.0, %v3266
      %v3268 = vpop.f32.mrb[0].mxu0
      %v3269 = vpop.f32.mrb[0].mxu0
      %v3270 = vadd.f32 0.0, %v3269
      %v3271 = vpop.f32.mrb[0].mxu0
      %3272 = vmatprep.mubr.bf16.mxu0 0
      %3273 = vmatmul.mubr.bf16.gmra.mrb[0].mxu0 %v3134
      %v3274 = vpop.f32.mrb[0].mxu0
      %v3275 = vadd.f32 0.0, %v3274
      %v3276 = vpop.f32.mrb[0].mxu0
      %v3277 = vpop.f32.mrb[0].mxu0
      %v3278 = vadd.f32 0.0, %v3277
      %v3279 = vpop.f32.mrb[0].mxu0
      %3280 = vmatprep.mubr.bf16.mxu0 0
      %3281 = vmatmul.mubr.bf16.gmra.mrb[0].mxu0 %v3219
      %v3282 = vpop.f32.mrb[0].mxu0
      %v3283 = vadd.f32 0.0, %v3282
      %v3284 = vpop.f32.mrb[0].mxu0
      %v3285 = vpop.f32.mrb[0].mxu0
      %v3286 = vadd.f32 0.0, %v3285
      %v3287 = vpop.f32.mrb[0].mxu0
      %3288 = vdwg.mxu0
      %v3289 = vadd.f32 %v3174, %v3259
      %v3290 = vadd.f32 %v3177, %v3262
      %v3291 = vadd.f32 %v3182, %v3267
      %v3292 = vadd.f32 %v3185, %v3270
      %v3293 = vadd.f32 %v3190, %v3275
      %v3294 = vadd.f32 %v3193, %v3278
      %v3295 = vadd.f32 %v3198, %v3283
      %v3296 = vadd.f32 %v3201, %v3286
      %v3297 = vld [vmem:[%s9 + $0x2] sm:$0x1]
      %v3298 = vld [vmem:[%s9 + $0x3] sm:$0x1]
      %v3299 = vsel %vm769, %v3289, 0.0
      %v3300 = vsel %vm769, %v3290, 0.0
      %v3301 = vadd.f32 %v3299, %v3300
      %v3302 = vsel %vm769, %v3291, 0.0
      %v3303 = vadd.f32 %v3301, %v3302
      %v3304 = vsel %vm769, %v3292, 0.0
      %v3305 = vadd.f32 %v3303, %v3304
      %v3306 = vsel %vm769, %v3293, 0.0
      %v3307 = vadd.f32 %v3305, %v3306
      %v3308 = vsel %vm769, %v3294, 0.0
      %v3309 = vadd.f32 %v3307, %v3308
      %v3310 = vsel %vm769, %v3295, 0.0
      %v3311 = vadd.f32 %v3309, %v3310
      %v3312 = vsel %vm769, %v3296, 0.0
      %v3313 = vadd.f32 %v3311, %v3312
      %3314 = vadd.xlane.f32.xlu0 %v3313
      %v3315 = vpop.xlane.xlu0 %3314
      %v3316 = vrot.slane %v3315, 4
      %v3317 = vadd.f32 %v3315, %v3316
      %v3318 = vrot.slane %v3317, 2
      %v3319 = vadd.f32 %v3317, %v3318
      %v3320 = vrot.slane %v3319, 1
      %v3321 = vadd.f32 %v3319, %v3320
      %s3322 = vtos %v3321
      %s3323 = smul.f32 %s3322, 0.001953125
      %v3324 = vmul.f32 %v3289, %v3289
      %v3325 = vmul.f32 %v3290, %v3290
      %v3326 = vmul.f32 %v3291, %v3291
      %v3327 = vmul.f32 %v3292, %v3292
      %v3328 = vmul.f32 %v3293, %v3293
      %v3329 = vmul.f32 %v3294, %v3294
      %v3330 = vmul.f32 %v3295, %v3295
      %v3331 = vmul.f32 %v3296, %v3296
      %v3332 = vsel %vm769, %v3324, 0.0
      %v3333 = vsel %vm769, %v3325, 0.0
      %v3334 = vadd.f32 %v3332, %v3333
      %v3335 = vsel %vm769, %v3326, 0.0
      %v3336 = vadd.f32 %v3334, %v3335
      %v3337 = vsel %vm769, %v3327, 0.0
      %v3338 = vadd.f32 %v3336, %v3337
      %v3339 = vsel %vm769, %v3328, 0.0
      %v3340 = vadd.f32 %v3338, %v3339
      %v3341 = vsel %vm769, %v3329, 0.0
      %v3342 = vadd.f32 %v3340, %v3341
      %v3343 = vsel %vm769, %v3330, 0.0
      %v3344 = vadd.f32 %v3342, %v3343
      %v3345 = vsel %vm769, %v3331, 0.0
      %v3346 = vadd.f32 %v3344, %v3345
      %3347 = vadd.xlane.f32.xlu0 %v3346
      %v3348 = vpop.xlane.xlu0 %3347
      %v3349 = vrot.slane %v3348, 4
      %v3350 = vadd.f32 %v3348, %v3349
      %v3351 = vrot.slane %v3350, 2
      %v3352 = vadd.f32 %v3350, %v3351
      %v3353 = vrot.slane %v3352, 1
      %v3354 = vadd.f32 %v3352, %v3353
      %s3355 = vtos %v3354
      %s3356 = smul.f32 %s3355, 0.001953125
      %s3357 = smul.f32 %s3323, %s3323
      %s3358 = ssub.f32 %s3356, %s3357
      %s3359 = smax.f32 %s3358, 0.0
      %v3360 = vstv %s3323
      %v3361 = vsub.f32 %v3289, %v3360
      %v3362 = vsub.f32 %v3290, %v3360
      %v3363 = vsub.f32 %v3291, %v3360
      %v3364 = vsub.f32 %v3292, %v3360
      %v3365 = vsub.f32 %v3293, %v3360
      %v3366 = vsub.f32 %v3294, %v3360
      %v3367 = vsub.f32 %v3295, %v3360
      %v3368 = vsub.f32 %v3296, %v3360
      %s3369 = sadd.f32 %s3359, 1e-05
      %v3370 = vstv %s3369
      %v3371 = vrsqrt.pop %v3370
      %s3372 = vtos %v3371
      %v3373 = vstv %s3372
      %v3374 = vmul.f32 %v3361, %v3373
      %v3375 = vmul.f32 %v3362, %v3373
      %v3376 = vmul.f32 %v3363, %v3373
      %v3377 = vmul.f32 %v3364, %v3373
      %v3378 = vmul.f32 %v3365, %v3373
      %v3379 = vmul.f32 %v3366, %v3373
      %v3380 = vmul.f32 %v3367, %v3373
      %v3381 = vmul.f32 %v3368, %v3373
      %v3382 = vlaneseq
      %v3383 = vshrl.u32 %v3382, 7
      %v3384 = vsub.s32 0, %v3383
      %v3385 = vrot.slane %v3297, %v3384
      %v3386 = vmul.f32 %v3374, %v3385
      %v3387 = vmul.f32 %v3375, %v3385
      %v3388 = vmul.f32 %v3376, %v3385
      %v3389 = vmul.f32 %v3377, %v3385
      %v3390 = vmul.f32 %v3378, %v3385
      %v3391 = vmul.f32 %v3379, %v3385
      %v3392 = vmul.f32 %v3380, %v3385
      %v3393 = vmul.f32 %v3381, %v3385
      %v3394 = vlaneseq
      %v3395 = vshrl.u32 %v3394, 7
      %v3396 = vsub.s32 0, %v3395
      %v3397 = vrot.slane %v3298, %v3396
      %v3398 = vadd.f32 %v3386, %v3397
      %v3399 = vadd.f32 %v3387, %v3397
      %v3400 = vadd.f32 %v3388, %v3397
      %v3401 = vadd.f32 %v3389, %v3397
      %v3402 = vadd.f32 %v3390, %v3397
      %v3403 = vadd.f32 %v3391, %v3397
      %v3404 = vadd.f32 %v3392, %v3397
      %v3405 = vadd.f32 %v3393, %v3397
      %3406 = vst.msk [vmem:[%s419] sm:$0xff] %vm769, %v3398
      %3407 = vst.msk [vmem:[%s419 + $0x8] sm:$0xff] %vm769, %v3399
      %3408 = vst.msk [vmem:[%s419 + $0x10] sm:$0xff] %vm769, %v3400
      %3409 = vst.msk [vmem:[%s419 + $0x18] sm:$0xff] %vm769, %v3401
      %3410 = vst.msk [vmem:[%s419 + $0x20] sm:$0xff] %vm769, %v3402
      %3411 = vst.msk [vmem:[%s419 + $0x28] sm:$0xff] %vm769, %v3403
      %3412 = vst.msk [vmem:[%s419 + $0x30] sm:$0xff] %vm769, %v3404
      %3413 = vst.msk [vmem:[%s419 + $0x38] sm:$0xff] %vm769, %v3405
      %p3414 = scmp.lt.s32.totalorder %s21, 1
      %s3415 = scalar_select %p3414, %s21, 1
      %s3416 = smul.addr %s3415, 8
      %s3417 = smul.addr %s3416, 8
      %s3418 = scalar_lea.vmem %s10, %s3417
      // Predicated region
      $region61: #{down_forward.1} parent=59 // pred_check
        %p3419 = pneg %p269
      $region62: #{down_forward.1} parent=59 // pred_check_branch
        %3421 = sbr.rel (%p3419) target = $region64
      $region63: #{down_forward.1} parent=59 // pred_region
        _
      $region64: #{down_forward.1} parent=59 // pred_fallthru
        _
    $region60: #{down_forward.1} parent=5 // pred_fallthru
      _
    %p3422 = scmp.le.s32.totalorder 2, %s16
    // Predicated region
    $region65: #{down_forward.1} parent=5 // pred_check
      %p3423 = pneg %p3422
    $region66: #{down_forward.1} parent=5 // pred_check_branch
      %3425 = sbr.rel (%p3423) target = $region68
    $region67: #{down_forward.1} parent=5 // pred_region
      %s3426 = ssub.s32 %s16, 2
      // Predicated region
      $region69: #{down_forward.1} parent=67 // pred_check
        %p3427 = pneg %p275
      $region70: #{down_forward.1} parent=67 // pred_check_branch
        %3429 = sbr.rel (%p3427) target = $region72
      $region71: #{down_forward.1} parent=67 // pred_region
        %p3430 = scmp.lt.s32.totalorder %s22, 1
        %s3431 = scalar_select %p3430, %s22, 1
        %s3432 = smul.addr %s3431, 8
        %s3433 = smul.addr %s3432, 8
        %s3434 = scalar_lea.vmem %s10, %s3433
      $region72: #{down_forward.1} parent=67 // pred_fallthru
        _
    $region68: #{down_forward.1} parent=5 // pred_fallthru
      _
  $region6: #{down_forward.1} parent=0 // loop_footer
    %s20 = sadd.s32 1, %s16
  $region7: #{down_forward.1} parent=0 // loop_footer_branch
    %15 = sbr.rel target = $region3
  $region8: #{down_forward.1} parent=0 // loop_exit
    _

</llo_original>
